<compile_context>
chip_gen: v7x
topology: tpu7x:2x2x1
jax: 0.10.0
libtpu: 0.0.40
codegen_flags: <defaults>
</compile_context>

<pallas_src>
import functools

import jax
import jax.numpy as jnp
from jax.experimental import pallas as pl
from jax.experimental.pallas import tpu as pltpu

N_DIM = 256
GN_EPS = 1e-5
VMEM_LIMIT = 64 * 1024 * 1024


def _round_up(x, m):
    return (x + m - 1) // m * m


def _group_norm(x, gamma, beta):
    # GroupNorm(num_groups=1) over the feature (lane) axis, affine form:
    # scale = gamma * rsqrt(var+eps); shift = beta - mean*scale; y = x*scale+shift.
    # One-pass stats (E[x^2]-E[x]^2): two independent lane reductions.
    mean = jnp.mean(x, axis=-1, keepdims=True)
    m2 = jnp.mean(x * x, axis=-1, keepdims=True)
    r = jax.lax.rsqrt(m2 - mean * mean + GN_EPS)     # (rows, 1), EUP
    scale = gamma * r                                # (rows, C)
    return x * scale + (beta - mean * scale)


# ---------------------------------------------------------------------------
# Kernel A: all (num_mods + 1) LinearResidualBlock(256,256) + Linear(256, 2T)
# heads in a single launch.
#   stage-1: one fused matmul xb @ W1cat (256, H*256), per-head lane slices
#   stage-3: per-head accumulation sum_h feat_h @ w3[h]  (w3[h] is (256,OUT_PAD)
#            with only that head's T2 columns non-zero) -> lane-dense store.
# ---------------------------------------------------------------------------
def _heads_kernel(x_ref, w1_ref, w2_ref, gn_ref, w3_ref, b3_ref, o_ref, *, num_heads):
    xb = x_ref[...]                                   # (rows, 256) bf16
    x32 = xb.astype(jnp.float32)                      # f32 residual
    D = N_DIM
    gn = gn_ref[...]                                  # (H, 4, 256) f32

    # fused stage-1 matmul for all heads
    t1 = jnp.dot(xb, w1_ref[...], preferred_element_type=jnp.float32)  # (rows, H*256)

    o = None
    for h in range(num_heads):                        # static, small loop
        th = t1[:, h * D:(h + 1) * D]                 # lane-aligned slice
        th = jnp.maximum(_group_norm(th, gn[h, 0:1], gn[h, 1:2]), 0.0)
        th = jnp.dot(th.astype(jnp.bfloat16), w2_ref[h],
                     preferred_element_type=jnp.float32)
        th = _group_norm(th, gn[h, 2:3], gn[h, 3:4])
        th = jnp.maximum(th + x32, 0.0)               # residual (Identity trans)
        ph = jnp.dot(th.astype(jnp.bfloat16), w3_ref[h],
                     preferred_element_type=jnp.float32)
        o = ph if o is None else o + ph
    o_ref[...] = (o + b3_ref[...]).astype(o_ref.dtype)   # lane-dense (rows, OUT_PAD)


def heads_pallas(x_bf16, hp, *, block_rows, single_buffer_weights):
    N_pad, D = x_bf16.shape
    H = hp["num_heads"]
    OUT_PAD = hp["out_pad"]
    grid = (N_pad // block_rows,)

    def const(shape):
        idx = lambda *_: (0,) * len(shape)
        if single_buffer_weights:
            return pl.BlockSpec(shape, idx, pipeline_mode=pl.Buffered(1))
        return pl.BlockSpec(shape, idx)

    return pl.pallas_call(
        functools.partial(_heads_kernel, num_heads=H),
        out_shape=jax.ShapeDtypeStruct((N_pad, OUT_PAD), jnp.float32),
        grid=grid,
        in_specs=[
            pl.BlockSpec((block_rows, D), lambda i: (i, 0)),
            const((D, H * D)),           # W1cat   bf16
            const((H, D, D)),            # W2      bf16
            const((H, 4, D)),            # g1,b1,g2,b2 f32
            const((H, D, OUT_PAD)),      # W3 (block-placed columns) bf16
            const((1, OUT_PAD)),         # b3      f32
        ],
        out_specs=pl.BlockSpec((block_rows, OUT_PAD), lambda i: (i, 0)),
        compiler_params=pltpu.CompilerParams(
            dimension_semantics=("parallel",),
            vmem_limit_bytes=VMEM_LIMIT),
    )(x_bf16, hp["w1"], hp["w2"], hp["gn"], hp["w3"], hp["b3"])


# ---------------------------------------------------------------------------
# Kernel B: PredictionFusion + classifier (LRB + Linear(256,1)) fused.
#   grid = (row_blocks, K); K is the last ("arbitrary") axis; output is a
#   VMEM-resident (rows,128) accumulator, score of modality k goes to column k.
# ---------------------------------------------------------------------------
def _fusion_cls_kernel(delta_ref, act_ref, small_ref, wbig_ref, o_ref):
    k = pl.program_id(1)

    @pl.when(k == 0)
    def _():
        o_ref[...] = jnp.zeros_like(o_ref)

    d = delta_ref[0]                                  # (rows, 2) f32
    a = act_ref[...]                                  # (rows, 256) bf16
    small = small_ref[...]                            # (16, 256) f32
    wd1_0, wd1_1, bd1 = small[0:1], small[1:2], small[2:3]
    gd, bd = small[3:4], small[4:5]
    gm, bm = small[5:6], small[6:7]
    cg1, cb1 = small[7:8], small[8:9]
    cg2, cb2 = small[9:10], small[10:11]
    cw3 = small[11:12]                                # (1, 256) classifier weight row
    cb3 = small[12:13, 0:1]                           # (1, 1) classifier bias

    # delta_embedding: Linear(2,256)+bias via broadcast FMAs, then ReLU
    h = d[:, 0:1] * wd1_0 + d[:, 1:2] * wd1_1 + bd1
    h = jnp.maximum(h, 0.0)
    # Linear(256,256,no bias) + GN + ReLU
    h = jnp.dot(h.astype(jnp.bfloat16), wbig_ref[0],
                preferred_element_type=jnp.float32)
    h = jnp.maximum(_group_norm(h, gd, bd), 0.0)

    # mapping: Linear(512,256,no bias) split into delta-half + actor-half
    m = (jnp.dot(h.astype(jnp.bfloat16), wbig_ref[1],
                 preferred_element_type=jnp.float32)
         + jnp.dot(a, wbig_ref[2], preferred_element_type=jnp.float32))
    m = jnp.maximum(_group_norm(m, gm, bm), 0.0)

    # classifier LinearResidualBlock(256,256)
    c = jnp.dot(m.astype(jnp.bfloat16), wbig_ref[3],
                preferred_element_type=jnp.float32)
    c = jnp.maximum(_group_norm(c, cg1, cb1), 0.0)
    c = jnp.dot(c.astype(jnp.bfloat16), wbig_ref[4],
                preferred_element_type=jnp.float32)
    c = _group_norm(c, cg2, cb2)
    c = jnp.maximum(c + m, 0.0)

    # Linear(256,1): VPU mul + lane reduction, scattered into column k of the
    # lane-dense accumulator via a one-hot mask.
    score = jnp.sum(c * cw3, axis=-1, keepdims=True) + cb3            # (rows, 1)
    onehot = (jax.lax.broadcasted_iota(jnp.int32, (1, 128), 1) == k)
    o_ref[...] += score * onehot.astype(jnp.float32)


def fusion_classifier(delta_kn2, actors_bf16, fp, *, block_rows, n_valid,
                      single_buffer_weights):
    K, N_pad, _ = delta_kn2.shape
    D = N_DIM
    grid = (N_pad // block_rows, K)                   # K last -> reduction axis

    def const(shape):
        idx = lambda *_: (0,) * len(shape)
        if single_buffer_weights:
            return pl.BlockSpec(shape, idx, pipeline_mode=pl.Buffered(1))
        return pl.BlockSpec(shape, idx)

    out = pl.pallas_call(
        _fusion_cls_kernel,
        out_shape=jax.ShapeDtypeStruct((N_pad, 128), jnp.float32),
        grid=grid,
        in_specs=[
            pl.BlockSpec((1, block_rows, 2), lambda i, k: (k, i, 0)),
            pl.BlockSpec((block_rows, D), lambda i, k: (i, 0)),  # actors: no repeat
            const((16, D)),        # packed small params (f32)
            const((5, D, D)),      # wd2, wm_d, wm_a, cw1, cw2 (bf16)
        ],
        out_specs=pl.BlockSpec((block_rows, 128), lambda i, k: (i, 0)),
        compiler_params=pltpu.CompilerParams(
            dimension_semantics=("parallel", "arbitrary"),
            vmem_limit_bytes=VMEM_LIMIT),
    )(delta_kn2, actors_bf16, fp["small"], fp["wbig"])
    return out[:n_valid, :K]                          # (N, K) classification scores


# ---------------------------------------------------------------------------
# Parameter init (deterministic, synthetic) + one-time packing for the kernels
# ---------------------------------------------------------------------------
def init_params(key, num_mods, num_preds):
    keys = iter(jax.random.split(key, 256))

    def lin(kin, kout, scale=0.05):
        return jax.random.normal(next(keys), (kin, kout), jnp.float32) * scale

    def gn():
        g = 1.0 + 0.1 * jax.random.normal(next(keys), (1, N_DIM), jnp.float32)
        b = 0.1 * jax.random.normal(next(keys), (1, N_DIM), jnp.float32)
        return g, b

    def head(out_dim):
        g1, b1 = gn()
        g2, b2 = gn()
        return dict(
            w1=lin(N_DIM, N_DIM), g1=g1, b1=b1,
            w2=lin(N_DIM, N_DIM), g2=g2, b2=b2,
            w3=lin(N_DIM, out_dim),
            b3=0.05 * jax.random.normal(next(keys), (1, out_dim), jnp.float32),
        )

    gd, bd = gn()
    gm, bm = gn()
    fusion = dict(
        wd1=lin(2, N_DIM),
        bd1=0.05 * jax.random.normal(next(keys), (1, N_DIM), jnp.float32),
        wd2=lin(N_DIM, N_DIM), gd=gd, bd=bd,
        wm_d=lin(N_DIM, N_DIM),   # first 256 rows of the (512,256) mapping weight
        wm_a=lin(N_DIM, N_DIM),   # last 256 rows
        gm=gm, bm=bm,
    )
    return dict(
        preds=[head(2 * num_preds) for _ in range(num_mods)],
        single_pred=head(2 * num_preds),
        classifier=head(1),
        fusion=fusion,
    )


def pack_params(params, num_mods, num_preds):
    """One-time re-layout: fuse stage-1 weights, stack stage-2/3 weights,
    block-place each head's w3 columns in a padded lane-dense matrix, pack all
    small gamma/beta/bias params, cast matmul weights to bf16."""
    T2 = 2 * num_preds
    heads = list(params["preds"]) + [params["single_pred"]]
    H = len(heads)
    OUT_PAD = _round_up(H * T2, 128)

    w1cat = jnp.concatenate([h["w1"] for h in heads], axis=1)          # (256, H*256)
    w2stk = jnp.stack([h["w2"] for h in heads])                        # (H, 256, 256)
    gnstk = jnp.stack([jnp.concatenate([h["g1"], h["b1"], h["g2"], h["b2"]], axis=0)
                       for h in heads])                                # (H, 4, 256)
    w3stk = jnp.zeros((H, N_DIM, OUT_PAD), jnp.float32)
    b3p = jnp.zeros((1, OUT_PAD), jnp.float32)
    for h, hd in enumerate(heads):
        w3stk = w3stk.at[h, :, h * T2:(h + 1) * T2].set(hd["w3"])
        b3p = b3p.at[:, h * T2:(h + 1) * T2].set(hd["b3"])

    heads_packed = dict(
        num_heads=H, t2=T2, out_pad=OUT_PAD,
        w1=w1cat.astype(jnp.bfloat16),
        w2=w2stk.astype(jnp.bfloat16),
        gn=gnstk,
        w3=w3stk.astype(jnp.bfloat16),
        b3=b3p,
    )

    f = params["fusion"]
    c = params["classifier"]
    assert f["wd1"].shape == (2, N_DIM), "delta-embedding weight must be (2, 256) (in,out)"
    small = jnp.zeros((16, N_DIM), jnp.float32)
    small = small.at[0:2].set(f["wd1"])
    small = small.at[2].set(f["bd1"][0])
    small = small.at[3].set(f["gd"][0]).at[4].set(f["bd"][0])
    small = small.at[5].set(f["gm"][0]).at[6].set(f["bm"][0])
    small = small.at[7].set(c["g1"][0]).at[8].set(c["b1"][0])
    small = small.at[9].set(c["g2"][0]).at[10].set(c["b2"][0])
    small = small.at[11].set(c["w3"][:, 0])            # (256,) classifier weight
    small = small.at[12, 0].set(c["b3"][0, 0])         # scalar classifier bias
    wbig = jnp.stack([f["wd2"], f["wm_d"], f["wm_a"], c["w1"], c["w2"]]
                     ).astype(jnp.bfloat16)            # (5, 256, 256)
    fusion_packed = dict(small=small, wbig=wbig)
    return dict(heads=heads_packed, fusion=fusion_packed)


# ---------------------------------------------------------------------------
# Forward (glue in JAX, hot path in the two fused Pallas kernels above)
# ---------------------------------------------------------------------------
def regression_decoder_forward(packed, actors, actor_idcs, actor_ctrs,
                               num_mods, num_preds):
    N = actors.shape[0]
    T2 = 2 * num_preds

    # Row tiling: up to 512 rows per block (amortizes grid-step overhead), but
    # keep >=2 row blocks when N allows so both v7x TensorCores get work.
    block_rows = min(512, _round_up(N, 8))
    if N >= 16:
        block_rows = min(block_rows, _round_up((N + 1) // 2, 8))
    N_pad = _round_up(N, block_rows)
    actors_pad = actors if N_pad == N else jnp.pad(actors, ((0, N_pad - N), (0, 0)))
    actors_bf16 = actors_pad.astype(jnp.bfloat16)      # bf16 MXU operand only

    # --- all trajectory heads (K mods + single) in one launch ---
    try:
        head_out = heads_pallas(actors_bf16, packed["heads"],
                                block_rows=block_rows, single_buffer_weights=True)
    except Exception:
        head_out = heads_pallas(actors_bf16, packed["heads"],
                                block_rows=block_rows, single_buffer_weights=False)
    preds = head_out[:N, :num_mods * T2].reshape(N, num_mods, num_preds, 2)
    single = head_out[:N, num_mods * T2:(num_mods + 1) * T2].reshape(N, num_preds, 2)

    # per-actor center addition (equivalent of predictions[idcs] += ctrs)
    ctrs_per_actor = jnp.zeros((N, 2), jnp.float32)
    for i in range(len(actor_idcs)):
        ctrs_per_actor = ctrs_per_actor.at[actor_idcs[i]].set(actor_ctrs[i])
    predictions = preds + ctrs_per_actor[:, None, None, :]
    single = single + ctrs_per_actor[:, None, :]

    # --- endpoint deltas -> fusion + classifier (single launch, no actors_rep) ---
    pred_ctrs = jax.lax.stop_gradient(predictions[:, :, -1])       # (N, K, 2)
    ctrs_cat = jnp.concatenate(actor_ctrs, axis=0)                 # (N, 2)
    delta = ctrs_cat[:, None, :] - pred_ctrs                       # (N, K, 2)
    delta_kn2 = jnp.transpose(delta, (1, 0, 2))                    # (K, N, 2)
    if N_pad != N:
        delta_kn2 = jnp.pad(delta_kn2, ((0, 0), (0, N_pad - N), (0, 0)))
    try:
        cls = fusion_classifier(delta_kn2, actors_bf16, packed["fusion"],
                                block_rows=block_rows, n_valid=N,
                                single_buffer_weights=True)        # (N, K)
    except Exception:
        cls = fusion_classifier(delta_kn2, actors_bf16, packed["fusion"],
                                block_rows=block_rows, n_valid=N,
                                single_buffer_weights=False)

    # sort by confidence + gather (no clean Pallas equivalent -> JAX glue)
    order = jnp.argsort(-cls, axis=1)
    cls_scores = jnp.take_along_axis(cls, order, axis=1)
    preds_sorted = jnp.take_along_axis(predictions, order[:, :, None, None], axis=1)

    result = {"confidence": [], "prediction": [], "single_prediction": []}
    for i in range(len(actor_idcs)):
        idcs = actor_idcs[i]
        result["confidence"].append(cls_scores[idcs])
        result["prediction"].append(preds_sorted[idcs])
        result["single_prediction"].append(single[idcs])
    return result


if __name__ == "__main__":
    num_mods = 2      # config['num_mods']
    num_preds = 8     # config['num_preds']
    N = 8             # total actors across the batch
    batch_sizes = [5, 3]

    key = jax.random.PRNGKey(0)
    k_param, k_act, k_c0, k_c1 = jax.random.split(key, 4)

    raw_params = init_params(k_param, num_mods, num_preds)
    packed = pack_params(raw_params, num_mods, num_preds)

    actors = jax.random.normal(k_act, (N, N_DIM), jnp.float32)
    actor_idcs = [jnp.arange(0, 5, dtype=jnp.int32),
                  jnp.arange(5, 8, dtype=jnp.int32)]
    actor_ctrs = [jax.random.normal(k_c0, (5, 2), jnp.float32) * 10.0,
                  jax.random.normal(k_c1, (3, 2), jnp.float32) * 10.0]

    result = regression_decoder_forward(packed, actors, actor_idcs, actor_ctrs,
                                        num_mods, num_preds)
    result = jax.tree_util.tree_map(jax.block_until_ready, result)

    # sanity shape checks
    assert result["confidence"][0].shape == (5, num_mods)
    assert result["prediction"][0].shape == (5, num_mods, num_preds, 2)
    assert result["single_prediction"][1].shape == (3, num_preds, 2)
    for v in jax.tree_util.tree_leaves(result):
        assert bool(jnp.all(jnp.isfinite(v)))

    # TODO(synk): confidence sort/gather and ragged per-batch split stay in JAX.
    print("KERNEL_OK")
</pallas_src>

<mosaic_0001>
module attributes {stable_mosaic.version = 11 : i64} {
  func.func @_heads_kernel(%arg0: i32, %arg1: memref<8x256xbf16, #tpu.memory_space<vmem>>, %arg2: memref<256x768xbf16, #tpu.memory_space<vmem>>, %arg3: memref<3x256x256xbf16, #tpu.memory_space<vmem>>, %arg4: memref<3x4x256xf32, #tpu.memory_space<vmem>>, %arg5: memref<3x256x128xbf16, #tpu.memory_space<vmem>>, %arg6: memref<1x128xf32, #tpu.memory_space<vmem>>, %arg7: memref<8x128xf32, #tpu.memory_space<vmem>>) attributes {dimension_semantics = [#tpu.dimension_semantics<parallel>], iteration_bounds = array<i64: 1>, scalar_prefetch = 0 : i64, scratch_operands = 0 : i64, tpu.core_type = #tpu.core_type<tc>, window_params = [{transform_indices = @transform_0, window_bounds = array<i64: 8, 256>}, {pipeline_mode = #tpu.pipeline_mode<synchronous>, transform_indices = @transform_1, window_bounds = array<i64: 256, 768>}, {pipeline_mode = #tpu.pipeline_mode<synchronous>, transform_indices = @transform_2, window_bounds = array<i64: 3, 256, 256>}, {pipeline_mode = #tpu.pipeline_mode<synchronous>, transform_indices = @transform_3, window_bounds = array<i64: 3, 4, 256>}, {pipeline_mode = #tpu.pipeline_mode<synchronous>, transform_indices = @transform_4, window_bounds = array<i64: 3, 256, 128>}, {pipeline_mode = #tpu.pipeline_mode<synchronous>, transform_indices = @transform_5, window_bounds = array<i64: 1, 128>}, {transform_indices = @transform_6, window_bounds = array<i64: 8, 128>}]} {
    %c0 = arith.constant 0 : index
    %c0_0 = arith.constant 0 : index
    %0 = vector.load %arg1[%c0, %c0_0] : memref<8x256xbf16, #tpu.memory_space<vmem>>, vector<8x256xbf16>
    %1 = arith.extf %0 : vector<8x256xbf16> to vector<8x256xf32>
    %c0_1 = arith.constant 0 : index
    %c0_2 = arith.constant 0 : index
    %c0_3 = arith.constant 0 : index
    %2 = vector.load %arg4[%c0_1, %c0_2, %c0_3] : memref<3x4x256xf32, #tpu.memory_space<vmem>>, vector<3x4x256xf32>
    %c0_4 = arith.constant 0 : index
    %c0_5 = arith.constant 0 : index
    %3 = vector.load %arg2[%c0_4, %c0_5] : memref<256x768xbf16, #tpu.memory_space<vmem>>, vector<256x768xbf16>
    %cst = arith.constant dense<0.000000e+00> : vector<8x768xf32>
    %4 = tpu.matmul %0, %3, %cst {dimension_numbers = #tpu.dot_dimension_numbers<[1], [0], [0], [1], [0, 0, 1, 1], [], []>} : vector<8x256xbf16>, vector<256x768xbf16>, vector<8x768xf32> -> vector<8x768xf32>
    %5 = vector.extract_strided_slice %4 {offsets = [0, 0], sizes = [8, 256], strides = [1, 1]} : vector<8x768xf32> to vector<8x256xf32>
    %6 = vector.extract_strided_slice %2 {offsets = [0, 0, 0], sizes = [1, 1, 256], strides = [1, 1, 1]} : vector<3x4x256xf32> to vector<1x1x256xf32>
    %7 = vector.shape_cast %6 : vector<1x1x256xf32> to vector<1x256xf32>
    %8 = vector.extract_strided_slice %2 {offsets = [0, 1, 0], sizes = [1, 1, 256], strides = [1, 1, 1]} : vector<3x4x256xf32> to vector<1x1x256xf32>
    %9 = vector.shape_cast %8 : vector<1x1x256xf32> to vector<1x256xf32>
    %cst_6 = arith.constant dense<0.000000e+00> : vector<8xf32>
    %10 = vector.multi_reduction <add>, %5, %cst_6 [1] : vector<8x256xf32> to vector<8xf32>
    %11 = vector.shape_cast %10 : vector<8xf32> to vector<8x1xf32>
    %cst_7 = arith.constant 2.560000e+02 : f32
    %12 = vector.broadcast %cst_7 : f32 to vector<8x1xf32>
    %13 = arith.divf %11, %12 : vector<8x1xf32>
    %14 = arith.mulf %5, %5 : vector<8x256xf32>
    %cst_8 = arith.constant dense<0.000000e+00> : vector<8xf32>
    %15 = vector.multi_reduction <add>, %14, %cst_8 [1] : vector<8x256xf32> to vector<8xf32>
    %16 = vector.shape_cast %15 : vector<8xf32> to vector<8x1xf32>
    %cst_9 = arith.constant 2.560000e+02 : f32
    %17 = vector.broadcast %cst_9 : f32 to vector<8x1xf32>
    %18 = arith.divf %16, %17 : vector<8x1xf32>
    %19 = arith.mulf %13, %13 : vector<8x1xf32>
    %20 = arith.subf %18, %19 : vector<8x1xf32>
    %cst_10 = arith.constant 9.99999974E-6 : f32
    %21 = vector.broadcast %cst_10 : f32 to vector<8x1xf32>
    %22 = arith.addf %20, %21 : vector<8x1xf32>
    %23 = math.rsqrt %22 : vector<8x1xf32>
    %24 = vector.broadcast %7 : vector<1x256xf32> to vector<8x256xf32>
    %25 = vector.broadcast %23 : vector<8x1xf32> to vector<8x256xf32>
    %26 = arith.mulf %24, %25 : vector<8x256xf32>
    %27 = arith.mulf %5, %26 : vector<8x256xf32>
    %28 = vector.broadcast %13 : vector<8x1xf32> to vector<8x256xf32>
    %29 = arith.mulf %28, %26 : vector<8x256xf32>
    %30 = vector.broadcast %9 : vector<1x256xf32> to vector<8x256xf32>
    %31 = arith.subf %30, %29 : vector<8x256xf32>
    %32 = arith.addf %27, %31 : vector<8x256xf32>
    %cst_11 = arith.constant 0.000000e+00 : f32
    %33 = vector.broadcast %cst_11 : f32 to vector<8x256xf32>
    %34 = arith.maximumf %32, %33 : vector<8x256xf32>
    %35 = arith.truncf %34 : vector<8x256xf32> to vector<8x256xbf16>
    %c0_12 = arith.constant 0 : index
    %c0_13 = arith.constant 0 : index
    %c0_14 = arith.constant 0 : index
    %36 = vector.load %arg3[%c0_12, %c0_13, %c0_14] : memref<3x256x256xbf16, #tpu.memory_space<vmem>>, vector<1x256x256xbf16>
    %37 = vector.shape_cast %36 : vector<1x256x256xbf16> to vector<256x256xbf16>
    %cst_15 = arith.constant dense<0.000000e+00> : vector<8x256xf32>
    %38 = tpu.matmul %35, %37, %cst_15 {dimension_numbers = #tpu.dot_dimension_numbers<[1], [0], [0], [1], [0, 0, 1, 1], [], []>} : vector<8x256xbf16>, vector<256x256xbf16>, vector<8x256xf32> -> vector<8x256xf32>
    %39 = vector.extract_strided_slice %2 {offsets = [0, 2, 0], sizes = [1, 1, 256], strides = [1, 1, 1]} : vector<3x4x256xf32> to vector<1x1x256xf32>
    %40 = vector.shape_cast %39 : vector<1x1x256xf32> to vector<1x256xf32>
    %41 = vector.extract_strided_slice %2 {offsets = [0, 3, 0], sizes = [1, 1, 256], strides = [1, 1, 1]} : vector<3x4x256xf32> to vector<1x1x256xf32>
    %42 = vector.shape_cast %41 : vector<1x1x256xf32> to vector<1x256xf32>
    %cst_16 = arith.constant dense<0.000000e+00> : vector<8xf32>
    %43 = vector.multi_reduction <add>, %38, %cst_16 [1] : vector<8x256xf32> to vector<8xf32>
    %44 = vector.shape_cast %43 : vector<8xf32> to vector<8x1xf32>
    %cst_17 = arith.constant 2.560000e+02 : f32
    %45 = vector.broadcast %cst_17 : f32 to vector<8x1xf32>
    %46 = arith.divf %44, %45 : vector<8x1xf32>
    %47 = arith.mulf %38, %38 : vector<8x256xf32>
    %cst_18 = arith.constant dense<0.000000e+00> : vector<8xf32>
    %48 = vector.multi_reduction <add>, %47, %cst_18 [1] : vector<8x256xf32> to vector<8xf32>
    %49 = vector.shape_cast %48 : vector<8xf32> to vector<8x1xf32>
    %cst_19 = arith.constant 2.560000e+02 : f32
    %50 = vector.broadcast %cst_19 : f32 to vector<8x1xf32>
    %51 = arith.divf %49, %50 : vector<8x1xf32>
    %52 = arith.mulf %46, %46 : vector<8x1xf32>
    %53 = arith.subf %51, %52 : vector<8x1xf32>
    %cst_20 = arith.constant 9.99999974E-6 : f32
    %54 = vector.broadcast %cst_20 : f32 to vector<8x1xf32>
    %55 = arith.addf %53, %54 : vector<8x1xf32>
    %56 = math.rsqrt %55 : vector<8x1xf32>
    %57 = vector.broadcast %40 : vector<1x256xf32> to vector<8x256xf32>
    %58 = vector.broadcast %56 : vector<8x1xf32> to vector<8x256xf32>
    %59 = arith.mulf %57, %58 : vector<8x256xf32>
    %60 = arith.mulf %38, %59 : vector<8x256xf32>
    %61 = vector.broadcast %46 : vector<8x1xf32> to vector<8x256xf32>
    %62 = arith.mulf %61, %59 : vector<8x256xf32>
    %63 = vector.broadcast %42 : vector<1x256xf32> to vector<8x256xf32>
    %64 = arith.subf %63, %62 : vector<8x256xf32>
    %65 = arith.addf %60, %64 : vector<8x256xf32>
    %66 = arith.addf %65, %1 : vector<8x256xf32>
    %cst_21 = arith.constant 0.000000e+00 : f32
    %67 = vector.broadcast %cst_21 : f32 to vector<8x256xf32>
    %68 = arith.maximumf %66, %67 : vector<8x256xf32>
    %69 = arith.truncf %68 : vector<8x256xf32> to vector<8x256xbf16>
    %c0_22 = arith.constant 0 : index
    %c0_23 = arith.constant 0 : index
    %c0_24 = arith.constant 0 : index
    %70 = vector.load %arg5[%c0_22, %c0_23, %c0_24] : memref<3x256x128xbf16, #tpu.memory_space<vmem>>, vector<1x256x128xbf16>
    %71 = vector.shape_cast %70 : vector<1x256x128xbf16> to vector<256x128xbf16>
    %cst_25 = arith.constant dense<0.000000e+00> : vector<8x128xf32>
    %72 = tpu.matmul %69, %71, %cst_25 {dimension_numbers = #tpu.dot_dimension_numbers<[1], [0], [0], [1], [0, 0, 1, 1], [], []>} : vector<8x256xbf16>, vector<256x128xbf16>, vector<8x128xf32> -> vector<8x128xf32>
    %73 = vector.extract_strided_slice %4 {offsets = [0, 256], sizes = [8, 256], strides = [1, 1]} : vector<8x768xf32> to vector<8x256xf32>
    %74 = vector.extract_strided_slice %2 {offsets = [1, 0, 0], sizes = [1, 1, 256], strides = [1, 1, 1]} : vector<3x4x256xf32> to vector<1x1x256xf32>
    %75 = vector.shape_cast %74 : vector<1x1x256xf32> to vector<1x256xf32>
    %76 = vector.extract_strided_slice %2 {offsets = [1, 1, 0], sizes = [1, 1, 256], strides = [1, 1, 1]} : vector<3x4x256xf32> to vector<1x1x256xf32>
    %77 = vector.shape_cast %76 : vector<1x1x256xf32> to vector<1x256xf32>
    %cst_26 = arith.constant dense<0.000000e+00> : vector<8xf32>
    %78 = vector.multi_reduction <add>, %73, %cst_26 [1] : vector<8x256xf32> to vector<8xf32>
    %79 = vector.shape_cast %78 : vector<8xf32> to vector<8x1xf32>
    %cst_27 = arith.constant 2.560000e+02 : f32
    %80 = vector.broadcast %cst_27 : f32 to vector<8x1xf32>
    %81 = arith.divf %79, %80 : vector<8x1xf32>
    %82 = arith.mulf %73, %73 : vector<8x256xf32>
    %cst_28 = arith.constant dense<0.000000e+00> : vector<8xf32>
    %83 = vector.multi_reduction <add>, %82, %cst_28 [1] : vector<8x256xf32> to vector<8xf32>
    %84 = vector.shape_cast %83 : vector<8xf32> to vector<8x1xf32>
    %cst_29 = arith.constant 2.560000e+02 : f32
    %85 = vector.broadcast %cst_29 : f32 to vector<8x1xf32>
    %86 = arith.divf %84, %85 : vector<8x1xf32>
    %87 = arith.mulf %81, %81 : vector<8x1xf32>
    %88 = arith.subf %86, %87 : vector<8x1xf32>
    %cst_30 = arith.constant 9.99999974E-6 : f32
    %89 = vector.broadcast %cst_30 : f32 to vector<8x1xf32>
    %90 = arith.addf %88, %89 : vector<8x1xf32>
    %91 = math.rsqrt %90 : vector<8x1xf32>
    %92 = vector.broadcast %75 : vector<1x256xf32> to vector<8x256xf32>
    %93 = vector.broadcast %91 : vector<8x1xf32> to vector<8x256xf32>
    %94 = arith.mulf %92, %93 : vector<8x256xf32>
    %95 = arith.mulf %73, %94 : vector<8x256xf32>
    %96 = vector.broadcast %81 : vector<8x1xf32> to vector<8x256xf32>
    %97 = arith.mulf %96, %94 : vector<8x256xf32>
    %98 = vector.broadcast %77 : vector<1x256xf32> to vector<8x256xf32>
    %99 = arith.subf %98, %97 : vector<8x256xf32>
    %100 = arith.addf %95, %99 : vector<8x256xf32>
    %cst_31 = arith.constant 0.000000e+00 : f32
    %101 = vector.broadcast %cst_31 : f32 to vector<8x256xf32>
    %102 = arith.maximumf %100, %101 : vector<8x256xf32>
    %103 = arith.truncf %102 : vector<8x256xf32> to vector<8x256xbf16>
    %c1 = arith.constant 1 : index
    %c0_32 = arith.constant 0 : index
    %c0_33 = arith.constant 0 : index
    %104 = vector.load %arg3[%c1, %c0_32, %c0_33] : memref<3x256x256xbf16, #tpu.memory_space<vmem>>, vector<1x256x256xbf16>
    %105 = vector.shape_cast %104 : vector<1x256x256xbf16> to vector<256x256xbf16>
    %cst_34 = arith.constant dense<0.000000e+00> : vector<8x256xf32>
    %106 = tpu.matmul %103, %105, %cst_34 {dimension_numbers = #tpu.dot_dimension_numbers<[1], [0], [0], [1], [0, 0, 1, 1], [], []>} : vector<8x256xbf16>, vector<256x256xbf16>, vector<8x256xf32> -> vector<8x256xf32>
    %107 = vector.extract_strided_slice %2 {offsets = [1, 2, 0], sizes = [1, 1, 256], strides = [1, 1, 1]} : vector<3x4x256xf32> to vector<1x1x256xf32>
    %108 = vector.shape_cast %107 : vector<1x1x256xf32> to vector<1x256xf32>
    %109 = vector.extract_strided_slice %2 {offsets = [1, 3, 0], sizes = [1, 1, 256], strides = [1, 1, 1]} : vector<3x4x256xf32> to vector<1x1x256xf32>
    %110 = vector.shape_cast %109 : vector<1x1x256xf32> to vector<1x256xf32>
    %cst_35 = arith.constant dense<0.000000e+00> : vector<8xf32>
    %111 = vector.multi_reduction <add>, %106, %cst_35 [1] : vector<8x256xf32> to vector<8xf32>
    %112 = vector.shape_cast %111 : vector<8xf32> to vector<8x1xf32>
    %cst_36 = arith.constant 2.560000e+02 : f32
    %113 = vector.broadcast %cst_36 : f32 to vector<8x1xf32>
    %114 = arith.divf %112, %113 : vector<8x1xf32>
    %115 = arith.mulf %106, %106 : vector<8x256xf32>
    %cst_37 = arith.constant dense<0.000000e+00> : vector<8xf32>
    %116 = vector.multi_reduction <add>, %115, %cst_37 [1] : vector<8x256xf32> to vector<8xf32>
    %117 = vector.shape_cast %116 : vector<8xf32> to vector<8x1xf32>
    %cst_38 = arith.constant 2.560000e+02 : f32
    %118 = vector.broadcast %cst_38 : f32 to vector<8x1xf32>
    %119 = arith.divf %117, %118 : vector<8x1xf32>
    %120 = arith.mulf %114, %114 : vector<8x1xf32>
    %121 = arith.subf %119, %120 : vector<8x1xf32>
    %cst_39 = arith.constant 9.99999974E-6 : f32
    %122 = vector.broadcast %cst_39 : f32 to vector<8x1xf32>
    %123 = arith.addf %121, %122 : vector<8x1xf32>
    %124 = math.rsqrt %123 : vector<8x1xf32>
    %125 = vector.broadcast %108 : vector<1x256xf32> to vector<8x256xf32>
    %126 = vector.broadcast %124 : vector<8x1xf32> to vector<8x256xf32>
    %127 = arith.mulf %125, %126 : vector<8x256xf32>
    %128 = arith.mulf %106, %127 : vector<8x256xf32>
    %129 = vector.broadcast %114 : vector<8x1xf32> to vector<8x256xf32>
    %130 = arith.mulf %129, %127 : vector<8x256xf32>
    %131 = vector.broadcast %110 : vector<1x256xf32> to vector<8x256xf32>
    %132 = arith.subf %131, %130 : vector<8x256xf32>
    %133 = arith.addf %128, %132 : vector<8x256xf32>
    %134 = arith.addf %133, %1 : vector<8x256xf32>
    %cst_40 = arith.constant 0.000000e+00 : f32
    %135 = vector.broadcast %cst_40 : f32 to vector<8x256xf32>
    %136 = arith.maximumf %134, %135 : vector<8x256xf32>
    %137 = arith.truncf %136 : vector<8x256xf32> to vector<8x256xbf16>
    %c1_41 = arith.constant 1 : index
    %c0_42 = arith.constant 0 : index
    %c0_43 = arith.constant 0 : index
    %138 = vector.load %arg5[%c1_41, %c0_42, %c0_43] : memref<3x256x128xbf16, #tpu.memory_space<vmem>>, vector<1x256x128xbf16>
    %139 = vector.shape_cast %138 : vector<1x256x128xbf16> to vector<256x128xbf16>
    %cst_44 = arith.constant dense<0.000000e+00> : vector<8x128xf32>
    %140 = tpu.matmul %137, %139, %cst_44 {dimension_numbers = #tpu.dot_dimension_numbers<[1], [0], [0], [1], [0, 0, 1, 1], [], []>} : vector<8x256xbf16>, vector<256x128xbf16>, vector<8x128xf32> -> vector<8x128xf32>
    %141 = arith.addf %72, %140 : vector<8x128xf32>
    %142 = vector.extract_strided_slice %4 {offsets = [0, 512], sizes = [8, 256], strides = [1, 1]} : vector<8x768xf32> to vector<8x256xf32>
    %143 = vector.extract_strided_slice %2 {offsets = [2, 0, 0], sizes = [1, 1, 256], strides = [1, 1, 1]} : vector<3x4x256xf32> to vector<1x1x256xf32>
    %144 = vector.shape_cast %143 : vector<1x1x256xf32> to vector<1x256xf32>
    %145 = vector.extract_strided_slice %2 {offsets = [2, 1, 0], sizes = [1, 1, 256], strides = [1, 1, 1]} : vector<3x4x256xf32> to vector<1x1x256xf32>
    %146 = vector.shape_cast %145 : vector<1x1x256xf32> to vector<1x256xf32>
    %cst_45 = arith.constant dense<0.000000e+00> : vector<8xf32>
    %147 = vector.multi_reduction <add>, %142, %cst_45 [1] : vector<8x256xf32> to vector<8xf32>
    %148 = vector.shape_cast %147 : vector<8xf32> to vector<8x1xf32>
    %cst_46 = arith.constant 2.560000e+02 : f32
    %149 = vector.broadcast %cst_46 : f32 to vector<8x1xf32>
    %150 = arith.divf %148, %149 : vector<8x1xf32>
    %151 = arith.mulf %142, %142 : vector<8x256xf32>
    %cst_47 = arith.constant dense<0.000000e+00> : vector<8xf32>
    %152 = vector.multi_reduction <add>, %151, %cst_47 [1] : vector<8x256xf32> to vector<8xf32>
    %153 = vector.shape_cast %152 : vector<8xf32> to vector<8x1xf32>
    %cst_48 = arith.constant 2.560000e+02 : f32
    %154 = vector.broadcast %cst_48 : f32 to vector<8x1xf32>
    %155 = arith.divf %153, %154 : vector<8x1xf32>
    %156 = arith.mulf %150, %150 : vector<8x1xf32>
    %157 = arith.subf %155, %156 : vector<8x1xf32>
    %cst_49 = arith.constant 9.99999974E-6 : f32
    %158 = vector.broadcast %cst_49 : f32 to vector<8x1xf32>
    %159 = arith.addf %157, %158 : vector<8x1xf32>
    %160 = math.rsqrt %159 : vector<8x1xf32>
    %161 = vector.broadcast %144 : vector<1x256xf32> to vector<8x256xf32>
    %162 = vector.broadcast %160 : vector<8x1xf32> to vector<8x256xf32>
    %163 = arith.mulf %161, %162 : vector<8x256xf32>
    %164 = arith.mulf %142, %163 : vector<8x256xf32>
    %165 = vector.broadcast %150 : vector<8x1xf32> to vector<8x256xf32>
    %166 = arith.mulf %165, %163 : vector<8x256xf32>
    %167 = vector.broadcast %146 : vector<1x256xf32> to vector<8x256xf32>
    %168 = arith.subf %167, %166 : vector<8x256xf32>
    %169 = arith.addf %164, %168 : vector<8x256xf32>
    %cst_50 = arith.constant 0.000000e+00 : f32
    %170 = vector.broadcast %cst_50 : f32 to vector<8x256xf32>
    %171 = arith.maximumf %169, %170 : vector<8x256xf32>
    %172 = arith.truncf %171 : vector<8x256xf32> to vector<8x256xbf16>
    %c2 = arith.constant 2 : index
    %c0_51 = arith.constant 0 : index
    %c0_52 = arith.constant 0 : index
    %173 = vector.load %arg3[%c2, %c0_51, %c0_52] : memref<3x256x256xbf16, #tpu.memory_space<vmem>>, vector<1x256x256xbf16>
    %174 = vector.shape_cast %173 : vector<1x256x256xbf16> to vector<256x256xbf16>
    %cst_53 = arith.constant dense<0.000000e+00> : vector<8x256xf32>
    %175 = tpu.matmul %172, %174, %cst_53 {dimension_numbers = #tpu.dot_dimension_numbers<[1], [0], [0], [1], [0, 0, 1, 1], [], []>} : vector<8x256xbf16>, vector<256x256xbf16>, vector<8x256xf32> -> vector<8x256xf32>
    %176 = vector.extract_strided_slice %2 {offsets = [2, 2, 0], sizes = [1, 1, 256], strides = [1, 1, 1]} : vector<3x4x256xf32> to vector<1x1x256xf32>
    %177 = vector.shape_cast %176 : vector<1x1x256xf32> to vector<1x256xf32>
    %178 = vector.extract_strided_slice %2 {offsets = [2, 3, 0], sizes = [1, 1, 256], strides = [1, 1, 1]} : vector<3x4x256xf32> to vector<1x1x256xf32>
    %179 = vector.shape_cast %178 : vector<1x1x256xf32> to vector<1x256xf32>
    %cst_54 = arith.constant dense<0.000000e+00> : vector<8xf32>
    %180 = vector.multi_reduction <add>, %175, %cst_54 [1] : vector<8x256xf32> to vector<8xf32>
    %181 = vector.shape_cast %180 : vector<8xf32> to vector<8x1xf32>
    %cst_55 = arith.constant 2.560000e+02 : f32
    %182 = vector.broadcast %cst_55 : f32 to vector<8x1xf32>
    %183 = arith.divf %181, %182 : vector<8x1xf32>
    %184 = arith.mulf %175, %175 : vector<8x256xf32>
    %cst_56 = arith.constant dense<0.000000e+00> : vector<8xf32>
    %185 = vector.multi_reduction <add>, %184, %cst_56 [1] : vector<8x256xf32> to vector<8xf32>
    %186 = vector.shape_cast %185 : vector<8xf32> to vector<8x1xf32>
    %cst_57 = arith.constant 2.560000e+02 : f32
    %187 = vector.broadcast %cst_57 : f32 to vector<8x1xf32>
    %188 = arith.divf %186, %187 : vector<8x1xf32>
    %189 = arith.mulf %183, %183 : vector<8x1xf32>
    %190 = arith.subf %188, %189 : vector<8x1xf32>
    %cst_58 = arith.constant 9.99999974E-6 : f32
    %191 = vector.broadcast %cst_58 : f32 to vector<8x1xf32>
    %192 = arith.addf %190, %191 : vector<8x1xf32>
    %193 = math.rsqrt %192 : vector<8x1xf32>
    %194 = vector.broadcast %177 : vector<1x256xf32> to vector<8x256xf32>
    %195 = vector.broadcast %193 : vector<8x1xf32> to vector<8x256xf32>
    %196 = arith.mulf %194, %195 : vector<8x256xf32>
    %197 = arith.mulf %175, %196 : vector<8x256xf32>
    %198 = vector.broadcast %183 : vector<8x1xf32> to vector<8x256xf32>
    %199 = arith.mulf %198, %196 : vector<8x256xf32>
    %200 = vector.broadcast %179 : vector<1x256xf32> to vector<8x256xf32>
    %201 = arith.subf %200, %199 : vector<8x256xf32>
    %202 = arith.addf %197, %201 : vector<8x256xf32>
    %203 = arith.addf %202, %1 : vector<8x256xf32>
    %cst_59 = arith.constant 0.000000e+00 : f32
    %204 = vector.broadcast %cst_59 : f32 to vector<8x256xf32>
    %205 = arith.maximumf %203, %204 : vector<8x256xf32>
    %206 = arith.truncf %205 : vector<8x256xf32> to vector<8x256xbf16>
    %c2_60 = arith.constant 2 : index
    %c0_61 = arith.constant 0 : index
    %c0_62 = arith.constant 0 : index
    %207 = vector.load %arg5[%c2_60, %c0_61, %c0_62] : memref<3x256x128xbf16, #tpu.memory_space<vmem>>, vector<1x256x128xbf16>
    %208 = vector.shape_cast %207 : vector<1x256x128xbf16> to vector<256x128xbf16>
    %cst_63 = arith.constant dense<0.000000e+00> : vector<8x128xf32>
    %209 = tpu.matmul %206, %208, %cst_63 {dimension_numbers = #tpu.dot_dimension_numbers<[1], [0], [0], [1], [0, 0, 1, 1], [], []>} : vector<8x256xbf16>, vector<256x128xbf16>, vector<8x128xf32> -> vector<8x128xf32>
    %210 = arith.addf %141, %209 : vector<8x128xf32>
    %c0_64 = arith.constant 0 : index
    %c0_65 = arith.constant 0 : index
    %211 = vector.load %arg6[%c0_64, %c0_65] : memref<1x128xf32, #tpu.memory_space<vmem>>, vector<1x128xf32>
    %212 = vector.broadcast %211 : vector<1x128xf32> to vector<8x128xf32>
    %213 = arith.addf %210, %212 : vector<8x128xf32>
    %c0_66 = arith.constant 0 : index
    %c0_67 = arith.constant 0 : index
    %214 = vector.load %arg7[%c0_66, %c0_67] : memref<8x128xf32, #tpu.memory_space<vmem>>, vector<8x128xf32>
    tpu.vector_store %arg7[%c0_66, %c0_67], %213 {strides = array<i32>} : memref<8x128xf32, #tpu.memory_space<vmem>>, vector<8x128xf32>,
    return
  }
  func.func @transform_0(%arg0: i32) -> (i32, i32) {
    %c0_i32 = arith.constant 0 : i32
    %c0_i32_0 = arith.constant 0 : i32
    return %arg0, %c0_i32 : i32, i32
  }
  func.func @transform_1(%arg0: i32) -> (i32, i32) {
    %c0_i32 = arith.constant 0 : i32
    %c0_i32_0 = arith.constant 0 : i32
    %c0_i32_1 = arith.constant 0 : i32
    return %c0_i32, %c0_i32_0 : i32, i32
  }
  func.func @transform_2(%arg0: i32) -> (i32, i32, i32) {
    %c0_i32 = arith.constant 0 : i32
    %c0_i32_0 = arith.constant 0 : i32
    %c0_i32_1 = arith.constant 0 : i32
    %c0_i32_2 = arith.constant 0 : i32
    return %c0_i32, %c0_i32_0, %c0_i32_1 : i32, i32, i32
  }
  func.func @transform_3(%arg0: i32) -> (i32, i32, i32) {
    %c0_i32 = arith.constant 0 : i32
    %c0_i32_0 = arith.constant 0 : i32
    %c0_i32_1 = arith.constant 0 : i32
    %c0_i32_2 = arith.constant 0 : i32
    return %c0_i32, %c0_i32_0, %c0_i32_1 : i32, i32, i32
  }
  func.func @transform_4(%arg0: i32) -> (i32, i32, i32) {
    %c0_i32 = arith.constant 0 : i32
    %c0_i32_0 = arith.constant 0 : i32
    %c0_i32_1 = arith.constant 0 : i32
    %c0_i32_2 = arith.constant 0 : i32
    return %c0_i32, %c0_i32_0, %c0_i32_1 : i32, i32, i32
  }
  func.func @transform_5(%arg0: i32) -> (i32, i32) {
    %c0_i32 = arith.constant 0 : i32
    %c0_i32_0 = arith.constant 0 : i32
    %c0_i32_1 = arith.constant 0 : i32
    return %c0_i32, %c0_i32_0 : i32, i32
  }
  func.func @transform_6(%arg0: i32) -> (i32, i32) {
    %c0_i32 = arith.constant 0 : i32
    %c0_i32_0 = arith.constant 0 : i32
    return %arg0, %c0_i32 : i32, i32
  }
}

module attributes {stable_mosaic.version = 11 : i64} {
  func.func @_heads_kernel(%arg0: i32, %arg1: memref<8x256xbf16, #tpu.memory_space<vmem>>, %arg2: memref<256x768xbf16, #tpu.memory_space<vmem>>, %arg3: memref<3x256x256xbf16, #tpu.memory_space<vmem>>, %arg4: memref<3x4x256xf32, #tpu.memory_space<vmem>>, %arg5: memref<3x256x128xbf16, #tpu.memory_space<vmem>>, %arg6: memref<1x128xf32, #tpu.memory_space<vmem>>, %arg7: memref<8x128xf32, #tpu.memory_space<vmem>>) attributes {dimension_semantics = [#tpu.dimension_semantics<parallel>], iteration_bounds = array<i64: 1>, scalar_prefetch = 0 : i64, scratch_operands = 0 : i64, tpu.core_type = #tpu.core_type<tc>, window_params = [{transform_indices = @transform_0, window_bounds = array<i64: 8, 256>}, {pipeline_mode = #tpu.pipeline_mode<synchronous>, transform_indices = @transform_1, window_bounds = array<i64: 256, 768>}, {pipeline_mode = #tpu.pipeline_mode<synchronous>, transform_indices = @transform_2, window_bounds = array<i64: 3, 256, 256>}, {pipeline_mode = #tpu.pipeline_mode<synchronous>, transform_indices = @transform_3, window_bounds = array<i64: 3, 4, 256>}, {pipeline_mode = #tpu.pipeline_mode<synchronous>, transform_indices = @transform_4, window_bounds = array<i64: 3, 256, 128>}, {pipeline_mode = #tpu.pipeline_mode<synchronous>, transform_indices = @transform_5, window_bounds = array<i64: 1, 128>}, {transform_indices = @transform_6, window_bounds = array<i64: 8, 128>}]} {
    %c0 = arith.constant 0 : index
    %c0_0 = arith.constant 0 : index
    %0 = vector.load %arg1[%c0, %c0_0] : memref<8x256xbf16, #tpu.memory_space<vmem>>, vector<8x256xbf16>
    %1 = arith.extf %0 : vector<8x256xbf16> to vector<8x256xf32>
    %c0_1 = arith.constant 0 : index
    %c0_2 = arith.constant 0 : index
    %c0_3 = arith.constant 0 : index
    %2 = vector.load %arg4[%c0_1, %c0_2, %c0_3] : memref<3x4x256xf32, #tpu.memory_space<vmem>>, vector<3x4x256xf32>
    %c0_4 = arith.constant 0 : index
    %c0_5 = arith.constant 0 : index
    %3 = vector.load %arg2[%c0_4, %c0_5] : memref<256x768xbf16, #tpu.memory_space<vmem>>, vector<256x768xbf16>
    %cst = arith.constant dense<0.000000e+00> : vector<8x768xf32>
    %4 = tpu.matmul %0, %3, %cst {dimension_numbers = #tpu.dot_dimension_numbers<[1], [0], [0], [1], [0, 0, 1, 1], [], []>} : vector<8x256xbf16>, vector<256x768xbf16>, vector<8x768xf32> -> vector<8x768xf32>
    %5 = vector.extract_strided_slice %4 {offsets = [0, 0], sizes = [8, 256], strides = [1, 1]} : vector<8x768xf32> to vector<8x256xf32>
    %6 = vector.extract_strided_slice %2 {offsets = [0, 0, 0], sizes = [1, 1, 256], strides = [1, 1, 1]} : vector<3x4x256xf32> to vector<1x1x256xf32>
    %7 = vector.shape_cast %6 : vector<1x1x256xf32> to vector<1x256xf32>
    %8 = vector.extract_strided_slice %2 {offsets = [0, 1, 0], sizes = [1, 1, 256], strides = [1, 1, 1]} : vector<3x4x256xf32> to vector<1x1x256xf32>
    %9 = vector.shape_cast %8 : vector<1x1x256xf32> to vector<1x256xf32>
    %cst_6 = arith.constant dense<0.000000e+00> : vector<8xf32>
    %10 = vector.multi_reduction <add>, %5, %cst_6 [1] : vector<8x256xf32> to vector<8xf32>
    %11 = vector.shape_cast %10 : vector<8xf32> to vector<8x1xf32>
    %cst_7 = arith.constant 2.560000e+02 : f32
    %12 = vector.broadcast %cst_7 : f32 to vector<8x1xf32>
    %13 = arith.divf %11, %12 : vector<8x1xf32>
    %14 = arith.mulf %5, %5 : vector<8x256xf32>
    %cst_8 = arith.constant dense<0.000000e+00> : vector<8xf32>
    %15 = vector.multi_reduction <add>, %14, %cst_8 [1] : vector<8x256xf32> to vector<8xf32>
    %16 = vector.shape_cast %15 : vector<8xf32> to vector<8x1xf32>
    %cst_9 = arith.constant 2.560000e+02 : f32
    %17 = vector.broadcast %cst_9 : f32 to vector<8x1xf32>
    %18 = arith.divf %16, %17 : vector<8x1xf32>
    %19 = arith.mulf %13, %13 : vector<8x1xf32>
    %20 = arith.subf %18, %19 : vector<8x1xf32>
    %cst_10 = arith.constant 9.99999974E-6 : f32
    %21 = vector.broadcast %cst_10 : f32 to vector<8x1xf32>
    %22 = arith.addf %20, %21 : vector<8x1xf32>
    %23 = math.rsqrt %22 : vector<8x1xf32>
    %24 = vector.broadcast %7 : vector<1x256xf32> to vector<8x256xf32>
    %25 = vector.broadcast %23 : vector<8x1xf32> to vector<8x256xf32>
    %26 = arith.mulf %24, %25 : vector<8x256xf32>
    %27 = arith.mulf %5, %26 : vector<8x256xf32>
    %28 = vector.broadcast %13 : vector<8x1xf32> to vector<8x256xf32>
    %29 = arith.mulf %28, %26 : vector<8x256xf32>
    %30 = vector.broadcast %9 : vector<1x256xf32> to vector<8x256xf32>
    %31 = arith.subf %30, %29 : vector<8x256xf32>
    %32 = arith.addf %27, %31 : vector<8x256xf32>
    %cst_11 = arith.constant 0.000000e+00 : f32
    %33 = vector.broadcast %cst_11 : f32 to vector<8x256xf32>
    %34 = arith.maximumf %32, %33 : vector<8x256xf32>
    %35 = arith.truncf %34 : vector<8x256xf32> to vector<8x256xbf16>
    %c0_12 = arith.constant 0 : index
    %c0_13 = arith.constant 0 : index
    %c0_14 = arith.constant 0 : index
    %36 = vector.load %arg3[%c0_12, %c0_13, %c0_14] : memref<3x256x256xbf16, #tpu.memory_space<vmem>>, vector<1x256x256xbf16>
    %37 = vector.shape_cast %36 : vector<1x256x256xbf16> to vector<256x256xbf16>
    %cst_15 = arith.constant dense<0.000000e+00> : vector<8x256xf32>
    %38 = tpu.matmul %35, %37, %cst_15 {dimension_numbers = #tpu.dot_dimension_numbers<[1], [0], [0], [1], [0, 0, 1, 1], [], []>} : vector<8x256xbf16>, vector<256x256xbf16>, vector<8x256xf32> -> vector<8x256xf32>
    %39 = vector.extract_strided_slice %2 {offsets = [0, 2, 0], sizes = [1, 1, 256], strides = [1, 1, 1]} : vector<3x4x256xf32> to vector<1x1x256xf32>
    %40 = vector.shape_cast %39 : vector<1x1x256xf32> to vector<1x256xf32>
    %41 = vector.extract_strided_slice %2 {offsets = [0, 3, 0], sizes = [1, 1, 256], strides = [1, 1, 1]} : vector<3x4x256xf32> to vector<1x1x256xf32>
    %42 = vector.shape_cast %41 : vector<1x1x256xf32> to vector<1x256xf32>
    %cst_16 = arith.constant dense<0.000000e+00> : vector<8xf32>
    %43 = vector.multi_reduction <add>, %38, %cst_16 [1] : vector<8x256xf32> to vector<8xf32>
    %44 = vector.shape_cast %43 : vector<8xf32> to vector<8x1xf32>
    %cst_17 = arith.constant 2.560000e+02 : f32
    %45 = vector.broadcast %cst_17 : f32 to vector<8x1xf32>
    %46 = arith.divf %44, %45 : vector<8x1xf32>
    %47 = arith.mulf %38, %38 : vector<8x256xf32>
    %cst_18 = arith.constant dense<0.000000e+00> : vector<8xf32>
    %48 = vector.multi_reduction <add>, %47, %cst_18 [1] : vector<8x256xf32> to vector<8xf32>
    %49 = vector.shape_cast %48 : vector<8xf32> to vector<8x1xf32>
    %cst_19 = arith.constant 2.560000e+02 : f32
    %50 = vector.broadcast %cst_19 : f32 to vector<8x1xf32>
    %51 = arith.divf %49, %50 : vector<8x1xf32>
    %52 = arith.mulf %46, %46 : vector<8x1xf32>
    %53 = arith.subf %51, %52 : vector<8x1xf32>
    %cst_20 = arith.constant 9.99999974E-6 : f32
    %54 = vector.broadcast %cst_20 : f32 to vector<8x1xf32>
    %55 = arith.addf %53, %54 : vector<8x1xf32>
    %56 = math.rsqrt %55 : vector<8x1xf32>
    %57 = vector.broadcast %40 : vector<1x256xf32> to vector<8x256xf32>
    %58 = vector.broadcast %56 : vector<8x1xf32> to vector<8x256xf32>
    %59 = arith.mulf %57, %58 : vector<8x256xf32>
    %60 = arith.mulf %38, %59 : vector<8x256xf32>
    %61 = vector.broadcast %46 : vector<8x1xf32> to vector<8x256xf32>
    %62 = arith.mulf %61, %59 : vector<8x256xf32>
    %63 = vector.broadcast %42 : vector<1x256xf32> to vector<8x256xf32>
    %64 = arith.subf %63, %62 : vector<8x256xf32>
    %65 = arith.addf %60, %64 : vector<8x256xf32>
    %66 = arith.addf %65, %1 : vector<8x256xf32>
    %cst_21 = arith.constant 0.000000e+00 : f32
    %67 = vector.broadcast %cst_21 : f32 to vector<8x256xf32>
    %68 = arith.maximumf %66, %67 : vector<8x256xf32>
    %69 = arith.truncf %68 : vector<8x256xf32> to vector<8x256xbf16>
    %c0_22 = arith.constant 0 : index
    %c0_23 = arith.constant 0 : index
    %c0_24 = arith.constant 0 : index
    %70 = vector.load %arg5[%c0_22, %c0_23, %c0_24] : memref<3x256x128xbf16, #tpu.memory_space<vmem>>, vector<1x256x128xbf16>
    %71 = vector.shape_cast %70 : vector<1x256x128xbf16> to vector<256x128xbf16>
    %cst_25 = arith.constant dense<0.000000e+00> : vector<8x128xf32>
    %72 = tpu.matmul %69, %71, %cst_25 {dimension_numbers = #tpu.dot_dimension_numbers<[1], [0], [0], [1], [0, 0, 1, 1], [], []>} : vector<8x256xbf16>, vector<256x128xbf16>, vector<8x128xf32> -> vector<8x128xf32>
    %73 = vector.extract_strided_slice %4 {offsets = [0, 256], sizes = [8, 256], strides = [1, 1]} : vector<8x768xf32> to vector<8x256xf32>
    %74 = vector.extract_strided_slice %2 {offsets = [1, 0, 0], sizes = [1, 1, 256], strides = [1, 1, 1]} : vector<3x4x256xf32> to vector<1x1x256xf32>
    %75 = vector.shape_cast %74 : vector<1x1x256xf32> to vector<1x256xf32>
    %76 = vector.extract_strided_slice %2 {offsets = [1, 1, 0], sizes = [1, 1, 256], strides = [1, 1, 1]} : vector<3x4x256xf32> to vector<1x1x256xf32>
    %77 = vector.shape_cast %76 : vector<1x1x256xf32> to vector<1x256xf32>
    %cst_26 = arith.constant dense<0.000000e+00> : vector<8xf32>
    %78 = vector.multi_reduction <add>, %73, %cst_26 [1] : vector<8x256xf32> to vector<8xf32>
    %79 = vector.shape_cast %78 : vector<8xf32> to vector<8x1xf32>
    %cst_27 = arith.constant 2.560000e+02 : f32
    %80 = vector.broadcast %cst_27 : f32 to vector<8x1xf32>
    %81 = arith.divf %79, %80 : vector<8x1xf32>
    %82 = arith.mulf %73, %73 : vector<8x256xf32>
    %cst_28 = arith.constant dense<0.000000e+00> : vector<8xf32>
    %83 = vector.multi_reduction <add>, %82, %cst_28 [1] : vector<8x256xf32> to vector<8xf32>
    %84 = vector.shape_cast %83 : vector<8xf32> to vector<8x1xf32>
    %cst_29 = arith.constant 2.560000e+02 : f32
    %85 = vector.broadcast %cst_29 : f32 to vector<8x1xf32>
    %86 = arith.divf %84, %85 : vector<8x1xf32>
    %87 = arith.mulf %81, %81 : vector<8x1xf32>
    %88 = arith.subf %86, %87 : vector<8x1xf32>
    %cst_30 = arith.constant 9.99999974E-6 : f32
    %89 = vector.broadcast %cst_30 : f32 to vector<8x1xf32>
    %90 = arith.addf %88, %89 : vector<8x1xf32>
    %91 = math.rsqrt %90 : vector<8x1xf32>
    %92 = vector.broadcast %75 : vector<1x256xf32> to vector<8x256xf32>
    %93 = vector.broadcast %91 : vector<8x1xf32> to vector<8x256xf32>
    %94 = arith.mulf %92, %93 : vector<8x256xf32>
    %95 = arith.mulf %73, %94 : vector<8x256xf32>
    %96 = vector.broadcast %81 : vector<8x1xf32> to vector<8x256xf32>
    %97 = arith.mulf %96, %94 : vector<8x256xf32>
    %98 = vector.broadcast %77 : vector<1x256xf32> to vector<8x256xf32>
    %99 = arith.subf %98, %97 : vector<8x256xf32>
    %100 = arith.addf %95, %99 : vector<8x256xf32>
    %cst_31 = arith.constant 0.000000e+00 : f32
    %101 = vector.broadcast %cst_31 : f32 to vector<8x256xf32>
    %102 = arith.maximumf %100, %101 : vector<8x256xf32>
    %103 = arith.truncf %102 : vector<8x256xf32> to vector<8x256xbf16>
    %c1 = arith.constant 1 : index
    %c0_32 = arith.constant 0 : index
    %c0_33 = arith.constant 0 : index
    %104 = vector.load %arg3[%c1, %c0_32, %c0_33] : memref<3x256x256xbf16, #tpu.memory_space<vmem>>, vector<1x256x256xbf16>
    %105 = vector.shape_cast %104 : vector<1x256x256xbf16> to vector<256x256xbf16>
    %cst_34 = arith.constant dense<0.000000e+00> : vector<8x256xf32>
    %106 = tpu.matmul %103, %105, %cst_34 {dimension_numbers = #tpu.dot_dimension_numbers<[1], [0], [0], [1], [0, 0, 1, 1], [], []>} : vector<8x256xbf16>, vector<256x256xbf16>, vector<8x256xf32> -> vector<8x256xf32>
    %107 = vector.extract_strided_slice %2 {offsets = [1, 2, 0], sizes = [1, 1, 256], strides = [1, 1, 1]} : vector<3x4x256xf32> to vector<1x1x256xf32>
    %108 = vector.shape_cast %107 : vector<1x1x256xf32> to vector<1x256xf32>
    %109 = vector.extract_strided_slice %2 {offsets = [1, 3, 0], sizes = [1, 1, 256], strides = [1, 1, 1]} : vector<3x4x256xf32> to vector<1x1x256xf32>
    %110 = vector.shape_cast %109 : vector<1x1x256xf32> to vector<1x256xf32>
    %cst_35 = arith.constant dense<0.000000e+00> : vector<8xf32>
    %111 = vector.multi_reduction <add>, %106, %cst_35 [1] : vector<8x256xf32> to vector<8xf32>
    %112 = vector.shape_cast %111 : vector<8xf32> to vector<8x1xf32>
    %cst_36 = arith.constant 2.560000e+02 : f32
    %113 = vector.broadcast %cst_36 : f32 to vector<8x1xf32>
    %114 = arith.divf %112, %113 : vector<8x1xf32>
    %115 = arith.mulf %106, %106 : vector<8x256xf32>
    %cst_37 = arith.constant dense<0.000000e+00> : vector<8xf32>
    %116 = vector.multi_reduction <add>, %115, %cst_37 [1] : vector<8x256xf32> to vector<8xf32>
    %117 = vector.shape_cast %116 : vector<8xf32> to vector<8x1xf32>
    %cst_38 = arith.constant 2.560000e+02 : f32
    %118 = vector.broadcast %cst_38 : f32 to vector<8x1xf32>
    %119 = arith.divf %117, %118 : vector<8x1xf32>
    %120 = arith.mulf %114, %114 : vector<8x1xf32>
    %121 = arith.subf %119, %120 : vector<8x1xf32>
    %cst_39 = arith.constant 9.99999974E-6 : f32
    %122 = vector.broadcast %cst_39 : f32 to vector<8x1xf32>
    %123 = arith.addf %121, %122 : vector<8x1xf32>
    %124 = math.rsqrt %123 : vector<8x1xf32>
    %125 = vector.broadcast %108 : vector<1x256xf32> to vector<8x256xf32>
    %126 = vector.broadcast %124 : vector<8x1xf32> to vector<8x256xf32>
    %127 = arith.mulf %125, %126 : vector<8x256xf32>
    %128 = arith.mulf %106, %127 : vector<8x256xf32>
    %129 = vector.broadcast %114 : vector<8x1xf32> to vector<8x256xf32>
    %130 = arith.mulf %129, %127 : vector<8x256xf32>
    %131 = vector.broadcast %110 : vector<1x256xf32> to vector<8x256xf32>
    %132 = arith.subf %131, %130 : vector<8x256xf32>
    %133 = arith.addf %128, %132 : vector<8x256xf32>
    %134 = arith.addf %133, %1 : vector<8x256xf32>
    %cst_40 = arith.constant 0.000000e+00 : f32
    %135 = vector.broadcast %cst_40 : f32 to vector<8x256xf32>
    %136 = arith.maximumf %134, %135 : vector<8x256xf32>
    %137 = arith.truncf %136 : vector<8x256xf32> to vector<8x256xbf16>
    %c1_41 = arith.constant 1 : index
    %c0_42 = arith.constant 0 : index
    %c0_43 = arith.constant 0 : index
    %138 = vector.load %arg5[%c1_41, %c0_42, %c0_43] : memref<3x256x128xbf16, #tpu.memory_space<vmem>>, vector<1x256x128xbf16>
    %139 = vector.shape_cast %138 : vector<1x256x128xbf16> to vector<256x128xbf16>
    %cst_44 = arith.constant dense<0.000000e+00> : vector<8x128xf32>
    %140 = tpu.matmul %137, %139, %cst_44 {dimension_numbers = #tpu.dot_dimension_numbers<[1], [0], [0], [1], [0, 0, 1, 1], [], []>} : vector<8x256xbf16>, vector<256x128xbf16>, vector<8x128xf32> -> vector<8x128xf32>
    %141 = arith.addf %72, %140 : vector<8x128xf32>
    %142 = vector.extract_strided_slice %4 {offsets = [0, 512], sizes = [8, 256], strides = [1, 1]} : vector<8x768xf32> to vector<8x256xf32>
    %143 = vector.extract_strided_slice %2 {offsets = [2, 0, 0], sizes = [1, 1, 256], strides = [1, 1, 1]} : vector<3x4x256xf32> to vector<1x1x256xf32>
    %144 = vector.shape_cast %143 : vector<1x1x256xf32> to vector<1x256xf32>
    %145 = vector.extract_strided_slice %2 {offsets = [2, 1, 0], sizes = [1, 1, 256], strides = [1, 1, 1]} : vector<3x4x256xf32> to vector<1x1x256xf32>
    %146 = vector.shape_cast %145 : vector<1x1x256xf32> to vector<1x256xf32>
    %cst_45 = arith.constant dense<0.000000e+00> : vector<8xf32>
    %147 = vector.multi_reduction <add>, %142, %cst_45 [1] : vector<8x256xf32> to vector<8xf32>
    %148 = vector.shape_cast %147 : vector<8xf32> to vector<8x1xf32>
    %cst_46 = arith.constant 2.560000e+02 : f32
    %149 = vector.broadcast %cst_46 : f32 to vector<8x1xf32>
    %150 = arith.divf %148, %149 : vector<8x1xf32>
    %151 = arith.mulf %142, %142 : vector<8x256xf32>
    %cst_47 = arith.constant dense<0.000000e+00> : vector<8xf32>
    %152 = vector.multi_reduction <add>, %151, %cst_47 [1] : vector<8x256xf32> to vector<8xf32>
    %153 = vector.shape_cast %152 : vector<8xf32> to vector<8x1xf32>
    %cst_48 = arith.constant 2.560000e+02 : f32
    %154 = vector.broadcast %cst_48 : f32 to vector<8x1xf32>
    %155 = arith.divf %153, %154 : vector<8x1xf32>
    %156 = arith.mulf %150, %150 : vector<8x1xf32>
    %157 = arith.subf %155, %156 : vector<8x1xf32>
    %cst_49 = arith.constant 9.99999974E-6 : f32
    %158 = vector.broadcast %cst_49 : f32 to vector<8x1xf32>
    %159 = arith.addf %157, %158 : vector<8x1xf32>
    %160 = math.rsqrt %159 : vector<8x1xf32>
    %161 = vector.broadcast %144 : vector<1x256xf32> to vector<8x256xf32>
    %162 = vector.broadcast %160 : vector<8x1xf32> to vector<8x256xf32>
    %163 = arith.mulf %161, %162 : vector<8x256xf32>
    %164 = arith.mulf %142, %163 : vector<8x256xf32>
    %165 = vector.broadcast %150 : vector<8x1xf32> to vector<8x256xf32>
    %166 = arith.mulf %165, %163 : vector<8x256xf32>
    %167 = vector.broadcast %146 : vector<1x256xf32> to vector<8x256xf32>
    %168 = arith.subf %167, %166 : vector<8x256xf32>
    %169 = arith.addf %164, %168 : vector<8x256xf32>
    %cst_50 = arith.constant 0.000000e+00 : f32
    %170 = vector.broadcast %cst_50 : f32 to vector<8x256xf32>
    %171 = arith.maximumf %169, %170 : vector<8x256xf32>
    %172 = arith.truncf %171 : vector<8x256xf32> to vector<8x256xbf16>
    %c2 = arith.constant 2 : index
    %c0_51 = arith.constant 0 : index
    %c0_52 = arith.constant 0 : index
    %173 = vector.load %arg3[%c2, %c0_51, %c0_52] : memref<3x256x256xbf16, #tpu.memory_space<vmem>>, vector<1x256x256xbf16>
    %174 = vector.shape_cast %173 : vector<1x256x256xbf16> to vector<256x256xbf16>
    %cst_53 = arith.constant dense<0.000000e+00> : vector<8x256xf32>
    %175 = tpu.matmul %172, %174, %cst_53 {dimension_numbers = #tpu.dot_dimension_numbers<[1], [0], [0], [1], [0, 0, 1, 1], [], []>} : vector<8x256xbf16>, vector<256x256xbf16>, vector<8x256xf32> -> vector<8x256xf32>
    %176 = vector.extract_strided_slice %2 {offsets = [2, 2, 0], sizes = [1, 1, 256], strides = [1, 1, 1]} : vector<3x4x256xf32> to vector<1x1x256xf32>
    %177 = vector.shape_cast %176 : vector<1x1x256xf32> to vector<1x256xf32>
    %178 = vector.extract_strided_slice %2 {offsets = [2, 3, 0], sizes = [1, 1, 256], strides = [1, 1, 1]} : vector<3x4x256xf32> to vector<1x1x256xf32>
    %179 = vector.shape_cast %178 : vector<1x1x256xf32> to vector<1x256xf32>
    %cst_54 = arith.constant dense<0.000000e+00> : vector<8xf32>
    %180 = vector.multi_reduction <add>, %175, %cst_54 [1] : vector<8x256xf32> to vector<8xf32>
    %181 = vector.shape_cast %180 : vector<8xf32> to vector<8x1xf32>
    %cst_55 = arith.constant 2.560000e+02 : f32
    %182 = vector.broadcast %cst_55 : f32 to vector<8x1xf32>
    %183 = arith.divf %181, %182 : vector<8x1xf32>
    %184 = arith.mulf %175, %175 : vector<8x256xf32>
    %cst_56 = arith.constant dense<0.000000e+00> : vector<8xf32>
    %185 = vector.multi_reduction <add>, %184, %cst_56 [1] : vector<8x256xf32> to vector<8xf32>
    %186 = vector.shape_cast %185 : vector<8xf32> to vector<8x1xf32>
    %cst_57 = arith.constant 2.560000e+02 : f32
    %187 = vector.broadcast %cst_57 : f32 to vector<8x1xf32>
    %188 = arith.divf %186, %187 : vector<8x1xf32>
    %189 = arith.mulf %183, %183 : vector<8x1xf32>
    %190 = arith.subf %188, %189 : vector<8x1xf32>
    %cst_58 = arith.constant 9.99999974E-6 : f32
    %191 = vector.broadcast %cst_58 : f32 to vector<8x1xf32>
    %192 = arith.addf %190, %191 : vector<8x1xf32>
    %193 = math.rsqrt %192 : vector<8x1xf32>
    %194 = vector.broadcast %177 : vector<1x256xf32> to vector<8x256xf32>
    %195 = vector.broadcast %193 : vector<8x1xf32> to vector<8x256xf32>
    %196 = arith.mulf %194, %195 : vector<8x256xf32>
    %197 = arith.mulf %175, %196 : vector<8x256xf32>
    %198 = vector.broadcast %183 : vector<8x1xf32> to vector<8x256xf32>
    %199 = arith.mulf %198, %196 : vector<8x256xf32>
    %200 = vector.broadcast %179 : vector<1x256xf32> to vector<8x256xf32>
    %201 = arith.subf %200, %199 : vector<8x256xf32>
    %202 = arith.addf %197, %201 : vector<8x256xf32>
    %203 = arith.addf %202, %1 : vector<8x256xf32>
    %cst_59 = arith.constant 0.000000e+00 : f32
    %204 = vector.broadcast %cst_59 : f32 to vector<8x256xf32>
    %205 = arith.maximumf %203, %204 : vector<8x256xf32>
    %206 = arith.truncf %205 : vector<8x256xf32> to vector<8x256xbf16>
    %c2_60 = arith.constant 2 : index
    %c0_61 = arith.constant 0 : index
    %c0_62 = arith.constant 0 : index
    %207 = vector.load %arg5[%c2_60, %c0_61, %c0_62] : memref<3x256x128xbf16, #tpu.memory_space<vmem>>, vector<1x256x128xbf16>
    %208 = vector.shape_cast %207 : vector<1x256x128xbf16> to vector<256x128xbf16>
    %cst_63 = arith.constant dense<0.000000e+00> : vector<8x128xf32>
    %209 = tpu.matmul %206, %208, %cst_63 {dimension_numbers = #tpu.dot_dimension_numbers<[1], [0], [0], [1], [0, 0, 1, 1], [], []>} : vector<8x256xbf16>, vector<256x128xbf16>, vector<8x128xf32> -> vector<8x128xf32>
    %210 = arith.addf %141, %209 : vector<8x128xf32>
    %c0_64 = arith.constant 0 : index
    %c0_65 = arith.constant 0 : index
    %211 = vector.load %arg6[%c0_64, %c0_65] : memref<1x128xf32, #tpu.memory_space<vmem>>, vector<1x128xf32>
    %212 = vector.broadcast %211 : vector<1x128xf32> to vector<8x128xf32>
    %213 = arith.addf %210, %212 : vector<8x128xf32>
    %c0_66 = arith.constant 0 : index
    %c0_67 = arith.constant 0 : index
    %214 = vector.load %arg7[%c0_66, %c0_67] : memref<8x128xf32, #tpu.memory_space<vmem>>, vector<8x128xf32>
    tpu.vector_store %arg7[%c0_66, %c0_67], %213 {strides = array<i32>} : memref<8x128xf32, #tpu.memory_space<vmem>>, vector<8x128xf32>,
    return
  }
  func.func @transform_0(%arg0: i32) -> (i32, i32) {
    %c0_i32 = arith.constant 0 : i32
    %c0_i32_0 = arith.constant 0 : i32
    return %arg0, %c0_i32 : i32, i32
  }
  func.func @transform_1(%arg0: i32) -> (i32, i32) {
    %c0_i32 = arith.constant 0 : i32
    %c0_i32_0 = arith.constant 0 : i32
    %c0_i32_1 = arith.constant 0 : i32
    return %c0_i32, %c0_i32_0 : i32, i32
  }
  func.func @transform_2(%arg0: i32) -> (i32, i32, i32) {
    %c0_i32 = arith.constant 0 : i32
    %c0_i32_0 = arith.constant 0 : i32
    %c0_i32_1 = arith.constant 0 : i32
    %c0_i32_2 = arith.constant 0 : i32
    return %c0_i32, %c0_i32_0, %c0_i32_1 : i32, i32, i32
  }
  func.func @transform_3(%arg0: i32) -> (i32, i32, i32) {
    %c0_i32 = arith.constant 0 : i32
    %c0_i32_0 = arith.constant 0 : i32
    %c0_i32_1 = arith.constant 0 : i32
    %c0_i32_2 = arith.constant 0 : i32
    return %c0_i32, %c0_i32_0, %c0_i32_1 : i32, i32, i32
  }
  func.func @transform_4(%arg0: i32) -> (i32, i32, i32) {
    %c0_i32 = arith.constant 0 : i32
    %c0_i32_0 = arith.constant 0 : i32
    %c0_i32_1 = arith.constant 0 : i32
    %c0_i32_2 = arith.constant 0 : i32
    return %c0_i32, %c0_i32_0, %c0_i32_1 : i32, i32, i32
  }
  func.func @transform_5(%arg0: i32) -> (i32, i32) {
    %c0_i32 = arith.constant 0 : i32
    %c0_i32_0 = arith.constant 0 : i32
    %c0_i32_1 = arith.constant 0 : i32
    return %c0_i32, %c0_i32_0 : i32, i32
  }
  func.func @transform_6(%arg0: i32) -> (i32, i32) {
    %c0_i32 = arith.constant 0 : i32
    %c0_i32_0 = arith.constant 0 : i32
    return %arg0, %c0_i32 : i32, i32
  }
}

</mosaic_0001>

<llo_original>
// kernel: tpu_custom_call.1
$region0: #{tpu_custom_call.1}
  #allocation0 [shape = 'u32[]', space=smem, size = 0x4, offset = 0x4, fixed_abs, tag = 'smem constant byte address 0x4 - core index']
  #allocation1 [shape = 'u32[144,128]{1,0:T(1,128)}', space=vmem, size = 0x12000, scoped, tag = 'internal scratch']
  %s0 = inlined_call_operand.hbm [shape: bf16[8,256], index: 0, kind: input, shape index: {}]
  %s1 = inlined_call_operand.hbm [shape: bf16[256,768], index: 1, kind: input, shape index: {}]
  %s2 = inlined_call_operand.hbm [shape: bf16[3,256,256], index: 2, kind: input, shape index: {}]
  %s3 = inlined_call_operand.hbm [shape: f32[3,4,256], index: 3, kind: input, shape index: {}]
  %s4 = inlined_call_operand.hbm [shape: bf16[3,256,128], index: 4, kind: input, shape index: {}]
  %s5 = inlined_call_operand.hbm [shape: f32[1,128], index: 5, kind: input, shape index: {}]
  %s6 = inlined_call_operand.hbm [shape: f32[8,128], index: 6, kind: output, shape index: {}]
  %s7 = sld [smem:[#allocation0]]
  $region58: #{tpu_custom_call.1} parent=0
    _
  %s9 = ssub.s32 1, %s7
  %s10 = scalar_select 0, %s9, %s7
  $region1: #{tpu_custom_call.1} parent=0
    #allocation2 [shape = 'u8[4096]{0}', space=vmem, size = 0x1000, scoped, tag = 'input window, operand 0, single buffered']
    #allocation3 [shape = 's32[1]{0}', space=sflag, size = 0x4, scoped, tag = 'scoped memory for tpu_custom_call.1']
    #allocation4 [shape = 's32[1]{0}', space=sflag, size = 0x4, scoped, tag = 'scoped memory for tpu_custom_call.1']
    #allocation5 [shape = 'u8[393216]{0}', space=vmem, size = 0x60000, scoped, tag = 'input window, operand 1, single buffered']
    #allocation6 [shape = 's32[1]{0}', space=sflag, size = 0x4, scoped, tag = 'scoped memory for tpu_custom_call.1']
    #allocation7 [shape = 'u8[393216]{0}', space=vmem, size = 0x60000, scoped, tag = 'input window, operand 2, single buffered']
    #allocation8 [shape = 'u8[12288]{0}', space=vmem, size = 0x3000, scoped, tag = 'input window, operand 3, single buffered']
    #allocation9 [shape = 's32[1]{0}', space=sflag, size = 0x4, scoped, tag = 'scoped memory for tpu_custom_call.1']
    #allocation10 [shape = 'u8[196608]{0}', space=vmem, size = 0x30000, scoped, tag = 'input window, operand 4, single buffered']
    #allocation11 [shape = 'u8[512]{0}', space=vmem, size = 0x400, scoped, tag = 'input window, operand 5, single buffered']
    #allocation12 [shape = 's32[1]{0}', space=sflag, size = 0x4, scoped, tag = 'scoped memory for tpu_custom_call.1']
    #allocation13 [shape = 'u8[4096]{0}', space=vmem, size = 0x1000, scoped, tag = 'output window, operand 0, single buffered']
    %11 = vsyncpa [#allocation3], 0
    %12 = vsyncpa [#allocation6], 0
    %13 = vsyncpa [#allocation9], 0
    %14 = vsyncpa [#allocation12], 0
    %15 = vsyncpa [#allocation4], 0
    // Predicated region
    $region2: #{tpu_custom_call.1} parent=1 // pred_check
      _
    $region3: #{tpu_custom_call.1} parent=1 // pred_check_branch
      %17 = sbr.rel (0) target = $region5
    $region4: #{tpu_custom_call.1} parent=1 // pred_region
      %s19 = ssub.s32 128, 128
      %20 = vsyncadd [#allocation3], %s19
      %s22 = sshll.u32 [#allocation2], 4
      %s23 = int_to_ptr.vmem [resolvable:$true] %s22
      %25 = dma.hbm_to_vmem [thread:$0]  %s0, 128, %s23, [#allocation3]
    $region5: #{tpu_custom_call.1} parent=1 // pred_fallthru
      _
    // Predicated region
    $region6: #{tpu_custom_call.1} parent=1 // pred_check
      _
    $region7: #{tpu_custom_call.1} parent=1 // pred_check_branch
      %27 = sbr.rel (0) target = $region9
    $region8: #{tpu_custom_call.1} parent=1 // pred_region
      %s29 = ssub.s32 12288, 12288
      %30 = vsyncadd [#allocation6], %s29
      %s31 = sshll.u32 [#allocation5], 4
      %s32 = int_to_ptr.vmem [resolvable:$true] %s31
      %37 = dma.hbm_to_vmem [thread:$0]  %s1, 12288, %s32, [#allocation6], 384, 384, 24
    $region9: #{tpu_custom_call.1} parent=1 // pred_fallthru
      _
    // Predicated region
    $region10: #{tpu_custom_call.1} parent=1 // pred_check
      _
    $region11: #{tpu_custom_call.1} parent=1 // pred_check_branch
      %39 = sbr.rel (0) target = $region13
    $region12: #{tpu_custom_call.1} parent=1 // pred_region
      %s41 = ssub.s32 12288, 12288
      %42 = vsyncadd [#allocation6], %s41
      %s43 = sshll.u32 [#allocation7], 4
      %s44 = int_to_ptr.vmem [resolvable:$true] %s43
      %49 = dma.hbm_to_vmem [thread:$0]  %s2, 12288, %s44, [#allocation6], 128, 128, 8
    $region13: #{tpu_custom_call.1} parent=1 // pred_fallthru
      _
    // Predicated region
    $region14: #{tpu_custom_call.1} parent=1 // pred_check
      _
    $region15: #{tpu_custom_call.1} parent=1 // pred_check_branch
      %51 = sbr.rel (0) target = $region17
    $region16: #{tpu_custom_call.1} parent=1 // pred_region
      %s53 = ssub.s32 384, 384
      %54 = vsyncadd [#allocation9], %s53
      %s55 = sshll.u32 [#allocation8], 4
      %s56 = int_to_ptr.vmem [resolvable:$true] %s55
      %61 = dma.hbm_to_vmem [thread:$0]  %s3, 384, %s56, [#allocation9], 128, 128, 8
    $region17: #{tpu_custom_call.1} parent=1 // pred_fallthru
      _
    // Predicated region
    $region18: #{tpu_custom_call.1} parent=1 // pred_check
      _
    $region19: #{tpu_custom_call.1} parent=1 // pred_check_branch
      %63 = sbr.rel (0) target = $region21
    $region20: #{tpu_custom_call.1} parent=1 // pred_region
      %s65 = ssub.s32 6144, 6144
      %66 = vsyncadd [#allocation9], %s65
      %s67 = sshll.u32 [#allocation10], 4
      %s68 = int_to_ptr.vmem [resolvable:$true] %s67
      %73 = dma.hbm_to_vmem [thread:$0]  %s4, 6144, %s68, [#allocation9], 64, 64, 4
    $region21: #{tpu_custom_call.1} parent=1 // pred_fallthru
      _
    // Predicated region
    $region22: #{tpu_custom_call.1} parent=1 // pred_check
      _
    $region23: #{tpu_custom_call.1} parent=1 // pred_check_branch
      %75 = sbr.rel (0) target = $region25
    $region24: #{tpu_custom_call.1} parent=1 // pred_region
      %s77 = ssub.s32 16, 16
      %78 = vsyncadd [#allocation12], %s77
      %s80 = sshll.u32 [#allocation11], 4
      %s81 = int_to_ptr.vmem [resolvable:$true] %s80
      %83 = dma.hbm_to_vmem [thread:$0]  %s5, 16, %s81, [#allocation12]
    $region25: #{tpu_custom_call.1} parent=1 // pred_fallthru
      _
    // Predicated region
    $region26: #{tpu_custom_call.1} parent=1 // pred_check
      _
    $region27: #{tpu_custom_call.1} parent=1 // pred_check_branch
      %85 = sbr.rel (0) target = $region29
    $region28: #{tpu_custom_call.1} parent=1 // pred_region
      %86 = dma.done [#allocation3], 128
    $region29: #{tpu_custom_call.1} parent=1 // pred_fallthru
      _
    // Predicated region
    $region30: #{tpu_custom_call.1} parent=1 // pred_check
      _
    $region31: #{tpu_custom_call.1} parent=1 // pred_check_branch
      %88 = sbr.rel (0) target = $region33
    $region32: #{tpu_custom_call.1} parent=1 // pred_region
      %89 = dma.done [#allocation6], 12288
    $region33: #{tpu_custom_call.1} parent=1 // pred_fallthru
      _
    // Predicated region
    $region34: #{tpu_custom_call.1} parent=1 // pred_check
      _
    $region35: #{tpu_custom_call.1} parent=1 // pred_check_branch
      %91 = sbr.rel (0) target = $region37
    $region36: #{tpu_custom_call.1} parent=1 // pred_region
      %92 = dma.done [#allocation6], 12288
    $region37: #{tpu_custom_call.1} parent=1 // pred_fallthru
      _
    // Predicated region
    $region38: #{tpu_custom_call.1} parent=1 // pred_check
      _
    $region39: #{tpu_custom_call.1} parent=1 // pred_check_branch
      %94 = sbr.rel (0) target = $region41
    $region40: #{tpu_custom_call.1} parent=1 // pred_region
      %95 = dma.done [#allocation9], 384
    $region41: #{tpu_custom_call.1} parent=1 // pred_fallthru
      _
    // Predicated region
    $region42: #{tpu_custom_call.1} parent=1 // pred_check
      _
    $region43: #{tpu_custom_call.1} parent=1 // pred_check_branch
      %97 = sbr.rel (0) target = $region45
    $region44: #{tpu_custom_call.1} parent=1 // pred_region
      %98 = dma.done [#allocation9], 6144
    $region45: #{tpu_custom_call.1} parent=1 // pred_fallthru
      _
    // Predicated region
    $region46: #{tpu_custom_call.1} parent=1 // pred_check
      _
    $region47: #{tpu_custom_call.1} parent=1 // pred_check_branch
      %100 = sbr.rel (0) target = $region49
    $region48: #{tpu_custom_call.1} parent=1 // pred_region
      %101 = dma.done [#allocation12], 16
    $region49: #{tpu_custom_call.1} parent=1 // pred_fallthru
      _
    %v103 = vld [vmem:[#allocation2] sm:$0xff]
    %v104 = vunpack.c.l.bf16 %v103
    %v105 = vunpack.c.h.bf16 %v103
    %v106 = vld [vmem:[#allocation8] sm:$0xff]
    %v107 = vld [vmem:[#allocation8 + $0x8] sm:$0xff]
    %v108 = vld [vmem:[#allocation8 + $0x10] sm:$0xff]
    %v109 = vld [vmem:[#allocation5] sm:$0xff]
    %v110 = vld [vmem:[#allocation5 + $0x8] sm:$0xff]
    %v111 = vld [vmem:[#allocation5 + $0x10] sm:$0xff]
    %v112 = vld [vmem:[#allocation5 + $0x18] sm:$0xff]
    %v113 = vld [vmem:[#allocation5 + $0x20] sm:$0xff]
    %v114 = vld [vmem:[#allocation5 + $0x28] sm:$0xff]
    %v115 = vld [vmem:[#allocation5 + $0x30] sm:$0xff]
    %v116 = vld [vmem:[#allocation5 + $0x38] sm:$0xff]
    %v117 = vld [vmem:[#allocation5 + $0x40] sm:$0xff]
    %v118 = vld [vmem:[#allocation5 + $0x48] sm:$0xff]
    %v119 = vld [vmem:[#allocation5 + $0x50] sm:$0xff]
    %v120 = vld [vmem:[#allocation5 + $0x58] sm:$0xff]
    %v121 = vld [vmem:[#allocation5 + $0x60] sm:$0xff]
    %v122 = vld [vmem:[#allocation5 + $0x68] sm:$0xff]
    %v123 = vld [vmem:[#allocation5 + $0x70] sm:$0xff]
    %v124 = vld [vmem:[#allocation5 + $0x78] sm:$0xff]
    %v125 = vld [vmem:[#allocation5 + $0x80] sm:$0xff]
    %v126 = vld [vmem:[#allocation5 + $0x88] sm:$0xff]
    %v127 = vld [vmem:[#allocation5 + $0x90] sm:$0xff]
    %v128 = vld [vmem:[#allocation5 + $0x98] sm:$0xff]
    %v129 = vld [vmem:[#allocation5 + $0xa0] sm:$0xff]
    %v130 = vld [vmem:[#allocation5 + $0xa8] sm:$0xff]
    %v131 = vld [vmem:[#allocation5 + $0xb0] sm:$0xff]
    %v132 = vld [vmem:[#allocation5 + $0xb8] sm:$0xff]
    %v133 = vld [vmem:[#allocation5 + $0xc0] sm:$0xff]
    %v134 = vld [vmem:[#allocation5 + $0xc8] sm:$0xff]
    %v135 = vld [vmem:[#allocation5 + $0xd0] sm:$0xff]
    %v136 = vld [vmem:[#allocation5 + $0xd8] sm:$0xff]
    %v137 = vld [vmem:[#allocation5 + $0xe0] sm:$0xff]
    %v138 = vld [vmem:[#allocation5 + $0xe8] sm:$0xff]
    %v139 = vld [vmem:[#allocation5 + $0xf0] sm:$0xff]
    %v140 = vld [vmem:[#allocation5 + $0xf8] sm:$0xff]
    %v141 = vld [vmem:[#allocation5 + $0x100] sm:$0xff]
    %v142 = vld [vmem:[#allocation5 + $0x108] sm:$0xff]
    %v143 = vld [vmem:[#allocation5 + $0x110] sm:$0xff]
    %v144 = vld [vmem:[#allocation5 + $0x118] sm:$0xff]
    %v145 = vld [vmem:[#allocation5 + $0x120] sm:$0xff]
    %v146 = vld [vmem:[#allocation5 + $0x128] sm:$0xff]
    %v147 = vld [vmem:[#allocation5 + $0x130] sm:$0xff]
    %v148 = vld [vmem:[#allocation5 + $0x138] sm:$0xff]
    %v149 = vld [vmem:[#allocation5 + $0x140] sm:$0xff]
    %v150 = vld [vmem:[#allocation5 + $0x148] sm:$0xff]
    %v151 = vld [vmem:[#allocation5 + $0x150] sm:$0xff]
    %v152 = vld [vmem:[#allocation5 + $0x158] sm:$0xff]
    %v153 = vld [vmem:[#allocation5 + $0x160] sm:$0xff]
    %v154 = vld [vmem:[#allocation5 + $0x168] sm:$0xff]
    %v155 = vld [vmem:[#allocation5 + $0x170] sm:$0xff]
    %v156 = vld [vmem:[#allocation5 + $0x178] sm:$0xff]
    %v157 = vld [vmem:[#allocation5 + $0x180] sm:$0xff]
    %v158 = vld [vmem:[#allocation5 + $0x188] sm:$0xff]
    %v159 = vld [vmem:[#allocation5 + $0x190] sm:$0xff]
    %v160 = vld [vmem:[#allocation5 + $0x198] sm:$0xff]
    %v161 = vld [vmem:[#allocation5 + $0x1a0] sm:$0xff]
    %v162 = vld [vmem:[#allocation5 + $0x1a8] sm:$0xff]
    %v163 = vld [vmem:[#allocation5 + $0x1b0] sm:$0xff]
    %v164 = vld [vmem:[#allocation5 + $0x1b8] sm:$0xff]
    %v165 = vld [vmem:[#allocation5 + $0x1c0] sm:$0xff]
    %v166 = vld [vmem:[#allocation5 + $0x1c8] sm:$0xff]
    %v167 = vld [vmem:[#allocation5 + $0x1d0] sm:$0xff]
    %v168 = vld [vmem:[#allocation5 + $0x1d8] sm:$0xff]
    %v169 = vld [vmem:[#allocation5 + $0x1e0] sm:$0xff]
    %v170 = vld [vmem:[#allocation5 + $0x1e8] sm:$0xff]
    %v171 = vld [vmem:[#allocation5 + $0x1f0] sm:$0xff]
    %v172 = vld [vmem:[#allocation5 + $0x1f8] sm:$0xff]
    %v173 = vld [vmem:[#allocation5 + $0x200] sm:$0xff]
    %v174 = vld [vmem:[#allocation5 + $0x208] sm:$0xff]
    %v175 = vld [vmem:[#allocation5 + $0x210] sm:$0xff]
    %v176 = vld [vmem:[#allocation5 + $0x218] sm:$0xff]
    %v177 = vld [vmem:[#allocation5 + $0x220] sm:$0xff]
    %v178 = vld [vmem:[#allocation5 + $0x228] sm:$0xff]
    %v179 = vld [vmem:[#allocation5 + $0x230] sm:$0xff]
    %v180 = vld [vmem:[#allocation5 + $0x238] sm:$0xff]
    %v181 = vld [vmem:[#allocation5 + $0x240] sm:$0xff]
    %v182 = vld [vmem:[#allocation5 + $0x248] sm:$0xff]
    %v183 = vld [vmem:[#allocation5 + $0x250] sm:$0xff]
    %v184 = vld [vmem:[#allocation5 + $0x258] sm:$0xff]
    %v185 = vld [vmem:[#allocation5 + $0x260] sm:$0xff]
    %v186 = vld [vmem:[#allocation5 + $0x268] sm:$0xff]
    %v187 = vld [vmem:[#allocation5 + $0x270] sm:$0xff]
    %v188 = vld [vmem:[#allocation5 + $0x278] sm:$0xff]
    %v189 = vld [vmem:[#allocation5 + $0x280] sm:$0xff]
    %v190 = vld [vmem:[#allocation5 + $0x288] sm:$0xff]
    %v191 = vld [vmem:[#allocation5 + $0x290] sm:$0xff]
    %v192 = vld [vmem:[#allocation5 + $0x298] sm:$0xff]
    %v193 = vld [vmem:[#allocation5 + $0x2a0] sm:$0xff]
    %v194 = vld [vmem:[#allocation5 + $0x2a8] sm:$0xff]
    %v195 = vld [vmem:[#allocation5 + $0x2b0] sm:$0xff]
    %v196 = vld [vmem:[#allocation5 + $0x2b8] sm:$0xff]
    %v197 = vld [vmem:[#allocation5 + $0x2c0] sm:$0xff]
    %v198 = vld [vmem:[#allocation5 + $0x2c8] sm:$0xff]
    %v199 = vld [vmem:[#allocation5 + $0x2d0] sm:$0xff]
    %v200 = vld [vmem:[#allocation5 + $0x2d8] sm:$0xff]
    %v201 = vld [vmem:[#allocation5 + $0x2e0] sm:$0xff]
    %v202 = vld [vmem:[#allocation5 + $0x2e8] sm:$0xff]
    %v203 = vld [vmem:[#allocation5 + $0x2f0] sm:$0xff]
    %v204 = vld [vmem:[#allocation5 + $0x2f8] sm:$0xff]
    %v206 = vunpack.c.l.b16 %v103
    %v207 = vunpack.c.h.b16 %v103
    %v208 = vpack.c.b16 %v206, %v206
    %v209 = vpack.c.b16 %v207, %v207
    %v308 = vunpack.c.l.b16 %v109
    %v309 = vunpack.c.h.b16 %v109
    %v310 = vunpack.c.l.b16 %v110
    %v311 = vunpack.c.h.b16 %v110
    %v312 = vunpack.c.l.b16 %v111
    %v313 = vunpack.c.h.b16 %v111
    %v314 = vunpack.c.l.b16 %v112
    %v315 = vunpack.c.h.b16 %v112
    %v316 = vunpack.c.l.b16 %v113
    %v317 = vunpack.c.h.b16 %v113
    %v318 = vunpack.c.l.b16 %v114
    %v319 = vunpack.c.h.b16 %v114
    %v320 = vunpack.c.l.b16 %v115
    %v321 = vunpack.c.h.b16 %v115
    %v322 = vunpack.c.l.b16 %v116
    %v323 = vunpack.c.h.b16 %v116
    %v324 = vunpack.c.l.b16 %v117
    %v325 = vunpack.c.h.b16 %v117
    %v326 = vunpack.c.l.b16 %v118
    %v327 = vunpack.c.h.b16 %v118
    %v328 = vunpack.c.l.b16 %v119
    %v329 = vunpack.c.h.b16 %v119
    %v330 = vunpack.c.l.b16 %v120
    %v331 = vunpack.c.h.b16 %v120
    %v332 = vunpack.c.l.b16 %v121
    %v333 = vunpack.c.h.b16 %v121
    %v334 = vunpack.c.l.b16 %v122
    %v335 = vunpack.c.h.b16 %v122
    %v336 = vunpack.c.l.b16 %v123
    %v337 = vunpack.c.h.b16 %v123
    %v338 = vunpack.c.l.b16 %v124
    %v339 = vunpack.c.h.b16 %v124
    %v340 = vunpack.c.l.b16 %v125
    %v341 = vunpack.c.h.b16 %v125
    %v342 = vunpack.c.l.b16 %v126
    %v343 = vunpack.c.h.b16 %v126
    %v344 = vunpack.c.l.b16 %v127
    %v345 = vunpack.c.h.b16 %v127
    %v346 = vunpack.c.l.b16 %v128
    %v347 = vunpack.c.h.b16 %v128
    %v348 = vunpack.c.l.b16 %v129
    %v349 = vunpack.c.h.b16 %v129
    %v350 = vunpack.c.l.b16 %v130
    %v351 = vunpack.c.h.b16 %v130
    %v352 = vunpack.c.l.b16 %v131
    %v353 = vunpack.c.h.b16 %v131
    %v354 = vunpack.c.l.b16 %v132
    %v355 = vunpack.c.h.b16 %v132
    %v356 = vunpack.c.l.b16 %v133
    %v357 = vunpack.c.h.b16 %v133
    %v358 = vunpack.c.l.b16 %v134
    %v359 = vunpack.c.h.b16 %v134
    %v360 = vunpack.c.l.b16 %v135
    %v361 = vunpack.c.h.b16 %v135
    %v362 = vunpack.c.l.b16 %v136
    %v363 = vunpack.c.h.b16 %v136
    %v364 = vunpack.c.l.b16 %v137
    %v365 = vunpack.c.h.b16 %v137
    %v366 = vunpack.c.l.b16 %v138
    %v367 = vunpack.c.h.b16 %v138
    %v368 = vunpack.c.l.b16 %v139
    %v369 = vunpack.c.h.b16 %v139
    %v370 = vunpack.c.l.b16 %v140
    %v371 = vunpack.c.h.b16 %v140
    %v372 = vunpack.c.l.b16 %v141
    %v373 = vunpack.c.h.b16 %v141
    %v374 = vunpack.c.l.b16 %v142
    %v375 = vunpack.c.h.b16 %v142
    %v376 = vunpack.c.l.b16 %v143
    %v377 = vunpack.c.h.b16 %v143
    %v378 = vunpack.c.l.b16 %v144
    %v379 = vunpack.c.h.b16 %v144
    %v380 = vunpack.c.l.b16 %v145
    %v381 = vunpack.c.h.b16 %v145
    %v382 = vunpack.c.l.b16 %v146
    %v383 = vunpack.c.h.b16 %v146
    %v384 = vunpack.c.l.b16 %v147
    %v385 = vunpack.c.h.b16 %v147
    %v386 = vunpack.c.l.b16 %v148
    %v387 = vunpack.c.h.b16 %v148
    %v388 = vunpack.c.l.b16 %v149
    %v389 = vunpack.c.h.b16 %v149
    %v390 = vunpack.c.l.b16 %v150
    %v391 = vunpack.c.h.b16 %v150
    %v392 = vunpack.c.l.b16 %v151
    %v393 = vunpack.c.h.b16 %v151
    %v394 = vunpack.c.l.b16 %v152
    %v395 = vunpack.c.h.b16 %v152
    %v396 = vunpack.c.l.b16 %v153
    %v397 = vunpack.c.h.b16 %v153
    %v398 = vunpack.c.l.b16 %v154
    %v399 = vunpack.c.h.b16 %v154
    %v400 = vunpack.c.l.b16 %v155
    %v401 = vunpack.c.h.b16 %v155
    %v402 = vunpack.c.l.b16 %v156
    %v403 = vunpack.c.h.b16 %v156
    %v404 = vunpack.c.l.b16 %v157
    %v405 = vunpack.c.h.b16 %v157
    %v406 = vunpack.c.l.b16 %v158
    %v407 = vunpack.c.h.b16 %v158
    %v408 = vunpack.c.l.b16 %v159
    %v409 = vunpack.c.h.b16 %v159
    %v410 = vunpack.c.l.b16 %v160
    %v411 = vunpack.c.h.b16 %v160
    %v412 = vunpack.c.l.b16 %v161
    %v413 = vunpack.c.h.b16 %v161
    %v414 = vunpack.c.l.b16 %v162
    %v415 = vunpack.c.h.b16 %v162
    %v416 = vunpack.c.l.b16 %v163
    %v417 = vunpack.c.h.b16 %v163
    %v418 = vunpack.c.l.b16 %v164
    %v419 = vunpack.c.h.b16 %v164
    %v420 = vunpack.c.l.b16 %v165
    %v421 = vunpack.c.h.b16 %v165
    %v422 = vunpack.c.l.b16 %v166
    %v423 = vunpack.c.h.b16 %v166
    %v424 = vunpack.c.l.b16 %v167
    %v425 = vunpack.c.h.b16 %v167
    %v426 = vunpack.c.l.b16 %v168
    %v427 = vunpack.c.h.b16 %v168
    %v428 = vunpack.c.l.b16 %v169
    %v429 = vunpack.c.h.b16 %v169
    %v430 = vunpack.c.l.b16 %v170
    %v431 = vunpack.c.h.b16 %v170
    %v432 = vunpack.c.l.b16 %v171
    %v433 = vunpack.c.h.b16 %v171
    %v434 = vunpack.c.l.b16 %v172
    %v435 = vunpack.c.h.b16 %v172
    %v436 = vunpack.c.l.b16 %v173
    %v437 = vunpack.c.h.b16 %v173
    %v438 = vunpack.c.l.b16 %v174
    %v439 = vunpack.c.h.b16 %v174
    %v440 = vunpack.c.l.b16 %v175
    %v441 = vunpack.c.h.b16 %v175
    %v442 = vunpack.c.l.b16 %v176
    %v443 = vunpack.c.h.b16 %v176
    %v444 = vunpack.c.l.b16 %v177
    %v445 = vunpack.c.h.b16 %v177
    %v446 = vunpack.c.l.b16 %v178
    %v447 = vunpack.c.h.b16 %v178
    %v448 = vunpack.c.l.b16 %v179
    %v449 = vunpack.c.h.b16 %v179
    %v450 = vunpack.c.l.b16 %v180
    %v451 = vunpack.c.h.b16 %v180
    %v452 = vunpack.c.l.b16 %v181
    %v453 = vunpack.c.h.b16 %v181
    %v454 = vunpack.c.l.b16 %v182
    %v455 = vunpack.c.h.b16 %v182
    %v456 = vunpack.c.l.b16 %v183
    %v457 = vunpack.c.h.b16 %v183
    %v458 = vunpack.c.l.b16 %v184
    %v459 = vunpack.c.h.b16 %v184
    %v460 = vunpack.c.l.b16 %v185
    %v461 = vunpack.c.h.b16 %v185
    %v462 = vunpack.c.l.b16 %v186
    %v463 = vunpack.c.h.b16 %v186
    %v464 = vunpack.c.l.b16 %v187
    %v465 = vunpack.c.h.b16 %v187
    %v466 = vunpack.c.l.b16 %v188
    %v467 = vunpack.c.h.b16 %v188
    %v468 = vunpack.c.l.b16 %v189
    %v469 = vunpack.c.h.b16 %v189
    %v470 = vunpack.c.l.b16 %v190
    %v471 = vunpack.c.h.b16 %v190
    %v472 = vunpack.c.l.b16 %v191
    %v473 = vunpack.c.h.b16 %v191
    %v474 = vunpack.c.l.b16 %v192
    %v475 = vunpack.c.h.b16 %v192
    %v476 = vunpack.c.l.b16 %v193
    %v477 = vunpack.c.h.b16 %v193
    %v478 = vunpack.c.l.b16 %v194
    %v479 = vunpack.c.h.b16 %v194
    %v480 = vunpack.c.l.b16 %v195
    %v481 = vunpack.c.h.b16 %v195
    %v482 = vunpack.c.l.b16 %v196
    %v483 = vunpack.c.h.b16 %v196
    %v484 = vunpack.c.l.b16 %v197
    %v485 = vunpack.c.h.b16 %v197
    %v486 = vunpack.c.l.b16 %v198
    %v487 = vunpack.c.h.b16 %v198
    %v488 = vunpack.c.l.b16 %v199
    %v489 = vunpack.c.h.b16 %v199
    %v490 = vunpack.c.l.b16 %v200
    %v491 = vunpack.c.h.b16 %v200
    %v492 = vunpack.c.l.b16 %v201
    %v493 = vunpack.c.h.b16 %v201
    %v494 = vunpack.c.l.b16 %v202
    %v495 = vunpack.c.h.b16 %v202
    %v496 = vunpack.c.l.b16 %v203
    %v497 = vunpack.c.h.b16 %v203
    %v498 = vunpack.c.l.b16 %v204
    %v499 = vunpack.c.h.b16 %v204
    %v500 = vpack.c.b16 %v314, %v308
    %v501 = vpack.c.b16 %v315, %v309
    %v502 = vpack.c.b16 %v316, %v310
    %v503 = vpack.c.b16 %v317, %v311
    %v504 = vpack.c.b16 %v318, %v312
    %v505 = vpack.c.b16 %v319, %v313
    %v506 = vpack.c.b16 %v326, %v320
    %v507 = vpack.c.b16 %v327, %v321
    %v508 = vpack.c.b16 %v328, %v322
    %v509 = vpack.c.b16 %v329, %v323
    %v510 = vpack.c.b16 %v330, %v324
    %v511 = vpack.c.b16 %v331, %v325
    %v512 = vpack.c.b16 %v338, %v332
    %v513 = vpack.c.b16 %v339, %v333
    %v514 = vpack.c.b16 %v340, %v334
    %v515 = vpack.c.b16 %v341, %v335
    %v516 = vpack.c.b16 %v342, %v336
    %v517 = vpack.c.b16 %v343, %v337
    %v518 = vpack.c.b16 %v350, %v344
    %v519 = vpack.c.b16 %v351, %v345
    %v520 = vpack.c.b16 %v352, %v346
    %v521 = vpack.c.b16 %v353, %v347
    %v522 = vpack.c.b16 %v354, %v348
    %v523 = vpack.c.b16 %v355, %v349
    %v524 = vpack.c.b16 %v362, %v356
    %v525 = vpack.c.b16 %v363, %v357
    %v526 = vpack.c.b16 %v364, %v358
    %v527 = vpack.c.b16 %v365, %v359
    %v528 = vpack.c.b16 %v366, %v360
    %v529 = vpack.c.b16 %v367, %v361
    %v530 = vpack.c.b16 %v374, %v368
    %v531 = vpack.c.b16 %v375, %v369
    %v532 = vpack.c.b16 %v376, %v370
    %v533 = vpack.c.b16 %v377, %v371
    %v534 = vpack.c.b16 %v378, %v372
    %v535 = vpack.c.b16 %v379, %v373
    %v536 = vpack.c.b16 %v386, %v380
    %v537 = vpack.c.b16 %v387, %v381
    %v538 = vpack.c.b16 %v388, %v382
    %v539 = vpack.c.b16 %v389, %v383
    %v540 = vpack.c.b16 %v390, %v384
    %v541 = vpack.c.b16 %v391, %v385
    %v542 = vpack.c.b16 %v398, %v392
    %v543 = vpack.c.b16 %v399, %v393
    %v544 = vpack.c.b16 %v400, %v394
    %v545 = vpack.c.b16 %v401, %v395
    %v546 = vpack.c.b16 %v402, %v396
    %v547 = vpack.c.b16 %v403, %v397
    %v548 = vpack.c.b16 %v410, %v404
    %v549 = vpack.c.b16 %v411, %v405
    %v550 = vpack.c.b16 %v412, %v406
    %v551 = vpack.c.b16 %v413, %v407
    %v552 = vpack.c.b16 %v414, %v408
    %v553 = vpack.c.b16 %v415, %v409
    %v554 = vpack.c.b16 %v422, %v416
    %v555 = vpack.c.b16 %v423, %v417
    %v556 = vpack.c.b16 %v424, %v418
    %v557 = vpack.c.b16 %v425, %v419
    %v558 = vpack.c.b16 %v426, %v420
    %v559 = vpack.c.b16 %v427, %v421
    %v560 = vpack.c.b16 %v434, %v428
    %v561 = vpack.c.b16 %v435, %v429
    %v562 = vpack.c.b16 %v436, %v430
    %v563 = vpack.c.b16 %v437, %v431
    %v564 = vpack.c.b16 %v438, %v432
    %v565 = vpack.c.b16 %v439, %v433
    %v566 = vpack.c.b16 %v446, %v440
    %v567 = vpack.c.b16 %v447, %v441
    %v568 = vpack.c.b16 %v448, %v442
    %v569 = vpack.c.b16 %v449, %v443
    %v570 = vpack.c.b16 %v450, %v444
    %v571 = vpack.c.b16 %v451, %v445
    %v572 = vpack.c.b16 %v458, %v452
    %v573 = vpack.c.b16 %v459, %v453
    %v574 = vpack.c.b16 %v460, %v454
    %v575 = vpack.c.b16 %v461, %v455
    %v576 = vpack.c.b16 %v462, %v456
    %v577 = vpack.c.b16 %v463, %v457
    %v578 = vpack.c.b16 %v470, %v464
    %v579 = vpack.c.b16 %v471, %v465
    %v580 = vpack.c.b16 %v472, %v466
    %v581 = vpack.c.b16 %v473, %v467
    %v582 = vpack.c.b16 %v474, %v468
    %v583 = vpack.c.b16 %v475, %v469
    %v584 = vpack.c.b16 %v482, %v476
    %v585 = vpack.c.b16 %v483, %v477
    %v586 = vpack.c.b16 %v484, %v478
    %v587 = vpack.c.b16 %v485, %v479
    %v588 = vpack.c.b16 %v486, %v480
    %v589 = vpack.c.b16 %v487, %v481
    %v590 = vpack.c.b16 %v494, %v488
    %v591 = vpack.c.b16 %v495, %v489
    %v592 = vpack.c.b16 %v496, %v490
    %v593 = vpack.c.b16 %v497, %v491
    %v594 = vpack.c.b16 %v498, %v492
    %v595 = vpack.c.b16 %v499, %v493
    %692 = vmatprep.subr.bf16.mxu0 %v501
    %693 = vmatpush1.bf16.msra.mxu0 %v500
    %694 = vmatprep.subr.bf16.mxu0 %v507
    %695 = vmatpush1.bf16.msra.mxu0 %v506
    %696 = vmatprep.subr.bf16.mxu0 %v513
    %697 = vmatpush1.bf16.msra.mxu0 %v512
    %698 = vmatprep.subr.bf16.mxu0 %v519
    %699 = vmatpush1.bf16.msra.mxu0 %v518
    %700 = vmatprep.subr.bf16.mxu0 %v525
    %701 = vmatpush1.bf16.msra.mxu0 %v524
    %702 = vmatprep.subr.bf16.mxu0 %v531
    %703 = vmatpush1.bf16.msra.mxu0 %v530
    %704 = vmatprep.subr.bf16.mxu0 %v537
    %705 = vmatpush1.bf16.msra.mxu0 %v536
    %706 = vmatprep.subr.bf16.mxu0 %v543
    %707 = vmatpush1.bf16.msra.mxu0 %v542
    %708 = vmatprep.subr.bf16.mxu0 %v549
    %709 = vmatpush1.bf16.msra.mxu0 %v548
    %710 = vmatprep.subr.bf16.mxu0 %v555
    %711 = vmatpush1.bf16.msra.mxu0 %v554
    %712 = vmatprep.subr.bf16.mxu0 %v561
    %713 = vmatpush1.bf16.msra.mxu0 %v560
    %714 = vmatprep.subr.bf16.mxu0 %v567
    %715 = vmatpush1.bf16.msra.mxu0 %v566
    %716 = vmatprep.subr.bf16.mxu0 %v573
    %717 = vmatpush1.bf16.msra.mxu0 %v572
    %718 = vmatprep.subr.bf16.mxu0 %v579
    %719 = vmatpush1.bf16.msra.mxu0 %v578
    %720 = vmatprep.subr.bf16.mxu0 %v585
    %721 = vmatpush1.bf16.msra.mxu0 %v584
    %722 = vmatprep.subr.bf16.mxu0 %v591
    %723 = vmatpush1.bf16.msra.mxu0 %v590
    %724 = vmatprep.mubr.bf16.mxu0 %v209
    %725 = vmatmul.mubr.bf16.gmra.mrb[0].mxu0 %v208
    %v726 = vpop.f32.mrb[0].mxu0
    %v727 = vadd.f32 0.0, %v726
    %v728 = vpop.f32.mrb[0].mxu0
    %v729 = vadd.f32 0.0, %v728
    %v730 = vpop.f32.mrb[0].mxu0
    %v731 = vpop.f32.mrb[0].mxu0
    %732 = vdwg.mxu0
    %733 = vmatprep.subr.bf16.mxu0 %v503
    %734 = vmatpush1.bf16.msra.mxu0 %v502
    %735 = vmatprep.subr.bf16.mxu0 %v509
    %736 = vmatpush1.bf16.msra.mxu0 %v508
    %737 = vmatprep.subr.bf16.mxu0 %v515
    %738 = vmatpush1.bf16.msra.mxu0 %v514
    %739 = vmatprep.subr.bf16.mxu0 %v521
    %740 = vmatpush1.bf16.msra.mxu0 %v520
    %741 = vmatprep.subr.bf16.mxu0 %v527
    %742 = vmatpush1.bf16.msra.mxu0 %v526
    %743 = vmatprep.subr.bf16.mxu0 %v533
    %744 = vmatpush1.bf16.msra.mxu0 %v532
    %745 = vmatprep.subr.bf16.mxu0 %v539
    %746 = vmatpush1.bf16.msra.mxu0 %v538
    %747 = vmatprep.subr.bf16.mxu0 %v545
    %748 = vmatpush1.bf16.msra.mxu0 %v544
    %749 = vmatprep.subr.bf16.mxu0 %v551
    %750 = vmatpush1.bf16.msra.mxu0 %v550
    %751 = vmatprep.subr.bf16.mxu0 %v557
    %752 = vmatpush1.bf16.msra.mxu0 %v556
    %753 = vmatprep.subr.bf16.mxu0 %v563
    %754 = vmatpush1.bf16.msra.mxu0 %v562
    %755 = vmatprep.subr.bf16.mxu0 %v569
    %756 = vmatpush1.bf16.msra.mxu0 %v568
    %757 = vmatprep.subr.bf16.mxu0 %v575
    %758 = vmatpush1.bf16.msra.mxu0 %v574
    %759 = vmatprep.subr.bf16.mxu0 %v581
    %760 = vmatpush1.bf16.msra.mxu0 %v580
    %761 = vmatprep.subr.bf16.mxu0 %v587
    %762 = vmatpush1.bf16.msra.mxu0 %v586
    %763 = vmatprep.subr.bf16.mxu0 %v593
    %764 = vmatpush1.bf16.msra.mxu0 %v592
    %765 = vmatprep.mubr.bf16.mxu0 %v209
    %766 = vmatmul.mubr.bf16.gmra.mrb[0].mxu0 %v208
    %v767 = vpop.f32.mrb[0].mxu0
    %v768 = vadd.f32 0.0, %v767
    %v769 = vpop.f32.mrb[0].mxu0
    %v770 = vadd.f32 0.0, %v769
    %v771 = vpop.f32.mrb[0].mxu0
    %v772 = vpop.f32.mrb[0].mxu0
    %773 = vdwg.mxu0
    %774 = vmatprep.subr.bf16.mxu0 %v505
    %775 = vmatpush1.bf16.msra.mxu0 %v504
    %776 = vmatprep.subr.bf16.mxu0 %v511
    %777 = vmatpush1.bf16.msra.mxu0 %v510
    %778 = vmatprep.subr.bf16.mxu0 %v517
    %779 = vmatpush1.bf16.msra.mxu0 %v516
    %780 = vmatprep.subr.bf16.mxu0 %v523
    %781 = vmatpush1.bf16.msra.mxu0 %v522
    %782 = vmatprep.subr.bf16.mxu0 %v529
    %783 = vmatpush1.bf16.msra.mxu0 %v528
    %784 = vmatprep.subr.bf16.mxu0 %v535
    %785 = vmatpush1.bf16.msra.mxu0 %v534
    %786 = vmatprep.subr.bf16.mxu0 %v541
    %787 = vmatpush1.bf16.msra.mxu0 %v540
    %788 = vmatprep.subr.bf16.mxu0 %v547
    %789 = vmatpush1.bf16.msra.mxu0 %v546
    %790 = vmatprep.subr.bf16.mxu0 %v553
    %791 = vmatpush1.bf16.msra.mxu0 %v552
    %792 = vmatprep.subr.bf16.mxu0 %v559
    %793 = vmatpush1.bf16.msra.mxu0 %v558
    %794 = vmatprep.subr.bf16.mxu0 %v565
    %795 = vmatpush1.bf16.msra.mxu0 %v564
    %796 = vmatprep.subr.bf16.mxu0 %v571
    %797 = vmatpush1.bf16.msra.mxu0 %v570
    %798 = vmatprep.subr.bf16.mxu0 %v577
    %799 = vmatpush1.bf16.msra.mxu0 %v576
    %800 = vmatprep.subr.bf16.mxu0 %v583
    %801 = vmatpush1.bf16.msra.mxu0 %v582
    %802 = vmatprep.subr.bf16.mxu0 %v589
    %803 = vmatpush1.bf16.msra.mxu0 %v588
    %804 = vmatprep.subr.bf16.mxu0 %v595
    %805 = vmatpush1.bf16.msra.mxu0 %v594
    %806 = vmatprep.mubr.bf16.mxu0 %v209
    %807 = vmatmul.mubr.bf16.gmra.mrb[0].mxu0 %v208
    %v808 = vpop.f32.mrb[0].mxu0
    %v809 = vadd.f32 0.0, %v808
    %v810 = vpop.f32.mrb[0].mxu0
    %v811 = vadd.f32 0.0, %v810
    %v812 = vpop.f32.mrb[0].mxu0
    %v813 = vpop.f32.mrb[0].mxu0
    %814 = vdwg.mxu0
    %v815 = vadd.f32 %v727, %v729
    %816 = vadd.xlane.f32.xlu0 %v815
    %v817 = vpop.xlane.xlu0 %816
    %v818 = vrcp.pop 256.0
    %v819 = vmul.f32 %v817, %v818
    %v820 = vmul.f32 %v727, %v727
    %v821 = vmul.f32 %v729, %v729
    %v822 = vadd.f32 %v820, %v821
    %823 = vadd.xlane.f32.xlu0 %v822
    %v824 = vpop.xlane.xlu0 %823
    %v825 = vmul.f32 %v824, %v818
    %v826 = vmul.f32 %v819, %v819
    %v827 = vsub.f32 %v825, %v826
    %v828 = vadd.f32 %v827, 1e-05
    %v829 = vrsqrt.pop %v828
    %v831 = vlaneseq
    %v832 = vshrl.u32 %v831, 7
    %v833 = vsub.s32 0, %v832
    %v834 = vrot.slane %v106, %v833
    %v835 = vlaneseq
    %v836 = vshrl.u32 %v835, 7
    %v837 = vsub.s32 4, %v836
    %v838 = vrot.slane %v106, %v837
    %v841 = vlaneseq
    %v842 = vshrl.u32 %v841, 7
    %v843 = vsub.s32 0, %v842
    %v844 = vrot.slane %v834, %v843
    %v845 = vlaneseq
    %v846 = vshrl.u32 %v845, 7
    %v847 = vsub.s32 0, %v846
    %v848 = vrot.slane %v838, %v847
    %v849 = vmul.f32 %v844, %v829
    %v850 = vmul.f32 %v848, %v829
    %v851 = vmul.f32 %v727, %v849
    %v852 = vmul.f32 %v729, %v850
    %v853 = vmul.f32 %v819, %v849
    %v854 = vmul.f32 %v819, %v850
    %v855 = vlaneseq
    %v856 = vshrl.u32 %v855, 7
    %v857 = vsub.s32 1, %v856
    %v858 = vrot.slane %v106, %v857
    %v859 = vlaneseq
    %v860 = vshrl.u32 %v859, 7
    %v861 = vsub.s32 5, %v860
    %v862 = vrot.slane %v106, %v861
    %v865 = vlaneseq
    %v866 = vshrl.u32 %v865, 7
    %v867 = vsub.s32 1, %v866
    %v868 = vrot.slane %v858, %v867
    %v869 = vlaneseq
    %v870 = vshrl.u32 %v869, 7
    %v871 = vsub.s32 1, %v870
    %v872 = vrot.slane %v862, %v871
    %v873 = vsub.f32 %v868, %v853
    %v874 = vsub.f32 %v872, %v854
    %v875 = vadd.f32 %v851, %v873
    %v876 = vadd.f32 %v852, %v874
    %v877 = vmax.f32 %v875, 0.0
    %v878 = vmax.f32 %v876, 0.0
    %v879 = vpack.c.bf16 %v877, %v877
    %v880 = vpack.c.bf16 %v878, %v878
    %v881 = vld [vmem:[#allocation7] sm:$0xff]
    %v882 = vld [vmem:[#allocation7 + $0x8] sm:$0xff]
    %v883 = vld [vmem:[#allocation7 + $0x10] sm:$0xff]
    %v884 = vld [vmem:[#allocation7 + $0x18] sm:$0xff]
    %v885 = vld [vmem:[#allocation7 + $0x20] sm:$0xff]
    %v886 = vld [vmem:[#allocation7 + $0x28] sm:$0xff]
    %v887 = vld [vmem:[#allocation7 + $0x30] sm:$0xff]
    %v888 = vld [vmem:[#allocation7 + $0x38] sm:$0xff]
    %v889 = vld [vmem:[#allocation7 + $0x40] sm:$0xff]
    %v890 = vld [vmem:[#allocation7 + $0x48] sm:$0xff]
    %v891 = vld [vmem:[#allocation7 + $0x50] sm:$0xff]
    %v892 = vld [vmem:[#allocation7 + $0x58] sm:$0xff]
    %v893 = vld [vmem:[#allocation7 + $0x60] sm:$0xff]
    %v894 = vld [vmem:[#allocation7 + $0x68] sm:$0xff]
    %v895 = vld [vmem:[#allocation7 + $0x70] sm:$0xff]
    %v896 = vld [vmem:[#allocation7 + $0x78] sm:$0xff]
    %v897 = vld [vmem:[#allocation7 + $0x80] sm:$0xff]
    %v898 = vld [vmem:[#allocation7 + $0x88] sm:$0xff]
    %v899 = vld [vmem:[#allocation7 + $0x90] sm:$0xff]
    %v900 = vld [vmem:[#allocation7 + $0x98] sm:$0xff]
    %v901 = vld [vmem:[#allocation7 + $0xa0] sm:$0xff]
    %v902 = vld [vmem:[#allocation7 + $0xa8] sm:$0xff]
    %v903 = vld [vmem:[#allocation7 + $0xb0] sm:$0xff]
    %v904 = vld [vmem:[#allocation7 + $0xb8] sm:$0xff]
    %v905 = vld [vmem:[#allocation7 + $0xc0] sm:$0xff]
    %v906 = vld [vmem:[#allocation7 + $0xc8] sm:$0xff]
    %v907 = vld [vmem:[#allocation7 + $0xd0] sm:$0xff]
    %v908 = vld [vmem:[#allocation7 + $0xd8] sm:$0xff]
    %v909 = vld [vmem:[#allocation7 + $0xe0] sm:$0xff]
    %v910 = vld [vmem:[#allocation7 + $0xe8] sm:$0xff]
    %v911 = vld [vmem:[#allocation7 + $0xf0] sm:$0xff]
    %v912 = vld [vmem:[#allocation7 + $0xf8] sm:$0xff]
    %v945 = vunpack.c.l.b16 %v881
    %v946 = vunpack.c.h.b16 %v881
    %v947 = vunpack.c.l.b16 %v882
    %v948 = vunpack.c.h.b16 %v882
    %v949 = vunpack.c.l.b16 %v883
    %v950 = vunpack.c.h.b16 %v883
    %v951 = vunpack.c.l.b16 %v884
    %v952 = vunpack.c.h.b16 %v884
    %v953 = vunpack.c.l.b16 %v885
    %v954 = vunpack.c.h.b16 %v885
    %v955 = vunpack.c.l.b16 %v886
    %v956 = vunpack.c.h.b16 %v886
    %v957 = vunpack.c.l.b16 %v887
    %v958 = vunpack.c.h.b16 %v887
    %v959 = vunpack.c.l.b16 %v888
    %v960 = vunpack.c.h.b16 %v888
    %v961 = vunpack.c.l.b16 %v889
    %v962 = vunpack.c.h.b16 %v889
    %v963 = vunpack.c.l.b16 %v890
    %v964 = vunpack.c.h.b16 %v890
    %v965 = vunpack.c.l.b16 %v891
    %v966 = vunpack.c.h.b16 %v891
    %v967 = vunpack.c.l.b16 %v892
    %v968 = vunpack.c.h.b16 %v892
    %v969 = vunpack.c.l.b16 %v893
    %v970 = vunpack.c.h.b16 %v893
    %v971 = vunpack.c.l.b16 %v894
    %v972 = vunpack.c.h.b16 %v894
    %v973 = vunpack.c.l.b16 %v895
    %v974 = vunpack.c.h.b16 %v895
    %v975 = vunpack.c.l.b16 %v896
    %v976 = vunpack.c.h.b16 %v896
    %v977 = vunpack.c.l.b16 %v897
    %v978 = vunpack.c.h.b16 %v897
    %v979 = vunpack.c.l.b16 %v898
    %v980 = vunpack.c.h.b16 %v898
    %v981 = vunpack.c.l.b16 %v899
    %v982 = vunpack.c.h.b16 %v899
    %v983 = vunpack.c.l.b16 %v900
    %v984 = vunpack.c.h.b16 %v900
    %v985 = vunpack.c.l.b16 %v901
    %v986 = vunpack.c.h.b16 %v901
    %v987 = vunpack.c.l.b16 %v902
    %v988 = vunpack.c.h.b16 %v902
    %v989 = vunpack.c.l.b16 %v903
    %v990 = vunpack.c.h.b16 %v903
    %v991 = vunpack.c.l.b16 %v904
    %v992 = vunpack.c.h.b16 %v904
    %v993 = vunpack.c.l.b16 %v905
    %v994 = vunpack.c.h.b16 %v905
    %v995 = vunpack.c.l.b16 %v906
    %v996 = vunpack.c.h.b16 %v906
    %v997 = vunpack.c.l.b16 %v907
    %v998 = vunpack.c.h.b16 %v907
    %v999 = vunpack.c.l.b16 %v908
    %v1000 = vunpack.c.h.b16 %v908
    %v1001 = vunpack.c.l.b16 %v909
    %v1002 = vunpack.c.h.b16 %v909
    %v1003 = vunpack.c.l.b16 %v910
    %v1004 = vunpack.c.h.b16 %v910
    %v1005 = vunpack.c.l.b16 %v911
    %v1006 = vunpack.c.h.b16 %v911
    %v1007 = vunpack.c.l.b16 %v912
    %v1008 = vunpack.c.h.b16 %v912
    %v1009 = vpack.c.b16 %v947, %v945
    %v1010 = vpack.c.b16 %v948, %v946
    %v1011 = vpack.c.b16 %v951, %v949
    %v1012 = vpack.c.b16 %v952, %v950
    %v1013 = vpack.c.b16 %v955, %v953
    %v1014 = vpack.c.b16 %v956, %v954
    %v1015 = vpack.c.b16 %v959, %v957
    %v1016 = vpack.c.b16 %v960, %v958
    %v1017 = vpack.c.b16 %v963, %v961
    %v1018 = vpack.c.b16 %v964, %v962
    %v1019 = vpack.c.b16 %v967, %v965
    %v1020 = vpack.c.b16 %v968, %v966
    %v1021 = vpack.c.b16 %v971, %v969
    %v1022 = vpack.c.b16 %v972, %v970
    %v1023 = vpack.c.b16 %v975, %v973
    %v1024 = vpack.c.b16 %v976, %v974
    %v1025 = vpack.c.b16 %v979, %v977
    %v1026 = vpack.c.b16 %v980, %v978
    %v1027 = vpack.c.b16 %v983, %v981
    %v1028 = vpack.c.b16 %v984, %v982
    %v1029 = vpack.c.b16 %v987, %v985
    %v1030 = vpack.c.b16 %v988, %v986
    %v1031 = vpack.c.b16 %v991, %v989
    %v1032 = vpack.c.b16 %v992, %v990
    %v1033 = vpack.c.b16 %v995, %v993
    %v1034 = vpack.c.b16 %v996, %v994
    %v1035 = vpack.c.b16 %v999, %v997
    %v1036 = vpack.c.b16 %v1000, %v998
    %v1037 = vpack.c.b16 %v1003, %v1001
    %v1038 = vpack.c.b16 %v1004, %v1002
    %v1039 = vpack.c.b16 %v1007, %v1005
    %v1040 = vpack.c.b16 %v1008, %v1006
    %1073 = vmatprep.subr.bf16.mxu0 %v1010
    %1074 = vmatpush1.bf16.msra.mxu0 %v1009
    %1075 = vmatprep.subr.bf16.mxu0 %v1012
    %1076 = vmatpush1.bf16.msra.mxu0 %v1011
    %1077 = vmatprep.subr.bf16.mxu0 %v1014
    %1078 = vmatpush1.bf16.msra.mxu0 %v1013
    %1079 = vmatprep.subr.bf16.mxu0 %v1016
    %1080 = vmatpush1.bf16.msra.mxu0 %v1015
    %1081 = vmatprep.subr.bf16.mxu0 %v1018
    %1082 = vmatpush1.bf16.msra.mxu0 %v1017
    %1083 = vmatprep.subr.bf16.mxu0 %v1020
    %1084 = vmatpush1.bf16.msra.mxu0 %v1019
    %1085 = vmatprep.subr.bf16.mxu0 %v1022
    %1086 = vmatpush1.bf16.msra.mxu0 %v1021
    %1087 = vmatprep.subr.bf16.mxu0 %v1024
    %1088 = vmatpush1.bf16.msra.mxu0 %v1023
    %1089 = vmatprep.subr.bf16.mxu0 %v1026
    %1090 = vmatpush1.bf16.msra.mxu0 %v1025
    %1091 = vmatprep.subr.bf16.mxu0 %v1028
    %1092 = vmatpush1.bf16.msra.mxu0 %v1027
    %1093 = vmatprep.subr.bf16.mxu0 %v1030
    %1094 = vmatpush1.bf16.msra.mxu0 %v1029
    %1095 = vmatprep.subr.bf16.mxu0 %v1032
    %1096 = vmatpush1.bf16.msra.mxu0 %v1031
    %1097 = vmatprep.subr.bf16.mxu0 %v1034
    %1098 = vmatpush1.bf16.msra.mxu0 %v1033
    %1099 = vmatprep.subr.bf16.mxu0 %v1036
    %1100 = vmatpush1.bf16.msra.mxu0 %v1035
    %1101 = vmatprep.subr.bf16.mxu0 %v1038
    %1102 = vmatpush1.bf16.msra.mxu0 %v1037
    %1103 = vmatprep.subr.bf16.mxu0 %v1040
    %1104 = vmatpush1.bf16.msra.mxu0 %v1039
    %1105 = vmatprep.mubr.bf16.mxu0 %v880
    %1106 = vmatmul.mubr.bf16.gmra.mrb[0].mxu0 %v879
    %v1107 = vpop.f32.mrb[0].mxu0
    %v1108 = vadd.f32 0.0, %v1107
    %v1109 = vpop.f32.mrb[0].mxu0
    %v1110 = vadd.f32 0.0, %v1109
    %v1111 = vpop.f32.mrb[0].mxu0
    %v1112 = vpop.f32.mrb[0].mxu0
    %1113 = vdwg.mxu0
    %v1114 = vadd.f32 %v1108, %v1110
    %1115 = vadd.xlane.f32.xlu0 %v1114
    %v1116 = vpop.xlane.xlu0 %1115
    %v1117 = vmul.f32 %v1116, %v818
    %v1118 = vmul.f32 %v1108, %v1108
    %v1119 = vmul.f32 %v1110, %v1110
    %v1120 = vadd.f32 %v1118, %v1119
    %1121 = vadd.xlane.f32.xlu0 %v1120
    %v1122 = vpop.xlane.xlu0 %1121
    %v1123 = vmul.f32 %v1122, %v818
    %v1124 = vmul.f32 %v1117, %v1117
    %v1125 = vsub.f32 %v1123, %v1124
    %v1126 = vadd.f32 %v1125, 1e-05
    %v1127 = vrsqrt.pop %v1126
    %v1128 = vlaneseq
    %v1129 = vshrl.u32 %v1128, 7
    %v1130 = vsub.s32 2, %v1129
    %v1131 = vrot.slane %v106, %v1130
    %v1132 = vlaneseq
    %v1133 = vshrl.u32 %v1132, 7
    %v1134 = vsub.s32 6, %v1133
    %v1135 = vrot.slane %v106, %v1134
    %v1138 = vlaneseq
    %v1139 = vshrl.u32 %v1138, 7
    %v1140 = vsub.s32 2, %v1139
    %v1141 = vrot.slane %v1131, %v1140
    %v1142 = vlaneseq
    %v1143 = vshrl.u32 %v1142, 7
    %v1144 = vsub.s32 2, %v1143
    %v1145 = vrot.slane %v1135, %v1144
    %v1146 = vmul.f32 %v1141, %v1127
    %v1147 = vmul.f32 %v1145, %v1127
    %v1148 = vmul.f32 %v1108, %v1146
    %v1149 = vmul.f32 %v1110, %v1147
    %v1150 = vmul.f32 %v1117, %v1146
    %v1151 = vmul.f32 %v1117, %v1147
    %v1152 = vlaneseq
    %v1153 = vshrl.u32 %v1152, 7
    %v1154 = vsub.s32 3, %v1153
    %v1155 = vrot.slane %v106, %v1154
    %v1156 = vlaneseq
    %v1157 = vshrl.u32 %v1156, 7
    %v1158 = vsub.s32 7, %v1157
    %v1159 = vrot.slane %v106, %v1158
    %v1162 = vlaneseq
    %v1163 = vshrl.u32 %v1162, 7
    %v1164 = vsub.s32 3, %v1163
    %v1165 = vrot.slane %v1155, %v1164
    %v1166 = vlaneseq
    %v1167 = vshrl.u32 %v1166, 7
    %v1168 = vsub.s32 3, %v1167
    %v1169 = vrot.slane %v1159, %v1168
    %v1170 = vsub.f32 %v1165, %v1150
    %v1171 = vsub.f32 %v1169, %v1151
    %v1172 = vadd.f32 %v1148, %v1170
    %v1173 = vadd.f32 %v1149, %v1171
    %v1174 = vadd.f32 %v1172, %v104
    %v1175 = vadd.f32 %v1173, %v105
    %v1176 = vmax.f32 %v1174, 0.0
    %v1177 = vmax.f32 %v1175, 0.0
    %v1178 = vpack.c.bf16 %v1176, %v1176
    %v1179 = vpack.c.bf16 %v1177, %v1177
    %v1180 = vld [vmem:[#allocation10] sm:$0xf]
    %v1181 = vld [vmem:[#allocation10 + $0x4] sm:$0xf]
    %v1182 = vld [vmem:[#allocation10 + $0x8] sm:$0xf]
    %v1183 = vld [vmem:[#allocation10 + $0xc] sm:$0xf]
    %v1184 = vld [vmem:[#allocation10 + $0x10] sm:$0xf]
    %v1185 = vld [vmem:[#allocation10 + $0x14] sm:$0xf]
    %v1186 = vld [vmem:[#allocation10 + $0x18] sm:$0xf]
    %v1187 = vld [vmem:[#allocation10 + $0x1c] sm:$0xf]
    %v1188 = vld [vmem:[#allocation10 + $0x20] sm:$0xf]
    %v1189 = vld [vmem:[#allocation10 + $0x24] sm:$0xf]
    %v1190 = vld [vmem:[#allocation10 + $0x28] sm:$0xf]
    %v1191 = vld [vmem:[#allocation10 + $0x2c] sm:$0xf]
    %v1192 = vld [vmem:[#allocation10 + $0x30] sm:$0xf]
    %v1193 = vld [vmem:[#allocation10 + $0x34] sm:$0xf]
    %v1194 = vld [vmem:[#allocation10 + $0x38] sm:$0xf]
    %v1195 = vld [vmem:[#allocation10 + $0x3c] sm:$0xf]
    %v1196 = vld [vmem:[#allocation10 + $0x40] sm:$0xf]
    %v1197 = vld [vmem:[#allocation10 + $0x44] sm:$0xf]
    %v1198 = vld [vmem:[#allocation10 + $0x48] sm:$0xf]
    %v1199 = vld [vmem:[#allocation10 + $0x4c] sm:$0xf]
    %v1200 = vld [vmem:[#allocation10 + $0x50] sm:$0xf]
    %v1201 = vld [vmem:[#allocation10 + $0x54] sm:$0xf]
    %v1202 = vld [vmem:[#allocation10 + $0x58] sm:$0xf]
    %v1203 = vld [vmem:[#allocation10 + $0x5c] sm:$0xf]
    %v1204 = vld [vmem:[#allocation10 + $0x60] sm:$0xf]
    %v1205 = vld [vmem:[#allocation10 + $0x64] sm:$0xf]
    %v1206 = vld [vmem:[#allocation10 + $0x68] sm:$0xf]
    %v1207 = vld [vmem:[#allocation10 + $0x6c] sm:$0xf]
    %v1208 = vld [vmem:[#allocation10 + $0x70] sm:$0xf]
    %v1209 = vld [vmem:[#allocation10 + $0x74] sm:$0xf]
    %v1210 = vld [vmem:[#allocation10 + $0x78] sm:$0xf]
    %v1211 = vld [vmem:[#allocation10 + $0x7c] sm:$0xf]
    %v1212 = vadd.f32 %v768, %v770
    %1213 = vadd.xlane.f32.xlu0 %v1212
    %v1214 = vpop.xlane.xlu0 %1213
    %v1215 = vmul.f32 %v1214, %v818
    %v1216 = vmul.f32 %v768, %v768
    %v1217 = vmul.f32 %v770, %v770
    %v1218 = vadd.f32 %v1216, %v1217
    %1219 = vadd.xlane.f32.xlu0 %v1218
    %v1220 = vpop.xlane.xlu0 %1219
    %v1221 = vmul.f32 %v1220, %v818
    %v1222 = vmul.f32 %v1215, %v1215
    %v1223 = vsub.f32 %v1221, %v1222
    %v1224 = vadd.f32 %v1223, 1e-05
    %v1225 = vrsqrt.pop %v1224
    %v1227 = vlaneseq
    %v1228 = vshrl.u32 %v1227, 7
    %v1229 = vsub.s32 0, %v1228
    %v1230 = vrot.slane %v107, %v1229
    %v1231 = vlaneseq
    %v1232 = vshrl.u32 %v1231, 7
    %v1233 = vsub.s32 4, %v1232
    %v1234 = vrot.slane %v107, %v1233
    %v1237 = vlaneseq
    %v1238 = vshrl.u32 %v1237, 7
    %v1239 = vsub.s32 0, %v1238
    %v1240 = vrot.slane %v1230, %v1239
    %v1241 = vlaneseq
    %v1242 = vshrl.u32 %v1241, 7
    %v1243 = vsub.s32 0, %v1242
    %v1244 = vrot.slane %v1234, %v1243
    %v1245 = vmul.f32 %v1240, %v1225
    %v1246 = vmul.f32 %v1244, %v1225
    %v1247 = vmul.f32 %v768, %v1245
    %v1248 = vmul.f32 %v770, %v1246
    %v1249 = vmul.f32 %v1215, %v1245
    %v1250 = vmul.f32 %v1215, %v1246
    %v1251 = vlaneseq
    %v1252 = vshrl.u32 %v1251, 7
    %v1253 = vsub.s32 1, %v1252
    %v1254 = vrot.slane %v107, %v1253
    %v1255 = vlaneseq
    %v1256 = vshrl.u32 %v1255, 7
    %v1257 = vsub.s32 5, %v1256
    %v1258 = vrot.slane %v107, %v1257
    %v1261 = vlaneseq
    %v1262 = vshrl.u32 %v1261, 7
    %v1263 = vsub.s32 1, %v1262
    %v1264 = vrot.slane %v1254, %v1263
    %v1265 = vlaneseq
    %v1266 = vshrl.u32 %v1265, 7
    %v1267 = vsub.s32 1, %v1266
    %v1268 = vrot.slane %v1258, %v1267
    %v1269 = vsub.f32 %v1264, %v1249
    %v1270 = vsub.f32 %v1268, %v1250
    %v1271 = vadd.f32 %v1247, %v1269
    %v1272 = vadd.f32 %v1248, %v1270
    %v1273 = vmax.f32 %v1271, 0.0
    %v1274 = vmax.f32 %v1272, 0.0
    %v1275 = vpack.c.bf16 %v1273, %v1273
    %v1276 = vpack.c.bf16 %v1274, %v1274
    %s1277 = scalar_lea.vmem [#allocation7], 256
    %v1278 = vld [vmem:[%s1277] sm:$0xff]
    %v1279 = vld [vmem:[%s1277 + $0x8] sm:$0xff]
    %v1280 = vld [vmem:[%s1277 + $0x10] sm:$0xff]
    %v1281 = vld [vmem:[%s1277 + $0x18] sm:$0xff]
    %v1282 = vld [vmem:[%s1277 + $0x20] sm:$0xff]
    %v1283 = vld [vmem:[%s1277 + $0x28] sm:$0xff]
    %v1284 = vld [vmem:[%s1277 + $0x30] sm:$0xff]
    %v1285 = vld [vmem:[%s1277 + $0x38] sm:$0xff]
    %v1286 = vld [vmem:[%s1277 + $0x40] sm:$0xff]
    %v1287 = vld [vmem:[%s1277 + $0x48] sm:$0xff]
    %v1288 = vld [vmem:[%s1277 + $0x50] sm:$0xff]
    %v1289 = vld [vmem:[%s1277 + $0x58] sm:$0xff]
    %v1290 = vld [vmem:[%s1277 + $0x60] sm:$0xff]
    %v1291 = vld [vmem:[%s1277 + $0x68] sm:$0xff]
    %v1292 = vld [vmem:[%s1277 + $0x70] sm:$0xff]
    %v1293 = vld [vmem:[%s1277 + $0x78] sm:$0xff]
    %v1294 = vld [vmem:[%s1277 + $0x80] sm:$0xff]
    %v1295 = vld [vmem:[%s1277 + $0x88] sm:$0xff]
    %v1296 = vld [vmem:[%s1277 + $0x90] sm:$0xff]
    %v1297 = vld [vmem:[%s1277 + $0x98] sm:$0xff]
    %v1298 = vld [vmem:[%s1277 + $0xa0] sm:$0xff]
    %v1299 = vld [vmem:[%s1277 + $0xa8] sm:$0xff]
    %v1300 = vld [vmem:[%s1277 + $0xb0] sm:$0xff]
    %v1301 = vld [vmem:[%s1277 + $0xb8] sm:$0xff]
    %v1302 = vld [vmem:[%s1277 + $0xc0] sm:$0xff]
    %v1303 = vld [vmem:[%s1277 + $0xc8] sm:$0xff]
    %v1304 = vld [vmem:[%s1277 + $0xd0] sm:$0xff]
    %v1305 = vld [vmem:[%s1277 + $0xd8] sm:$0xff]
    %v1306 = vld [vmem:[%s1277 + $0xe0] sm:$0xff]
    %v1307 = vld [vmem:[%s1277 + $0xe8] sm:$0xff]
    %v1308 = vld [vmem:[%s1277 + $0xf0] sm:$0xff]
    %v1309 = vld [vmem:[%s1277 + $0xf8] sm:$0xff]
    %v1342 = vunpack.c.l.b16 %v1278
    %v1343 = vunpack.c.h.b16 %v1278
    %v1344 = vunpack.c.l.b16 %v1279
    %v1345 = vunpack.c.h.b16 %v1279
    %v1346 = vunpack.c.l.b16 %v1280
    %v1347 = vunpack.c.h.b16 %v1280
    %v1348 = vunpack.c.l.b16 %v1281
    %v1349 = vunpack.c.h.b16 %v1281
    %v1350 = vunpack.c.l.b16 %v1282
    %v1351 = vunpack.c.h.b16 %v1282
    %v1352 = vunpack.c.l.b16 %v1283
    %v1353 = vunpack.c.h.b16 %v1283
    %v1354 = vunpack.c.l.b16 %v1284
    %v1355 = vunpack.c.h.b16 %v1284
    %v1356 = vunpack.c.l.b16 %v1285
    %v1357 = vunpack.c.h.b16 %v1285
    %v1358 = vunpack.c.l.b16 %v1286
    %v1359 = vunpack.c.h.b16 %v1286
    %v1360 = vunpack.c.l.b16 %v1287
    %v1361 = vunpack.c.h.b16 %v1287
    %v1362 = vunpack.c.l.b16 %v1288
    %v1363 = vunpack.c.h.b16 %v1288
    %v1364 = vunpack.c.l.b16 %v1289
    %v1365 = vunpack.c.h.b16 %v1289
    %v1366 = vunpack.c.l.b16 %v1290
    %v1367 = vunpack.c.h.b16 %v1290
    %v1368 = vunpack.c.l.b16 %v1291
    %v1369 = vunpack.c.h.b16 %v1291
    %v1370 = vunpack.c.l.b16 %v1292
    %v1371 = vunpack.c.h.b16 %v1292
    %v1372 = vunpack.c.l.b16 %v1293
    %v1373 = vunpack.c.h.b16 %v1293
    %v1374 = vunpack.c.l.b16 %v1294
    %v1375 = vunpack.c.h.b16 %v1294
    %v1376 = vunpack.c.l.b16 %v1295
    %v1377 = vunpack.c.h.b16 %v1295
    %v1378 = vunpack.c.l.b16 %v1296
    %v1379 = vunpack.c.h.b16 %v1296
    %v1380 = vunpack.c.l.b16 %v1297
    %v1381 = vunpack.c.h.b16 %v1297
    %v1382 = vunpack.c.l.b16 %v1298
    %v1383 = vunpack.c.h.b16 %v1298
    %v1384 = vunpack.c.l.b16 %v1299
    %v1385 = vunpack.c.h.b16 %v1299
    %v1386 = vunpack.c.l.b16 %v1300
    %v1387 = vunpack.c.h.b16 %v1300
    %v1388 = vunpack.c.l.b16 %v1301
    %v1389 = vunpack.c.h.b16 %v1301
    %v1390 = vunpack.c.l.b16 %v1302
    %v1391 = vunpack.c.h.b16 %v1302
    %v1392 = vunpack.c.l.b16 %v1303
    %v1393 = vunpack.c.h.b16 %v1303
    %v1394 = vunpack.c.l.b16 %v1304
    %v1395 = vunpack.c.h.b16 %v1304
    %v1396 = vunpack.c.l.b16 %v1305
    %v1397 = vunpack.c.h.b16 %v1305
    %v1398 = vunpack.c.l.b16 %v1306
    %v1399 = vunpack.c.h.b16 %v1306
    %v1400 = vunpack.c.l.b16 %v1307
    %v1401 = vunpack.c.h.b16 %v1307
    %v1402 = vunpack.c.l.b16 %v1308
    %v1403 = vunpack.c.h.b16 %v1308
    %v1404 = vunpack.c.l.b16 %v1309
    %v1405 = vunpack.c.h.b16 %v1309
    %v1406 = vpack.c.b16 %v1344, %v1342
    %v1407 = vpack.c.b16 %v1345, %v1343
    %v1408 = vpack.c.b16 %v1348, %v1346
    %v1409 = vpack.c.b16 %v1349, %v1347
    %v1410 = vpack.c.b16 %v1352, %v1350
    %v1411 = vpack.c.b16 %v1353, %v1351
    %v1412 = vpack.c.b16 %v1356, %v1354
    %v1413 = vpack.c.b16 %v1357, %v1355
    %v1414 = vpack.c.b16 %v1360, %v1358
    %v1415 = vpack.c.b16 %v1361, %v1359
    %v1416 = vpack.c.b16 %v1364, %v1362
    %v1417 = vpack.c.b16 %v1365, %v1363
    %v1418 = vpack.c.b16 %v1368, %v1366
    %v1419 = vpack.c.b16 %v1369, %v1367
    %v1420 = vpack.c.b16 %v1372, %v1370
    %v1421 = vpack.c.b16 %v1373, %v1371
    %v1422 = vpack.c.b16 %v1376, %v1374
    %v1423 = vpack.c.b16 %v1377, %v1375
    %v1424 = vpack.c.b16 %v1380, %v1378
    %v1425 = vpack.c.b16 %v1381, %v1379
    %v1426 = vpack.c.b16 %v1384, %v1382
    %v1427 = vpack.c.b16 %v1385, %v1383
    %v1428 = vpack.c.b16 %v1388, %v1386
    %v1429 = vpack.c.b16 %v1389, %v1387
    %v1430 = vpack.c.b16 %v1392, %v1390
    %v1431 = vpack.c.b16 %v1393, %v1391
    %v1432 = vpack.c.b16 %v1396, %v1394
    %v1433 = vpack.c.b16 %v1397, %v1395
    %v1434 = vpack.c.b16 %v1400, %v1398
    %v1435 = vpack.c.b16 %v1401, %v1399
    %v1436 = vpack.c.b16 %v1404, %v1402
    %v1437 = vpack.c.b16 %v1405, %v1403
    %1470 = vmatprep.subr.bf16.mxu0 %v1407
    %1471 = vmatpush1.bf16.msra.mxu0 %v1406
    %1472 = vmatprep.subr.bf16.mxu0 %v1409
    %1473 = vmatpush1.bf16.msra.mxu0 %v1408
    %1474 = vmatprep.subr.bf16.mxu0 %v1411
    %1475 = vmatpush1.bf16.msra.mxu0 %v1410
    %1476 = vmatprep.subr.bf16.mxu0 %v1413
    %1477 = vmatpush1.bf16.msra.mxu0 %v1412
    %1478 = vmatprep.subr.bf16.mxu0 %v1415
    %1479 = vmatpush1.bf16.msra.mxu0 %v1414
    %1480 = vmatprep.subr.bf16.mxu0 %v1417
    %1481 = vmatpush1.bf16.msra.mxu0 %v1416
    %1482 = vmatprep.subr.bf16.mxu0 %v1419
    %1483 = vmatpush1.bf16.msra.mxu0 %v1418
    %1484 = vmatprep.subr.bf16.mxu0 %v1421
    %1485 = vmatpush1.bf16.msra.mxu0 %v1420
    %1486 = vmatprep.subr.bf16.mxu0 %v1423
    %1487 = vmatpush1.bf16.msra.mxu0 %v1422
    %1488 = vmatprep.subr.bf16.mxu0 %v1425
    %1489 = vmatpush1.bf16.msra.mxu0 %v1424
    %1490 = vmatprep.subr.bf16.mxu0 %v1427
    %1491 = vmatpush1.bf16.msra.mxu0 %v1426
    %1492 = vmatprep.subr.bf16.mxu0 %v1429
    %1493 = vmatpush1.bf16.msra.mxu0 %v1428
    %1494 = vmatprep.subr.bf16.mxu0 %v1431
    %1495 = vmatpush1.bf16.msra.mxu0 %v1430
    %1496 = vmatprep.subr.bf16.mxu0 %v1433
    %1497 = vmatpush1.bf16.msra.mxu0 %v1432
    %1498 = vmatprep.subr.bf16.mxu0 %v1435
    %1499 = vmatpush1.bf16.msra.mxu0 %v1434
    %1500 = vmatprep.subr.bf16.mxu0 %v1437
    %1501 = vmatpush1.bf16.msra.mxu0 %v1436
    %1502 = vmatprep.mubr.bf16.mxu0 %v1276
    %1503 = vmatmul.mubr.bf16.gmra.mrb[0].mxu0 %v1275
    %v1504 = vpop.f32.mrb[0].mxu0
    %v1505 = vadd.f32 0.0, %v1504
    %v1506 = vpop.f32.mrb[0].mxu0
    %v1507 = vadd.f32 0.0, %v1506
    %v1508 = vpop.f32.mrb[0].mxu0
    %v1509 = vpop.f32.mrb[0].mxu0
    %1510 = vdwg.mxu0
    %v1511 = vadd.f32 %v1505, %v1507
    %1512 = vadd.xlane.f32.xlu0 %v1511
    %v1513 = vpop.xlane.xlu0 %1512
    %v1514 = vmul.f32 %v1513, %v818
    %v1515 = vmul.f32 %v1505, %v1505
    %v1516 = vmul.f32 %v1507, %v1507
    %v1517 = vadd.f32 %v1515, %v1516
    %1518 = vadd.xlane.f32.xlu0 %v1517
    %v1519 = vpop.xlane.xlu0 %1518
    %v1520 = vmul.f32 %v1519, %v818
    %v1521 = vmul.f32 %v1514, %v1514
    %v1522 = vsub.f32 %v1520, %v1521
    %v1523 = vadd.f32 %v1522, 1e-05
    %v1524 = vrsqrt.pop %v1523
    %v1525 = vlaneseq
    %v1526 = vshrl.u32 %v1525, 7
    %v1527 = vsub.s32 2, %v1526
    %v1528 = vrot.slane %v107, %v1527
    %v1529 = vlaneseq
    %v1530 = vshrl.u32 %v1529, 7
    %v1531 = vsub.s32 6, %v1530
    %v1532 = vrot.slane %v107, %v1531
    %v1535 = vlaneseq
    %v1536 = vshrl.u32 %v1535, 7
    %v1537 = vsub.s32 2, %v1536
    %v1538 = vrot.slane %v1528, %v1537
    %v1539 = vlaneseq
    %v1540 = vshrl.u32 %v1539, 7
    %v1541 = vsub.s32 2, %v1540
    %v1542 = vrot.slane %v1532, %v1541
    %v1543 = vmul.f32 %v1538, %v1524
    %v1544 = vmul.f32 %v1542, %v1524
    %v1545 = vmul.f32 %v1505, %v1543
    %v1546 = vmul.f32 %v1507, %v1544
    %v1547 = vmul.f32 %v1514, %v1543
    %v1548 = vmul.f32 %v1514, %v1544
    %v1549 = vlaneseq
    %v1550 = vshrl.u32 %v1549, 7
    %v1551 = vsub.s32 3, %v1550
    %v1552 = vrot.slane %v107, %v1551
    %v1553 = vlaneseq
    %v1554 = vshrl.u32 %v1553, 7
    %v1555 = vsub.s32 7, %v1554
    %v1556 = vrot.slane %v107, %v1555
    %v1559 = vlaneseq
    %v1560 = vshrl.u32 %v1559, 7
    %v1561 = vsub.s32 3, %v1560
    %v1562 = vrot.slane %v1552, %v1561
    %v1563 = vlaneseq
    %v1564 = vshrl.u32 %v1563, 7
    %v1565 = vsub.s32 3, %v1564
    %v1566 = vrot.slane %v1556, %v1565
    %v1567 = vsub.f32 %v1562, %v1547
    %v1568 = vsub.f32 %v1566, %v1548
    %v1569 = vadd.f32 %v1545, %v1567
    %v1570 = vadd.f32 %v1546, %v1568
    %v1571 = vadd.f32 %v1569, %v104
    %v1572 = vadd.f32 %v1570, %v105
    %v1573 = vmax.f32 %v1571, 0.0
    %v1574 = vmax.f32 %v1572, 0.0
    %v1575 = vpack.c.bf16 %v1573, %v1573
    %v1576 = vpack.c.bf16 %v1574, %v1574
    %s1577 = scalar_lea.vmem [#allocation10], 128
    %v1578 = vld [vmem:[%s1577] sm:$0xf]
    %v1579 = vld [vmem:[%s1577 + $0x4] sm:$0xf]
    %v1580 = vld [vmem:[%s1577 + $0x8] sm:$0xf]
    %v1581 = vld [vmem:[%s1577 + $0xc] sm:$0xf]
    %v1582 = vld [vmem:[%s1577 + $0x10] sm:$0xf]
    %v1583 = vld [vmem:[%s1577 + $0x14] sm:$0xf]
    %v1584 = vld [vmem:[%s1577 + $0x18] sm:$0xf]
    %v1585 = vld [vmem:[%s1577 + $0x1c] sm:$0xf]
    %v1586 = vld [vmem:[%s1577 + $0x20] sm:$0xf]
    %v1587 = vld [vmem:[%s1577 + $0x24] sm:$0xf]
    %v1588 = vld [vmem:[%s1577 + $0x28] sm:$0xf]
    %v1589 = vld [vmem:[%s1577 + $0x2c] sm:$0xf]
    %v1590 = vld [vmem:[%s1577 + $0x30] sm:$0xf]
    %v1591 = vld [vmem:[%s1577 + $0x34] sm:$0xf]
    %v1592 = vld [vmem:[%s1577 + $0x38] sm:$0xf]
    %v1593 = vld [vmem:[%s1577 + $0x3c] sm:$0xf]
    %v1594 = vld [vmem:[%s1577 + $0x40] sm:$0xf]
    %v1595 = vld [vmem:[%s1577 + $0x44] sm:$0xf]
    %v1596 = vld [vmem:[%s1577 + $0x48] sm:$0xf]
    %v1597 = vld [vmem:[%s1577 + $0x4c] sm:$0xf]
    %v1598 = vld [vmem:[%s1577 + $0x50] sm:$0xf]
    %v1599 = vld [vmem:[%s1577 + $0x54] sm:$0xf]
    %v1600 = vld [vmem:[%s1577 + $0x58] sm:$0xf]
    %v1601 = vld [vmem:[%s1577 + $0x5c] sm:$0xf]
    %v1602 = vld [vmem:[%s1577 + $0x60] sm:$0xf]
    %v1603 = vld [vmem:[%s1577 + $0x64] sm:$0xf]
    %v1604 = vld [vmem:[%s1577 + $0x68] sm:$0xf]
    %v1605 = vld [vmem:[%s1577 + $0x6c] sm:$0xf]
    %v1606 = vld [vmem:[%s1577 + $0x70] sm:$0xf]
    %v1607 = vld [vmem:[%s1577 + $0x74] sm:$0xf]
    %v1608 = vld [vmem:[%s1577 + $0x78] sm:$0xf]
    %v1609 = vld [vmem:[%s1577 + $0x7c] sm:$0xf]
    %v1642 = vunpack.c.l.b16 %v1578
    %v1643 = vunpack.c.l.b16 %v1579
    %v1644 = vunpack.c.l.b16 %v1580
    %v1645 = vunpack.c.l.b16 %v1581
    %v1646 = vunpack.c.l.b16 %v1582
    %v1647 = vunpack.c.l.b16 %v1583
    %v1648 = vunpack.c.l.b16 %v1584
    %v1649 = vunpack.c.l.b16 %v1585
    %v1650 = vunpack.c.l.b16 %v1586
    %v1651 = vunpack.c.l.b16 %v1587
    %v1652 = vunpack.c.l.b16 %v1588
    %v1653 = vunpack.c.l.b16 %v1589
    %v1654 = vunpack.c.l.b16 %v1590
    %v1655 = vunpack.c.l.b16 %v1591
    %v1656 = vunpack.c.l.b16 %v1592
    %v1657 = vunpack.c.l.b16 %v1593
    %v1658 = vunpack.c.l.b16 %v1594
    %v1659 = vunpack.c.l.b16 %v1595
    %v1660 = vunpack.c.l.b16 %v1596
    %v1661 = vunpack.c.l.b16 %v1597
    %v1662 = vunpack.c.l.b16 %v1598
    %v1663 = vunpack.c.l.b16 %v1599
    %v1664 = vunpack.c.l.b16 %v1600
    %v1665 = vunpack.c.l.b16 %v1601
    %v1666 = vunpack.c.l.b16 %v1602
    %v1667 = vunpack.c.l.b16 %v1603
    %v1668 = vunpack.c.l.b16 %v1604
    %v1669 = vunpack.c.l.b16 %v1605
    %v1670 = vunpack.c.l.b16 %v1606
    %v1671 = vunpack.c.l.b16 %v1607
    %v1672 = vunpack.c.l.b16 %v1608
    %v1673 = vunpack.c.l.b16 %v1609
    %v1674 = vpack.c.b16 %v1643, %v1642
    %v1675 = vpack.c.b16 %v1645, %v1644
    %v1676 = vpack.c.b16 %v1647, %v1646
    %v1677 = vpack.c.b16 %v1649, %v1648
    %v1678 = vpack.c.b16 %v1651, %v1650
    %v1679 = vpack.c.b16 %v1653, %v1652
    %v1680 = vpack.c.b16 %v1655, %v1654
    %v1681 = vpack.c.b16 %v1657, %v1656
    %v1682 = vpack.c.b16 %v1659, %v1658
    %v1683 = vpack.c.b16 %v1661, %v1660
    %v1684 = vpack.c.b16 %v1663, %v1662
    %v1685 = vpack.c.b16 %v1665, %v1664
    %v1686 = vpack.c.b16 %v1667, %v1666
    %v1687 = vpack.c.b16 %v1669, %v1668
    %v1688 = vpack.c.b16 %v1671, %v1670
    %v1689 = vpack.c.b16 %v1673, %v1672
    %1706 = vmatprep.subr.bf16.mxu0 0
    %1707 = vmatpush1.bf16.msra.mxu0 %v1674
    %1708 = vmatprep.subr.bf16.mxu0 0
    %1709 = vmatpush1.bf16.msra.mxu0 %v1675
    %1710 = vmatprep.subr.bf16.mxu0 0
    %1711 = vmatpush1.bf16.msra.mxu0 %v1676
    %1712 = vmatprep.subr.bf16.mxu0 0
    %1713 = vmatpush1.bf16.msra.mxu0 %v1677
    %1714 = vmatprep.subr.bf16.mxu0 0
    %1715 = vmatpush1.bf16.msra.mxu0 %v1678
    %1716 = vmatprep.subr.bf16.mxu0 0
    %1717 = vmatpush1.bf16.msra.mxu0 %v1679
    %1718 = vmatprep.subr.bf16.mxu0 0
    %1719 = vmatpush1.bf16.msra.mxu0 %v1680
    %1720 = vmatprep.subr.bf16.mxu0 0
    %1721 = vmatpush1.bf16.msra.mxu0 %v1681
    %1722 = vmatprep.subr.bf16.mxu0 0
    %1723 = vmatpush1.bf16.msra.mxu0 %v1682
    %1724 = vmatprep.subr.bf16.mxu0 0
    %1725 = vmatpush1.bf16.msra.mxu0 %v1683
    %1726 = vmatprep.subr.bf16.mxu0 0
    %1727 = vmatpush1.bf16.msra.mxu0 %v1684
    %1728 = vmatprep.subr.bf16.mxu0 0
    %1729 = vmatpush1.bf16.msra.mxu0 %v1685
    %1730 = vmatprep.subr.bf16.mxu0 0
    %1731 = vmatpush1.bf16.msra.mxu0 %v1686
    %1732 = vmatprep.subr.bf16.mxu0 0
    %1733 = vmatpush1.bf16.msra.mxu0 %v1687
    %1734 = vmatprep.subr.bf16.mxu0 0
    %1735 = vmatpush1.bf16.msra.mxu0 %v1688
    %1736 = vmatprep.subr.bf16.mxu0 0
    %1737 = vmatpush1.bf16.msra.mxu0 %v1689
    %1738 = vmatprep.mubr.bf16.mxu0 %v1576
    %1739 = vmatmul.mubr.bf16.gmra.mrb[0].mxu0 %v1575
    %v1740 = vpop.f32.mrb[0].mxu0
    %v1741 = vadd.f32 0.0, %v1740
    %v1742 = vpop.f32.mrb[0].mxu0
    %v1743 = vpop.f32.mrb[0].mxu0
    %v1744 = vpop.f32.mrb[0].mxu0
    %1745 = vdwg.mxu0
    %v1778 = vunpack.c.l.b16 %v1180
    %v1779 = vunpack.c.l.b16 %v1181
    %v1780 = vunpack.c.l.b16 %v1182
    %v1781 = vunpack.c.l.b16 %v1183
    %v1782 = vunpack.c.l.b16 %v1184
    %v1783 = vunpack.c.l.b16 %v1185
    %v1784 = vunpack.c.l.b16 %v1186
    %v1785 = vunpack.c.l.b16 %v1187
    %v1786 = vunpack.c.l.b16 %v1188
    %v1787 = vunpack.c.l.b16 %v1189
    %v1788 = vunpack.c.l.b16 %v1190
    %v1789 = vunpack.c.l.b16 %v1191
    %v1790 = vunpack.c.l.b16 %v1192
    %v1791 = vunpack.c.l.b16 %v1193
    %v1792 = vunpack.c.l.b16 %v1194
    %v1793 = vunpack.c.l.b16 %v1195
    %v1794 = vunpack.c.l.b16 %v1196
    %v1795 = vunpack.c.l.b16 %v1197
    %v1796 = vunpack.c.l.b16 %v1198
    %v1797 = vunpack.c.l.b16 %v1199
    %v1798 = vunpack.c.l.b16 %v1200
    %v1799 = vunpack.c.l.b16 %v1201
    %v1800 = vunpack.c.l.b16 %v1202
    %v1801 = vunpack.c.l.b16 %v1203
    %v1802 = vunpack.c.l.b16 %v1204
    %v1803 = vunpack.c.l.b16 %v1205
    %v1804 = vunpack.c.l.b16 %v1206
    %v1805 = vunpack.c.l.b16 %v1207
    %v1806 = vunpack.c.l.b16 %v1208
    %v1807 = vunpack.c.l.b16 %v1209
    %v1808 = vunpack.c.l.b16 %v1210
    %v1809 = vunpack.c.l.b16 %v1211
    %v1810 = vpack.c.b16 %v1779, %v1778
    %v1811 = vpack.c.b16 %v1781, %v1780
    %v1812 = vpack.c.b16 %v1783, %v1782
    %v1813 = vpack.c.b16 %v1785, %v1784
    %v1814 = vpack.c.b16 %v1787, %v1786
    %v1815 = vpack.c.b16 %v1789, %v1788
    %v1816 = vpack.c.b16 %v1791, %v1790
    %v1817 = vpack.c.b16 %v1793, %v1792
    %v1818 = vpack.c.b16 %v1795, %v1794
    %v1819 = vpack.c.b16 %v1797, %v1796
    %v1820 = vpack.c.b16 %v1799, %v1798
    %v1821 = vpack.c.b16 %v1801, %v1800
    %v1822 = vpack.c.b16 %v1803, %v1802
    %v1823 = vpack.c.b16 %v1805, %v1804
    %v1824 = vpack.c.b16 %v1807, %v1806
    %v1825 = vpack.c.b16 %v1809, %v1808
    %1842 = vmatprep.subr.bf16.mxu0 0
    %1843 = vmatpush1.bf16.msra.mxu0 %v1810
    %1844 = vmatprep.subr.bf16.mxu0 0
    %1845 = vmatpush1.bf16.msra.mxu0 %v1811
    %1846 = vmatprep.subr.bf16.mxu0 0
    %1847 = vmatpush1.bf16.msra.mxu0 %v1812
    %1848 = vmatprep.subr.bf16.mxu0 0
    %1849 = vmatpush1.bf16.msra.mxu0 %v1813
    %1850 = vmatprep.subr.bf16.mxu0 0
    %1851 = vmatpush1.bf16.msra.mxu0 %v1814
    %1852 = vmatprep.subr.bf16.mxu0 0
    %1853 = vmatpush1.bf16.msra.mxu0 %v1815
    %1854 = vmatprep.subr.bf16.mxu0 0
    %1855 = vmatpush1.bf16.msra.mxu0 %v1816
    %1856 = vmatprep.subr.bf16.mxu0 0
    %1857 = vmatpush1.bf16.msra.mxu0 %v1817
    %1858 = vmatprep.subr.bf16.mxu0 0
    %1859 = vmatpush1.bf16.msra.mxu0 %v1818
    %1860 = vmatprep.subr.bf16.mxu0 0
    %1861 = vmatpush1.bf16.msra.mxu0 %v1819
    %1862 = vmatprep.subr.bf16.mxu0 0
    %1863 = vmatpush1.bf16.msra.mxu0 %v1820
    %1864 = vmatprep.subr.bf16.mxu0 0
    %1865 = vmatpush1.bf16.msra.mxu0 %v1821
    %1866 = vmatprep.subr.bf16.mxu0 0
    %1867 = vmatpush1.bf16.msra.mxu0 %v1822
    %1868 = vmatprep.subr.bf16.mxu0 0
    %1869 = vmatpush1.bf16.msra.mxu0 %v1823
    %1870 = vmatprep.subr.bf16.mxu0 0
    %1871 = vmatpush1.bf16.msra.mxu0 %v1824
    %1872 = vmatprep.subr.bf16.mxu0 0
    %1873 = vmatpush1.bf16.msra.mxu0 %v1825
    %1874 = vmatprep.mubr.bf16.mxu0 %v1179
    %1875 = vmatmul.mubr.bf16.gmra.mrb[0].mxu0 %v1178
    %v1876 = vpop.f32.mrb[0].mxu0
    %v1877 = vadd.f32 %v1741, %v1876
    %v1878 = vpop.f32.mrb[0].mxu0
    %v1879 = vpop.f32.mrb[0].mxu0
    %v1880 = vpop.f32.mrb[0].mxu0
    %1881 = vdwg.mxu0
    %v1882 = vadd.f32 %v809, %v811
    %1883 = vadd.xlane.f32.xlu0 %v1882
    %v1884 = vpop.xlane.xlu0 %1883
    %v1885 = vmul.f32 %v1884, %v818
    %v1886 = vmul.f32 %v809, %v809
    %v1887 = vmul.f32 %v811, %v811
    %v1888 = vadd.f32 %v1886, %v1887
    %1889 = vadd.xlane.f32.xlu0 %v1888
    %v1890 = vpop.xlane.xlu0 %1889
    %v1891 = vmul.f32 %v1890, %v818
    %v1892 = vmul.f32 %v1885, %v1885
    %v1893 = vsub.f32 %v1891, %v1892
    %v1894 = vadd.f32 %v1893, 1e-05
    %v1895 = vrsqrt.pop %v1894
    %v1897 = vlaneseq
    %v1898 = vshrl.u32 %v1897, 7
    %v1899 = vsub.s32 0, %v1898
    %v1900 = vrot.slane %v108, %v1899
    %v1901 = vlaneseq
    %v1902 = vshrl.u32 %v1901, 7
    %v1903 = vsub.s32 4, %v1902
    %v1904 = vrot.slane %v108, %v1903
    %v1907 = vlaneseq
    %v1908 = vshrl.u32 %v1907, 7
    %v1909 = vsub.s32 0, %v1908
    %v1910 = vrot.slane %v1900, %v1909
    %v1911 = vlaneseq
    %v1912 = vshrl.u32 %v1911, 7
    %v1913 = vsub.s32 0, %v1912
    %v1914 = vrot.slane %v1904, %v1913
    %v1915 = vmul.f32 %v1910, %v1895
    %v1916 = vmul.f32 %v1914, %v1895
    %v1917 = vmul.f32 %v809, %v1915
    %v1918 = vmul.f32 %v811, %v1916
    %v1919 = vmul.f32 %v1885, %v1915
    %v1920 = vmul.f32 %v1885, %v1916
    %v1921 = vlaneseq
    %v1922 = vshrl.u32 %v1921, 7
    %v1923 = vsub.s32 1, %v1922
    %v1924 = vrot.slane %v108, %v1923
    %v1925 = vlaneseq
    %v1926 = vshrl.u32 %v1925, 7
    %v1927 = vsub.s32 5, %v1926
    %v1928 = vrot.slane %v108, %v1927
    %v1931 = vlaneseq
    %v1932 = vshrl.u32 %v1931, 7
    %v1933 = vsub.s32 1, %v1932
    %v1934 = vrot.slane %v1924, %v1933
    %v1935 = vlaneseq
    %v1936 = vshrl.u32 %v1935, 7
    %v1937 = vsub.s32 1, %v1936
    %v1938 = vrot.slane %v1928, %v1937
    %v1939 = vsub.f32 %v1934, %v1919
    %v1940 = vsub.f32 %v1938, %v1920
    %v1941 = vadd.f32 %v1917, %v1939
    %v1942 = vadd.f32 %v1918, %v1940
    %v1943 = vmax.f32 %v1941, 0.0
    %v1944 = vmax.f32 %v1942, 0.0
    %v1945 = vpack.c.bf16 %v1943, %v1943
    %v1946 = vpack.c.bf16 %v1944, %v1944
    %s1947 = scalar_lea.vmem [#allocation7], 512
    %v1948 = vld [vmem:[%s1947] sm:$0xff]
    %v1949 = vld [vmem:[%s1947 + $0x8] sm:$0xff]
    %v1950 = vld [vmem:[%s1947 + $0x10] sm:$0xff]
    %v1951 = vld [vmem:[%s1947 + $0x18] sm:$0xff]
    %v1952 = vld [vmem:[%s1947 + $0x20] sm:$0xff]
    %v1953 = vld [vmem:[%s1947 + $0x28] sm:$0xff]
    %v1954 = vld [vmem:[%s1947 + $0x30] sm:$0xff]
    %v1955 = vld [vmem:[%s1947 + $0x38] sm:$0xff]
    %v1956 = vld [vmem:[%s1947 + $0x40] sm:$0xff]
    %v1957 = vld [vmem:[%s1947 + $0x48] sm:$0xff]
    %v1958 = vld [vmem:[%s1947 + $0x50] sm:$0xff]
    %v1959 = vld [vmem:[%s1947 + $0x58] sm:$0xff]
    %v1960 = vld [vmem:[%s1947 + $0x60] sm:$0xff]
    %v1961 = vld [vmem:[%s1947 + $0x68] sm:$0xff]
    %v1962 = vld [vmem:[%s1947 + $0x70] sm:$0xff]
    %v1963 = vld [vmem:[%s1947 + $0x78] sm:$0xff]
    %v1964 = vld [vmem:[%s1947 + $0x80] sm:$0xff]
    %v1965 = vld [vmem:[%s1947 + $0x88] sm:$0xff]
    %v1966 = vld [vmem:[%s1947 + $0x90] sm:$0xff]
    %v1967 = vld [vmem:[%s1947 + $0x98] sm:$0xff]
    %v1968 = vld [vmem:[%s1947 + $0xa0] sm:$0xff]
    %v1969 = vld [vmem:[%s1947 + $0xa8] sm:$0xff]
    %v1970 = vld [vmem:[%s1947 + $0xb0] sm:$0xff]
    %v1971 = vld [vmem:[%s1947 + $0xb8] sm:$0xff]
    %v1972 = vld [vmem:[%s1947 + $0xc0] sm:$0xff]
    %v1973 = vld [vmem:[%s1947 + $0xc8] sm:$0xff]
    %v1974 = vld [vmem:[%s1947 + $0xd0] sm:$0xff]
    %v1975 = vld [vmem:[%s1947 + $0xd8] sm:$0xff]
    %v1976 = vld [vmem:[%s1947 + $0xe0] sm:$0xff]
    %v1977 = vld [vmem:[%s1947 + $0xe8] sm:$0xff]
    %v1978 = vld [vmem:[%s1947 + $0xf0] sm:$0xff]
    %v1979 = vld [vmem:[%s1947 + $0xf8] sm:$0xff]
    %v2012 = vunpack.c.l.b16 %v1948
    %v2013 = vunpack.c.h.b16 %v1948
    %v2014 = vunpack.c.l.b16 %v1949
    %v2015 = vunpack.c.h.b16 %v1949
    %v2016 = vunpack.c.l.b16 %v1950
    %v2017 = vunpack.c.h.b16 %v1950
    %v2018 = vunpack.c.l.b16 %v1951
    %v2019 = vunpack.c.h.b16 %v1951
    %v2020 = vunpack.c.l.b16 %v1952
    %v2021 = vunpack.c.h.b16 %v1952
    %v2022 = vunpack.c.l.b16 %v1953
    %v2023 = vunpack.c.h.b16 %v1953
    %v2024 = vunpack.c.l.b16 %v1954
    %v2025 = vunpack.c.h.b16 %v1954
    %v2026 = vunpack.c.l.b16 %v1955
    %v2027 = vunpack.c.h.b16 %v1955
    %v2028 = vunpack.c.l.b16 %v1956
    %v2029 = vunpack.c.h.b16 %v1956
    %v2030 = vunpack.c.l.b16 %v1957
    %v2031 = vunpack.c.h.b16 %v1957
    %v2032 = vunpack.c.l.b16 %v1958
    %v2033 = vunpack.c.h.b16 %v1958
    %v2034 = vunpack.c.l.b16 %v1959
    %v2035 = vunpack.c.h.b16 %v1959
    %v2036 = vunpack.c.l.b16 %v1960
    %v2037 = vunpack.c.h.b16 %v1960
    %v2038 = vunpack.c.l.b16 %v1961
    %v2039 = vunpack.c.h.b16 %v1961
    %v2040 = vunpack.c.l.b16 %v1962
    %v2041 = vunpack.c.h.b16 %v1962
    %v2042 = vunpack.c.l.b16 %v1963
    %v2043 = vunpack.c.h.b16 %v1963
    %v2044 = vunpack.c.l.b16 %v1964
    %v2045 = vunpack.c.h.b16 %v1964
    %v2046 = vunpack.c.l.b16 %v1965
    %v2047 = vunpack.c.h.b16 %v1965
    %v2048 = vunpack.c.l.b16 %v1966
    %v2049 = vunpack.c.h.b16 %v1966
    %v2050 = vunpack.c.l.b16 %v1967
    %v2051 = vunpack.c.h.b16 %v1967
    %v2052 = vunpack.c.l.b16 %v1968
    %v2053 = vunpack.c.h.b16 %v1968
    %v2054 = vunpack.c.l.b16 %v1969
    %v2055 = vunpack.c.h.b16 %v1969
    %v2056 = vunpack.c.l.b16 %v1970
    %v2057 = vunpack.c.h.b16 %v1970
    %v2058 = vunpack.c.l.b16 %v1971
    %v2059 = vunpack.c.h.b16 %v1971
    %v2060 = vunpack.c.l.b16 %v1972
    %v2061 = vunpack.c.h.b16 %v1972
    %v2062 = vunpack.c.l.b16 %v1973
    %v2063 = vunpack.c.h.b16 %v1973
    %v2064 = vunpack.c.l.b16 %v1974
    %v2065 = vunpack.c.h.b16 %v1974
    %v2066 = vunpack.c.l.b16 %v1975
    %v2067 = vunpack.c.h.b16 %v1975
    %v2068 = vunpack.c.l.b16 %v1976
    %v2069 = vunpack.c.h.b16 %v1976
    %v2070 = vunpack.c.l.b16 %v1977
    %v2071 = vunpack.c.h.b16 %v1977
    %v2072 = vunpack.c.l.b16 %v1978
    %v2073 = vunpack.c.h.b16 %v1978
    %v2074 = vunpack.c.l.b16 %v1979
    %v2075 = vunpack.c.h.b16 %v1979
    %v2076 = vpack.c.b16 %v2014, %v2012
    %v2077 = vpack.c.b16 %v2015, %v2013
    %v2078 = vpack.c.b16 %v2018, %v2016
    %v2079 = vpack.c.b16 %v2019, %v2017
    %v2080 = vpack.c.b16 %v2022, %v2020
    %v2081 = vpack.c.b16 %v2023, %v2021
    %v2082 = vpack.c.b16 %v2026, %v2024
    %v2083 = vpack.c.b16 %v2027, %v2025
    %v2084 = vpack.c.b16 %v2030, %v2028
    %v2085 = vpack.c.b16 %v2031, %v2029
    %v2086 = vpack.c.b16 %v2034, %v2032
    %v2087 = vpack.c.b16 %v2035, %v2033
    %v2088 = vpack.c.b16 %v2038, %v2036
    %v2089 = vpack.c.b16 %v2039, %v2037
    %v2090 = vpack.c.b16 %v2042, %v2040
    %v2091 = vpack.c.b16 %v2043, %v2041
    %v2092 = vpack.c.b16 %v2046, %v2044
    %v2093 = vpack.c.b16 %v2047, %v2045
    %v2094 = vpack.c.b16 %v2050, %v2048
    %v2095 = vpack.c.b16 %v2051, %v2049
    %v2096 = vpack.c.b16 %v2054, %v2052
    %v2097 = vpack.c.b16 %v2055, %v2053
    %v2098 = vpack.c.b16 %v2058, %v2056
    %v2099 = vpack.c.b16 %v2059, %v2057
    %v2100 = vpack.c.b16 %v2062, %v2060
    %v2101 = vpack.c.b16 %v2063, %v2061
    %v2102 = vpack.c.b16 %v2066, %v2064
    %v2103 = vpack.c.b16 %v2067, %v2065
    %v2104 = vpack.c.b16 %v2070, %v2068
    %v2105 = vpack.c.b16 %v2071, %v2069
    %v2106 = vpack.c.b16 %v2074, %v2072
    %v2107 = vpack.c.b16 %v2075, %v2073
    %2140 = vmatprep.subr.bf16.mxu0 %v2077
    %2141 = vmatpush1.bf16.msra.mxu0 %v2076
    %2142 = vmatprep.subr.bf16.mxu0 %v2079
    %2143 = vmatpush1.bf16.msra.mxu0 %v2078
    %2144 = vmatprep.subr.bf16.mxu0 %v2081
    %2145 = vmatpush1.bf16.msra.mxu0 %v2080
    %2146 = vmatprep.subr.bf16.mxu0 %v2083
    %2147 = vmatpush1.bf16.msra.mxu0 %v2082
    %2148 = vmatprep.subr.bf16.mxu0 %v2085
    %2149 = vmatpush1.bf16.msra.mxu0 %v2084
    %2150 = vmatprep.subr.bf16.mxu0 %v2087
    %2151 = vmatpush1.bf16.msra.mxu0 %v2086
    %2152 = vmatprep.subr.bf16.mxu0 %v2089
    %2153 = vmatpush1.bf16.msra.mxu0 %v2088
    %2154 = vmatprep.subr.bf16.mxu0 %v2091
    %2155 = vmatpush1.bf16.msra.mxu0 %v2090
    %2156 = vmatprep.subr.bf16.mxu0 %v2093
    %2157 = vmatpush1.bf16.msra.mxu0 %v2092
    %2158 = vmatprep.subr.bf16.mxu0 %v2095
    %2159 = vmatpush1.bf16.msra.mxu0 %v2094
    %2160 = vmatprep.subr.bf16.mxu0 %v2097
    %2161 = vmatpush1.bf16.msra.mxu0 %v2096
    %2162 = vmatprep.subr.bf16.mxu0 %v2099
    %2163 = vmatpush1.bf16.msra.mxu0 %v2098
    %2164 = vmatprep.subr.bf16.mxu0 %v2101
    %2165 = vmatpush1.bf16.msra.mxu0 %v2100
    %2166 = vmatprep.subr.bf16.mxu0 %v2103
    %2167 = vmatpush1.bf16.msra.mxu0 %v2102
    %2168 = vmatprep.subr.bf16.mxu0 %v2105
    %2169 = vmatpush1.bf16.msra.mxu0 %v2104
    %2170 = vmatprep.subr.bf16.mxu0 %v2107
    %2171 = vmatpush1.bf16.msra.mxu0 %v2106
    %2172 = vmatprep.mubr.bf16.mxu0 %v1946
    %2173 = vmatmul.mubr.bf16.gmra.mrb[0].mxu0 %v1945
    %v2174 = vpop.f32.mrb[0].mxu0
    %v2175 = vadd.f32 0.0, %v2174
    %v2176 = vpop.f32.mrb[0].mxu0
    %v2177 = vadd.f32 0.0, %v2176
    %v2178 = vpop.f32.mrb[0].mxu0
    %v2179 = vpop.f32.mrb[0].mxu0
    %2180 = vdwg.mxu0
    %v2181 = vadd.f32 %v2175, %v2177
    %2182 = vadd.xlane.f32.xlu0 %v2181
    %v2183 = vpop.xlane.xlu0 %2182
    %v2184 = vmul.f32 %v2183, %v818
    %v2185 = vmul.f32 %v2175, %v2175
    %v2186 = vmul.f32 %v2177, %v2177
    %v2187 = vadd.f32 %v2185, %v2186
    %2188 = vadd.xlane.f32.xlu0 %v2187
    %v2189 = vpop.xlane.xlu0 %2188
    %v2190 = vmul.f32 %v2189, %v818
    %v2191 = vmul.f32 %v2184, %v2184
    %v2192 = vsub.f32 %v2190, %v2191
    %v2193 = vadd.f32 %v2192, 1e-05
    %v2194 = vrsqrt.pop %v2193
    %v2195 = vlaneseq
    %v2196 = vshrl.u32 %v2195, 7
    %v2197 = vsub.s32 2, %v2196
    %v2198 = vrot.slane %v108, %v2197
    %v2199 = vlaneseq
    %v2200 = vshrl.u32 %v2199, 7
    %v2201 = vsub.s32 6, %v2200
    %v2202 = vrot.slane %v108, %v2201
    %v2205 = vlaneseq
    %v2206 = vshrl.u32 %v2205, 7
    %v2207 = vsub.s32 2, %v2206
    %v2208 = vrot.slane %v2198, %v2207
    %v2209 = vlaneseq
    %v2210 = vshrl.u32 %v2209, 7
    %v2211 = vsub.s32 2, %v2210
    %v2212 = vrot.slane %v2202, %v2211
    %v2213 = vmul.f32 %v2208, %v2194
    %v2214 = vmul.f32 %v2212, %v2194
    %v2215 = vmul.f32 %v2175, %v2213
    %v2216 = vmul.f32 %v2177, %v2214
    %v2217 = vmul.f32 %v2184, %v2213
    %v2218 = vmul.f32 %v2184, %v2214
    %v2219 = vlaneseq
    %v2220 = vshrl.u32 %v2219, 7
    %v2221 = vsub.s32 3, %v2220
    %v2222 = vrot.slane %v108, %v2221
    %v2223 = vlaneseq
    %v2224 = vshrl.u32 %v2223, 7
    %v2225 = vsub.s32 7, %v2224
    %v2226 = vrot.slane %v108, %v2225
    %v2229 = vlaneseq
    %v2230 = vshrl.u32 %v2229, 7
    %v2231 = vsub.s32 3, %v2230
    %v2232 = vrot.slane %v2222, %v2231
    %v2233 = vlaneseq
    %v2234 = vshrl.u32 %v2233, 7
    %v2235 = vsub.s32 3, %v2234
    %v2236 = vrot.slane %v2226, %v2235
    %v2237 = vsub.f32 %v2232, %v2217
    %v2238 = vsub.f32 %v2236, %v2218
    %v2239 = vadd.f32 %v2215, %v2237
    %v2240 = vadd.f32 %v2216, %v2238
    %v2241 = vadd.f32 %v2239, %v104
    %v2242 = vadd.f32 %v2240, %v105
    %v2243 = vmax.f32 %v2241, 0.0
    %v2244 = vmax.f32 %v2242, 0.0
    %v2245 = vpack.c.bf16 %v2243, %v2243
    %v2246 = vpack.c.bf16 %v2244, %v2244
    %s2247 = scalar_lea.vmem [#allocation10], 256
    %v2248 = vld [vmem:[%s2247] sm:$0xf]
    %v2249 = vld [vmem:[%s2247 + $0x4] sm:$0xf]
    %v2250 = vld [vmem:[%s2247 + $0x8] sm:$0xf]
    %v2251 = vld [vmem:[%s2247 + $0xc] sm:$0xf]
    %v2252 = vld [vmem:[%s2247 + $0x10] sm:$0xf]
    %v2253 = vld [vmem:[%s2247 + $0x14] sm:$0xf]
    %v2254 = vld [vmem:[%s2247 + $0x18] sm:$0xf]
    %v2255 = vld [vmem:[%s2247 + $0x1c] sm:$0xf]
    %v2256 = vld [vmem:[%s2247 + $0x20] sm:$0xf]
    %v2257 = vld [vmem:[%s2247 + $0x24] sm:$0xf]
    %v2258 = vld [vmem:[%s2247 + $0x28] sm:$0xf]
    %v2259 = vld [vmem:[%s2247 + $0x2c] sm:$0xf]
    %v2260 = vld [vmem:[%s2247 + $0x30] sm:$0xf]
    %v2261 = vld [vmem:[%s2247 + $0x34] sm:$0xf]
    %v2262 = vld [vmem:[%s2247 + $0x38] sm:$0xf]
    %v2263 = vld [vmem:[%s2247 + $0x3c] sm:$0xf]
    %v2264 = vld [vmem:[%s2247 + $0x40] sm:$0xf]
    %v2265 = vld [vmem:[%s2247 + $0x44] sm:$0xf]
    %v2266 = vld [vmem:[%s2247 + $0x48] sm:$0xf]
    %v2267 = vld [vmem:[%s2247 + $0x4c] sm:$0xf]
    %v2268 = vld [vmem:[%s2247 + $0x50] sm:$0xf]
    %v2269 = vld [vmem:[%s2247 + $0x54] sm:$0xf]
    %v2270 = vld [vmem:[%s2247 + $0x58] sm:$0xf]
    %v2271 = vld [vmem:[%s2247 + $0x5c] sm:$0xf]
    %v2272 = vld [vmem:[%s2247 + $0x60] sm:$0xf]
    %v2273 = vld [vmem:[%s2247 + $0x64] sm:$0xf]
    %v2274 = vld [vmem:[%s2247 + $0x68] sm:$0xf]
    %v2275 = vld [vmem:[%s2247 + $0x6c] sm:$0xf]
    %v2276 = vld [vmem:[%s2247 + $0x70] sm:$0xf]
    %v2277 = vld [vmem:[%s2247 + $0x74] sm:$0xf]
    %v2278 = vld [vmem:[%s2247 + $0x78] sm:$0xf]
    %v2279 = vld [vmem:[%s2247 + $0x7c] sm:$0xf]
    %v2312 = vunpack.c.l.b16 %v2248
    %v2313 = vunpack.c.l.b16 %v2249
    %v2314 = vunpack.c.l.b16 %v2250
    %v2315 = vunpack.c.l.b16 %v2251
    %v2316 = vunpack.c.l.b16 %v2252
    %v2317 = vunpack.c.l.b16 %v2253
    %v2318 = vunpack.c.l.b16 %v2254
    %v2319 = vunpack.c.l.b16 %v2255
    %v2320 = vunpack.c.l.b16 %v2256
    %v2321 = vunpack.c.l.b16 %v2257
    %v2322 = vunpack.c.l.b16 %v2258
    %v2323 = vunpack.c.l.b16 %v2259
    %v2324 = vunpack.c.l.b16 %v2260
    %v2325 = vunpack.c.l.b16 %v2261
    %v2326 = vunpack.c.l.b16 %v2262
    %v2327 = vunpack.c.l.b16 %v2263
    %v2328 = vunpack.c.l.b16 %v2264
    %v2329 = vunpack.c.l.b16 %v2265
    %v2330 = vunpack.c.l.b16 %v2266
    %v2331 = vunpack.c.l.b16 %v2267
    %v2332 = vunpack.c.l.b16 %v2268
    %v2333 = vunpack.c.l.b16 %v2269
    %v2334 = vunpack.c.l.b16 %v2270
    %v2335 = vunpack.c.l.b16 %v2271
    %v2336 = vunpack.c.l.b16 %v2272
    %v2337 = vunpack.c.l.b16 %v2273
    %v2338 = vunpack.c.l.b16 %v2274
    %v2339 = vunpack.c.l.b16 %v2275
    %v2340 = vunpack.c.l.b16 %v2276
    %v2341 = vunpack.c.l.b16 %v2277
    %v2342 = vunpack.c.l.b16 %v2278
    %v2343 = vunpack.c.l.b16 %v2279
    %v2344 = vpack.c.b16 %v2313, %v2312
    %v2345 = vpack.c.b16 %v2315, %v2314
    %v2346 = vpack.c.b16 %v2317, %v2316
    %v2347 = vpack.c.b16 %v2319, %v2318
    %v2348 = vpack.c.b16 %v2321, %v2320
    %v2349 = vpack.c.b16 %v2323, %v2322
    %v2350 = vpack.c.b16 %v2325, %v2324
    %v2351 = vpack.c.b16 %v2327, %v2326
    %v2352 = vpack.c.b16 %v2329, %v2328
    %v2353 = vpack.c.b16 %v2331, %v2330
    %v2354 = vpack.c.b16 %v2333, %v2332
    %v2355 = vpack.c.b16 %v2335, %v2334
    %v2356 = vpack.c.b16 %v2337, %v2336
    %v2357 = vpack.c.b16 %v2339, %v2338
    %v2358 = vpack.c.b16 %v2341, %v2340
    %v2359 = vpack.c.b16 %v2343, %v2342
    %2376 = vmatprep.subr.bf16.mxu0 0
    %2377 = vmatpush1.bf16.msra.mxu0 %v2344
    %2378 = vmatprep.subr.bf16.mxu0 0
    %2379 = vmatpush1.bf16.msra.mxu0 %v2345
    %2380 = vmatprep.subr.bf16.mxu0 0
    %2381 = vmatpush1.bf16.msra.mxu0 %v2346
    %2382 = vmatprep.subr.bf16.mxu0 0
    %2383 = vmatpush1.bf16.msra.mxu0 %v2347
    %2384 = vmatprep.subr.bf16.mxu0 0
    %2385 = vmatpush1.bf16.msra.mxu0 %v2348
    %2386 = vmatprep.subr.bf16.mxu0 0
    %2387 = vmatpush1.bf16.msra.mxu0 %v2349
    %2388 = vmatprep.subr.bf16.mxu0 0
    %2389 = vmatpush1.bf16.msra.mxu0 %v2350
    %2390 = vmatprep.subr.bf16.mxu0 0
    %2391 = vmatpush1.bf16.msra.mxu0 %v2351
    %2392 = vmatprep.subr.bf16.mxu0 0
    %2393 = vmatpush1.bf16.msra.mxu0 %v2352
    %2394 = vmatprep.subr.bf16.mxu0 0
    %2395 = vmatpush1.bf16.msra.mxu0 %v2353
    %2396 = vmatprep.subr.bf16.mxu0 0
    %2397 = vmatpush1.bf16.msra.mxu0 %v2354
    %2398 = vmatprep.subr.bf16.mxu0 0
    %2399 = vmatpush1.bf16.msra.mxu0 %v2355
    %2400 = vmatprep.subr.bf16.mxu0 0
    %2401 = vmatpush1.bf16.msra.mxu0 %v2356
    %2402 = vmatprep.subr.bf16.mxu0 0
    %2403 = vmatpush1.bf16.msra.mxu0 %v2357
    %2404 = vmatprep.subr.bf16.mxu0 0
    %2405 = vmatpush1.bf16.msra.mxu0 %v2358
    %2406 = vmatprep.subr.bf16.mxu0 0
    %2407 = vmatpush1.bf16.msra.mxu0 %v2359
    %2408 = vmatprep.mubr.bf16.mxu0 %v2246
    %2409 = vmatmul.mubr.bf16.gmra.mrb[0].mxu0 %v2245
    %v2410 = vpop.f32.mrb[0].mxu0
    %v2411 = vadd.f32 0.0, %v2410
    %v2412 = vpop.f32.mrb[0].mxu0
    %v2413 = vpop.f32.mrb[0].mxu0
    %v2414 = vpop.f32.mrb[0].mxu0
    %2415 = vdwg.mxu0
    %v2416 = vadd.f32 %v1877, %v2411
    %v2417 = vld [vmem:[#allocation11] sm:$0x1]
    %v2419 = vlaneseq
    %v2420 = vshrl.u32 %v2419, 7
    %v2421 = vsub.s32 0, %v2420
    %v2422 = vrot.slane %v2417, %v2421
    %v2424 = vadd.f32 %v2416, %v2422
    %2425 = vst [vmem:[#allocation13] sm:$0xff] %v2424
    // Predicated region
    $region50: #{tpu_custom_call.1} parent=1 // pred_check
      _
    $region51: #{tpu_custom_call.1} parent=1 // pred_check_branch
      %2427 = sbr.rel (0) target = $region53
    $region52: #{tpu_custom_call.1} parent=1 // pred_region
      %s2429 = ssub.s32 128, 128
      %2430 = vsyncadd [#allocation4], %s2429
      %s2432 = sshll.u32 [#allocation13], 4
      %s2433 = int_to_ptr.vmem [resolvable:$true] %s2432
      %2435 = dma.vmem_to_hbm [thread:$0]  %s2433, 128, %s6, [#allocation4]
    $region53: #{tpu_custom_call.1} parent=1 // pred_fallthru
      _
    // Predicated region
    $region54: #{tpu_custom_call.1} parent=1 // pred_check
      _
    $region55: #{tpu_custom_call.1} parent=1 // pred_check_branch
      %2437 = sbr.rel (0) target = $region57
    $region56: #{tpu_custom_call.1} parent=1 // pred_region
      %2438 = dma.done [#allocation4], 128
    $region57: #{tpu_custom_call.1} parent=1 // pred_fallthru
      _
    %2439 = vsyncpa [#allocation3], 1
    %2440 = vsyncpa [#allocation6], 1
    %2441 = vsyncpa [#allocation9], 1
    %2442 = vsyncpa [#allocation12], 1
    %2443 = vsyncpa [#allocation4], 1

// kernel: tpu_custom_call.1
$region0: #{tpu_custom_call.1}
  #allocation0 [shape = 'u32[]', space=smem, size = 0x4, offset = 0x4, fixed_abs, tag = 'smem constant byte address 0x4 - core index']
  #allocation1 [shape = 'u32[144,128]{1,0:T(1,128)}', space=vmem, size = 0x12000, scoped, tag = 'internal scratch']
  %s0 = inlined_call_operand.hbm [shape: bf16[8,256], index: 0, kind: input, shape index: {}]
  %s1 = inlined_call_operand.hbm [shape: bf16[256,768], index: 1, kind: input, shape index: {}]
  %s2 = inlined_call_operand.hbm [shape: bf16[3,256,256], index: 2, kind: input, shape index: {}]
  %s3 = inlined_call_operand.hbm [shape: f32[3,4,256], index: 3, kind: input, shape index: {}]
  %s4 = inlined_call_operand.hbm [shape: bf16[3,256,128], index: 4, kind: input, shape index: {}]
  %s5 = inlined_call_operand.hbm [shape: f32[1,128], index: 5, kind: input, shape index: {}]
  %s6 = inlined_call_operand.hbm [shape: f32[8,128], index: 6, kind: output, shape index: {}]
  %s7 = sld [smem:[#allocation0]]
  $region58: #{tpu_custom_call.1} parent=0
    _
  %s9 = ssub.s32 1, %s7
  %s10 = scalar_select 0, %s9, %s7
  $region1: #{tpu_custom_call.1} parent=0
    #allocation2 [shape = 'u8[4096]{0}', space=vmem, size = 0x1000, scoped, tag = 'input window, operand 0, single buffered']
    #allocation3 [shape = 's32[1]{0}', space=sflag, size = 0x4, scoped, tag = 'scoped memory for tpu_custom_call.1']
    #allocation4 [shape = 's32[1]{0}', space=sflag, size = 0x4, scoped, tag = 'scoped memory for tpu_custom_call.1']
    #allocation5 [shape = 'u8[393216]{0}', space=vmem, size = 0x60000, scoped, tag = 'input window, operand 1, single buffered']
    #allocation6 [shape = 's32[1]{0}', space=sflag, size = 0x4, scoped, tag = 'scoped memory for tpu_custom_call.1']
    #allocation7 [shape = 'u8[393216]{0}', space=vmem, size = 0x60000, scoped, tag = 'input window, operand 2, single buffered']
    #allocation8 [shape = 'u8[12288]{0}', space=vmem, size = 0x3000, scoped, tag = 'input window, operand 3, single buffered']
    #allocation9 [shape = 's32[1]{0}', space=sflag, size = 0x4, scoped, tag = 'scoped memory for tpu_custom_call.1']
    #allocation10 [shape = 'u8[196608]{0}', space=vmem, size = 0x30000, scoped, tag = 'input window, operand 4, single buffered']
    #allocation11 [shape = 'u8[512]{0}', space=vmem, size = 0x400, scoped, tag = 'input window, operand 5, single buffered']
    #allocation12 [shape = 's32[1]{0}', space=sflag, size = 0x4, scoped, tag = 'scoped memory for tpu_custom_call.1']
    #allocation13 [shape = 'u8[4096]{0}', space=vmem, size = 0x1000, scoped, tag = 'output window, operand 0, single buffered']
    %11 = vsyncpa [#allocation3], 0
    %12 = vsyncpa [#allocation6], 0
    %13 = vsyncpa [#allocation9], 0
    %14 = vsyncpa [#allocation12], 0
    %15 = vsyncpa [#allocation4], 0
    // Predicated region
    $region2: #{tpu_custom_call.1} parent=1 // pred_check
      _
    $region3: #{tpu_custom_call.1} parent=1 // pred_check_branch
      %17 = sbr.rel (0) target = $region5
    $region4: #{tpu_custom_call.1} parent=1 // pred_region
      %s19 = ssub.s32 128, 128
      %20 = vsyncadd [#allocation3], %s19
      %s22 = sshll.u32 [#allocation2], 4
      %s23 = int_to_ptr.vmem [resolvable:$true] %s22
      %25 = dma.hbm_to_vmem [thread:$0]  %s0, 128, %s23, [#allocation3]
    $region5: #{tpu_custom_call.1} parent=1 // pred_fallthru
      _
    // Predicated region
    $region6: #{tpu_custom_call.1} parent=1 // pred_check
      _
    $region7: #{tpu_custom_call.1} parent=1 // pred_check_branch
      %27 = sbr.rel (0) target = $region9
    $region8: #{tpu_custom_call.1} parent=1 // pred_region
      %s29 = ssub.s32 12288, 12288
      %30 = vsyncadd [#allocation6], %s29
      %s31 = sshll.u32 [#allocation5], 4
      %s32 = int_to_ptr.vmem [resolvable:$true] %s31
      %37 = dma.hbm_to_vmem [thread:$0]  %s1, 12288, %s32, [#allocation6], 384, 384, 24
    $region9: #{tpu_custom_call.1} parent=1 // pred_fallthru
      _
    // Predicated region
    $region10: #{tpu_custom_call.1} parent=1 // pred_check
      _
    $region11: #{tpu_custom_call.1} parent=1 // pred_check_branch
      %39 = sbr.rel (0) target = $region13
    $region12: #{tpu_custom_call.1} parent=1 // pred_region
      %s41 = ssub.s32 12288, 12288
      %42 = vsyncadd [#allocation6], %s41
      %s43 = sshll.u32 [#allocation7], 4
      %s44 = int_to_ptr.vmem [resolvable:$true] %s43
      %49 = dma.hbm_to_vmem [thread:$0]  %s2, 12288, %s44, [#allocation6], 128, 128, 8
    $region13: #{tpu_custom_call.1} parent=1 // pred_fallthru
      _
    // Predicated region
    $region14: #{tpu_custom_call.1} parent=1 // pred_check
      _
    $region15: #{tpu_custom_call.1} parent=1 // pred_check_branch
      %51 = sbr.rel (0) target = $region17
    $region16: #{tpu_custom_call.1} parent=1 // pred_region
      %s53 = ssub.s32 384, 384
      %54 = vsyncadd [#allocation9], %s53
      %s55 = sshll.u32 [#allocation8], 4
      %s56 = int_to_ptr.vmem [resolvable:$true] %s55
      %61 = dma.hbm_to_vmem [thread:$0]  %s3, 384, %s56, [#allocation9], 128, 128, 8
    $region17: #{tpu_custom_call.1} parent=1 // pred_fallthru
      _
    // Predicated region
    $region18: #{tpu_custom_call.1} parent=1 // pred_check
      _
    $region19: #{tpu_custom_call.1} parent=1 // pred_check_branch
      %63 = sbr.rel (0) target = $region21
    $region20: #{tpu_custom_call.1} parent=1 // pred_region
      %s65 = ssub.s32 6144, 6144
      %66 = vsyncadd [#allocation9], %s65
      %s67 = sshll.u32 [#allocation10], 4
      %s68 = int_to_ptr.vmem [resolvable:$true] %s67
      %73 = dma.hbm_to_vmem [thread:$0]  %s4, 6144, %s68, [#allocation9], 64, 64, 4
    $region21: #{tpu_custom_call.1} parent=1 // pred_fallthru
      _
    // Predicated region
    $region22: #{tpu_custom_call.1} parent=1 // pred_check
      _
    $region23: #{tpu_custom_call.1} parent=1 // pred_check_branch
      %75 = sbr.rel (0) target = $region25
    $region24: #{tpu_custom_call.1} parent=1 // pred_region
      %s77 = ssub.s32 16, 16
      %78 = vsyncadd [#allocation12], %s77
      %s80 = sshll.u32 [#allocation11], 4
      %s81 = int_to_ptr.vmem [resolvable:$true] %s80
      %83 = dma.hbm_to_vmem [thread:$0]  %s5, 16, %s81, [#allocation12]
    $region25: #{tpu_custom_call.1} parent=1 // pred_fallthru
      _
    // Predicated region
    $region26: #{tpu_custom_call.1} parent=1 // pred_check
      _
    $region27: #{tpu_custom_call.1} parent=1 // pred_check_branch
      %85 = sbr.rel (0) target = $region29
    $region28: #{tpu_custom_call.1} parent=1 // pred_region
      %86 = dma.done [#allocation3], 128
    $region29: #{tpu_custom_call.1} parent=1 // pred_fallthru
      _
    // Predicated region
    $region30: #{tpu_custom_call.1} parent=1 // pred_check
      _
    $region31: #{tpu_custom_call.1} parent=1 // pred_check_branch
      %88 = sbr.rel (0) target = $region33
    $region32: #{tpu_custom_call.1} parent=1 // pred_region
      %89 = dma.done [#allocation6], 12288
    $region33: #{tpu_custom_call.1} parent=1 // pred_fallthru
      _
    // Predicated region
    $region34: #{tpu_custom_call.1} parent=1 // pred_check
      _
    $region35: #{tpu_custom_call.1} parent=1 // pred_check_branch
      %91 = sbr.rel (0) target = $region37
    $region36: #{tpu_custom_call.1} parent=1 // pred_region
      %92 = dma.done [#allocation6], 12288
    $region37: #{tpu_custom_call.1} parent=1 // pred_fallthru
      _
    // Predicated region
    $region38: #{tpu_custom_call.1} parent=1 // pred_check
      _
    $region39: #{tpu_custom_call.1} parent=1 // pred_check_branch
      %94 = sbr.rel (0) target = $region41
    $region40: #{tpu_custom_call.1} parent=1 // pred_region
      %95 = dma.done [#allocation9], 384
    $region41: #{tpu_custom_call.1} parent=1 // pred_fallthru
      _
    // Predicated region
    $region42: #{tpu_custom_call.1} parent=1 // pred_check
      _
    $region43: #{tpu_custom_call.1} parent=1 // pred_check_branch
      %97 = sbr.rel (0) target = $region45
    $region44: #{tpu_custom_call.1} parent=1 // pred_region
      %98 = dma.done [#allocation9], 6144
    $region45: #{tpu_custom_call.1} parent=1 // pred_fallthru
      _
    // Predicated region
    $region46: #{tpu_custom_call.1} parent=1 // pred_check
      _
    $region47: #{tpu_custom_call.1} parent=1 // pred_check_branch
      %100 = sbr.rel (0) target = $region49
    $region48: #{tpu_custom_call.1} parent=1 // pred_region
      %101 = dma.done [#allocation12], 16
    $region49: #{tpu_custom_call.1} parent=1 // pred_fallthru
      _
    %v103 = vld [vmem:[#allocation2] sm:$0xff]
    %v104 = vunpack.c.l.bf16 %v103
    %v105 = vunpack.c.h.bf16 %v103
    %v106 = vld [vmem:[#allocation8] sm:$0xff]
    %v107 = vld [vmem:[#allocation8 + $0x8] sm:$0xff]
    %v108 = vld [vmem:[#allocation8 + $0x10] sm:$0xff]
    %v109 = vld [vmem:[#allocation5] sm:$0xff]
    %v110 = vld [vmem:[#allocation5 + $0x8] sm:$0xff]
    %v111 = vld [vmem:[#allocation5 + $0x10] sm:$0xff]
    %v112 = vld [vmem:[#allocation5 + $0x18] sm:$0xff]
    %v113 = vld [vmem:[#allocation5 + $0x20] sm:$0xff]
    %v114 = vld [vmem:[#allocation5 + $0x28] sm:$0xff]
    %v115 = vld [vmem:[#allocation5 + $0x30] sm:$0xff]
    %v116 = vld [vmem:[#allocation5 + $0x38] sm:$0xff]
    %v117 = vld [vmem:[#allocation5 + $0x40] sm:$0xff]
    %v118 = vld [vmem:[#allocation5 + $0x48] sm:$0xff]
    %v119 = vld [vmem:[#allocation5 + $0x50] sm:$0xff]
    %v120 = vld [vmem:[#allocation5 + $0x58] sm:$0xff]
    %v121 = vld [vmem:[#allocation5 + $0x60] sm:$0xff]
    %v122 = vld [vmem:[#allocation5 + $0x68] sm:$0xff]
    %v123 = vld [vmem:[#allocation5 + $0x70] sm:$0xff]
    %v124 = vld [vmem:[#allocation5 + $0x78] sm:$0xff]
    %v125 = vld [vmem:[#allocation5 + $0x80] sm:$0xff]
    %v126 = vld [vmem:[#allocation5 + $0x88] sm:$0xff]
    %v127 = vld [vmem:[#allocation5 + $0x90] sm:$0xff]
    %v128 = vld [vmem:[#allocation5 + $0x98] sm:$0xff]
    %v129 = vld [vmem:[#allocation5 + $0xa0] sm:$0xff]
    %v130 = vld [vmem:[#allocation5 + $0xa8] sm:$0xff]
    %v131 = vld [vmem:[#allocation5 + $0xb0] sm:$0xff]
    %v132 = vld [vmem:[#allocation5 + $0xb8] sm:$0xff]
    %v133 = vld [vmem:[#allocation5 + $0xc0] sm:$0xff]
    %v134 = vld [vmem:[#allocation5 + $0xc8] sm:$0xff]
    %v135 = vld [vmem:[#allocation5 + $0xd0] sm:$0xff]
    %v136 = vld [vmem:[#allocation5 + $0xd8] sm:$0xff]
    %v137 = vld [vmem:[#allocation5 + $0xe0] sm:$0xff]
    %v138 = vld [vmem:[#allocation5 + $0xe8] sm:$0xff]
    %v139 = vld [vmem:[#allocation5 + $0xf0] sm:$0xff]
    %v140 = vld [vmem:[#allocation5 + $0xf8] sm:$0xff]
    %v141 = vld [vmem:[#allocation5 + $0x100] sm:$0xff]
    %v142 = vld [vmem:[#allocation5 + $0x108] sm:$0xff]
    %v143 = vld [vmem:[#allocation5 + $0x110] sm:$0xff]
    %v144 = vld [vmem:[#allocation5 + $0x118] sm:$0xff]
    %v145 = vld [vmem:[#allocation5 + $0x120] sm:$0xff]
    %v146 = vld [vmem:[#allocation5 + $0x128] sm:$0xff]
    %v147 = vld [vmem:[#allocation5 + $0x130] sm:$0xff]
    %v148 = vld [vmem:[#allocation5 + $0x138] sm:$0xff]
    %v149 = vld [vmem:[#allocation5 + $0x140] sm:$0xff]
    %v150 = vld [vmem:[#allocation5 + $0x148] sm:$0xff]
    %v151 = vld [vmem:[#allocation5 + $0x150] sm:$0xff]
    %v152 = vld [vmem:[#allocation5 + $0x158] sm:$0xff]
    %v153 = vld [vmem:[#allocation5 + $0x160] sm:$0xff]
    %v154 = vld [vmem:[#allocation5 + $0x168] sm:$0xff]
    %v155 = vld [vmem:[#allocation5 + $0x170] sm:$0xff]
    %v156 = vld [vmem:[#allocation5 + $0x178] sm:$0xff]
    %v157 = vld [vmem:[#allocation5 + $0x180] sm:$0xff]
    %v158 = vld [vmem:[#allocation5 + $0x188] sm:$0xff]
    %v159 = vld [vmem:[#allocation5 + $0x190] sm:$0xff]
    %v160 = vld [vmem:[#allocation5 + $0x198] sm:$0xff]
    %v161 = vld [vmem:[#allocation5 + $0x1a0] sm:$0xff]
    %v162 = vld [vmem:[#allocation5 + $0x1a8] sm:$0xff]
    %v163 = vld [vmem:[#allocation5 + $0x1b0] sm:$0xff]
    %v164 = vld [vmem:[#allocation5 + $0x1b8] sm:$0xff]
    %v165 = vld [vmem:[#allocation5 + $0x1c0] sm:$0xff]
    %v166 = vld [vmem:[#allocation5 + $0x1c8] sm:$0xff]
    %v167 = vld [vmem:[#allocation5 + $0x1d0] sm:$0xff]
    %v168 = vld [vmem:[#allocation5 + $0x1d8] sm:$0xff]
    %v169 = vld [vmem:[#allocation5 + $0x1e0] sm:$0xff]
    %v170 = vld [vmem:[#allocation5 + $0x1e8] sm:$0xff]
    %v171 = vld [vmem:[#allocation5 + $0x1f0] sm:$0xff]
    %v172 = vld [vmem:[#allocation5 + $0x1f8] sm:$0xff]
    %v173 = vld [vmem:[#allocation5 + $0x200] sm:$0xff]
    %v174 = vld [vmem:[#allocation5 + $0x208] sm:$0xff]
    %v175 = vld [vmem:[#allocation5 + $0x210] sm:$0xff]
    %v176 = vld [vmem:[#allocation5 + $0x218] sm:$0xff]
    %v177 = vld [vmem:[#allocation5 + $0x220] sm:$0xff]
    %v178 = vld [vmem:[#allocation5 + $0x228] sm:$0xff]
    %v179 = vld [vmem:[#allocation5 + $0x230] sm:$0xff]
    %v180 = vld [vmem:[#allocation5 + $0x238] sm:$0xff]
    %v181 = vld [vmem:[#allocation5 + $0x240] sm:$0xff]
    %v182 = vld [vmem:[#allocation5 + $0x248] sm:$0xff]
    %v183 = vld [vmem:[#allocation5 + $0x250] sm:$0xff]
    %v184 = vld [vmem:[#allocation5 + $0x258] sm:$0xff]
    %v185 = vld [vmem:[#allocation5 + $0x260] sm:$0xff]
    %v186 = vld [vmem:[#allocation5 + $0x268] sm:$0xff]
    %v187 = vld [vmem:[#allocation5 + $0x270] sm:$0xff]
    %v188 = vld [vmem:[#allocation5 + $0x278] sm:$0xff]
    %v189 = vld [vmem:[#allocation5 + $0x280] sm:$0xff]
    %v190 = vld [vmem:[#allocation5 + $0x288] sm:$0xff]
    %v191 = vld [vmem:[#allocation5 + $0x290] sm:$0xff]
    %v192 = vld [vmem:[#allocation5 + $0x298] sm:$0xff]
    %v193 = vld [vmem:[#allocation5 + $0x2a0] sm:$0xff]
    %v194 = vld [vmem:[#allocation5 + $0x2a8] sm:$0xff]
    %v195 = vld [vmem:[#allocation5 + $0x2b0] sm:$0xff]
    %v196 = vld [vmem:[#allocation5 + $0x2b8] sm:$0xff]
    %v197 = vld [vmem:[#allocation5 + $0x2c0] sm:$0xff]
    %v198 = vld [vmem:[#allocation5 + $0x2c8] sm:$0xff]
    %v199 = vld [vmem:[#allocation5 + $0x2d0] sm:$0xff]
    %v200 = vld [vmem:[#allocation5 + $0x2d8] sm:$0xff]
    %v201 = vld [vmem:[#allocation5 + $0x2e0] sm:$0xff]
    %v202 = vld [vmem:[#allocation5 + $0x2e8] sm:$0xff]
    %v203 = vld [vmem:[#allocation5 + $0x2f0] sm:$0xff]
    %v204 = vld [vmem:[#allocation5 + $0x2f8] sm:$0xff]
    %v206 = vunpack.c.l.b16 %v103
    %v207 = vunpack.c.h.b16 %v103
    %v208 = vpack.c.b16 %v206, %v206
    %v209 = vpack.c.b16 %v207, %v207
    %v308 = vunpack.c.l.b16 %v109
    %v309 = vunpack.c.h.b16 %v109
    %v310 = vunpack.c.l.b16 %v110
    %v311 = vunpack.c.h.b16 %v110
    %v312 = vunpack.c.l.b16 %v111
    %v313 = vunpack.c.h.b16 %v111
    %v314 = vunpack.c.l.b16 %v112
    %v315 = vunpack.c.h.b16 %v112
    %v316 = vunpack.c.l.b16 %v113
    %v317 = vunpack.c.h.b16 %v113
    %v318 = vunpack.c.l.b16 %v114
    %v319 = vunpack.c.h.b16 %v114
    %v320 = vunpack.c.l.b16 %v115
    %v321 = vunpack.c.h.b16 %v115
    %v322 = vunpack.c.l.b16 %v116
    %v323 = vunpack.c.h.b16 %v116
    %v324 = vunpack.c.l.b16 %v117
    %v325 = vunpack.c.h.b16 %v117
    %v326 = vunpack.c.l.b16 %v118
    %v327 = vunpack.c.h.b16 %v118
    %v328 = vunpack.c.l.b16 %v119
    %v329 = vunpack.c.h.b16 %v119
    %v330 = vunpack.c.l.b16 %v120
    %v331 = vunpack.c.h.b16 %v120
    %v332 = vunpack.c.l.b16 %v121
    %v333 = vunpack.c.h.b16 %v121
    %v334 = vunpack.c.l.b16 %v122
    %v335 = vunpack.c.h.b16 %v122
    %v336 = vunpack.c.l.b16 %v123
    %v337 = vunpack.c.h.b16 %v123
    %v338 = vunpack.c.l.b16 %v124
    %v339 = vunpack.c.h.b16 %v124
    %v340 = vunpack.c.l.b16 %v125
    %v341 = vunpack.c.h.b16 %v125
    %v342 = vunpack.c.l.b16 %v126
    %v343 = vunpack.c.h.b16 %v126
    %v344 = vunpack.c.l.b16 %v127
    %v345 = vunpack.c.h.b16 %v127
    %v346 = vunpack.c.l.b16 %v128
    %v347 = vunpack.c.h.b16 %v128
    %v348 = vunpack.c.l.b16 %v129
    %v349 = vunpack.c.h.b16 %v129
    %v350 = vunpack.c.l.b16 %v130
    %v351 = vunpack.c.h.b16 %v130
    %v352 = vunpack.c.l.b16 %v131
    %v353 = vunpack.c.h.b16 %v131
    %v354 = vunpack.c.l.b16 %v132
    %v355 = vunpack.c.h.b16 %v132
    %v356 = vunpack.c.l.b16 %v133
    %v357 = vunpack.c.h.b16 %v133
    %v358 = vunpack.c.l.b16 %v134
    %v359 = vunpack.c.h.b16 %v134
    %v360 = vunpack.c.l.b16 %v135
    %v361 = vunpack.c.h.b16 %v135
    %v362 = vunpack.c.l.b16 %v136
    %v363 = vunpack.c.h.b16 %v136
    %v364 = vunpack.c.l.b16 %v137
    %v365 = vunpack.c.h.b16 %v137
    %v366 = vunpack.c.l.b16 %v138
    %v367 = vunpack.c.h.b16 %v138
    %v368 = vunpack.c.l.b16 %v139
    %v369 = vunpack.c.h.b16 %v139
    %v370 = vunpack.c.l.b16 %v140
    %v371 = vunpack.c.h.b16 %v140
    %v372 = vunpack.c.l.b16 %v141
    %v373 = vunpack.c.h.b16 %v141
    %v374 = vunpack.c.l.b16 %v142
    %v375 = vunpack.c.h.b16 %v142
    %v376 = vunpack.c.l.b16 %v143
    %v377 = vunpack.c.h.b16 %v143
    %v378 = vunpack.c.l.b16 %v144
    %v379 = vunpack.c.h.b16 %v144
    %v380 = vunpack.c.l.b16 %v145
    %v381 = vunpack.c.h.b16 %v145
    %v382 = vunpack.c.l.b16 %v146
    %v383 = vunpack.c.h.b16 %v146
    %v384 = vunpack.c.l.b16 %v147
    %v385 = vunpack.c.h.b16 %v147
    %v386 = vunpack.c.l.b16 %v148
    %v387 = vunpack.c.h.b16 %v148
    %v388 = vunpack.c.l.b16 %v149
    %v389 = vunpack.c.h.b16 %v149
    %v390 = vunpack.c.l.b16 %v150
    %v391 = vunpack.c.h.b16 %v150
    %v392 = vunpack.c.l.b16 %v151
    %v393 = vunpack.c.h.b16 %v151
    %v394 = vunpack.c.l.b16 %v152
    %v395 = vunpack.c.h.b16 %v152
    %v396 = vunpack.c.l.b16 %v153
    %v397 = vunpack.c.h.b16 %v153
    %v398 = vunpack.c.l.b16 %v154
    %v399 = vunpack.c.h.b16 %v154
    %v400 = vunpack.c.l.b16 %v155
    %v401 = vunpack.c.h.b16 %v155
    %v402 = vunpack.c.l.b16 %v156
    %v403 = vunpack.c.h.b16 %v156
    %v404 = vunpack.c.l.b16 %v157
    %v405 = vunpack.c.h.b16 %v157
    %v406 = vunpack.c.l.b16 %v158
    %v407 = vunpack.c.h.b16 %v158
    %v408 = vunpack.c.l.b16 %v159
    %v409 = vunpack.c.h.b16 %v159
    %v410 = vunpack.c.l.b16 %v160
    %v411 = vunpack.c.h.b16 %v160
    %v412 = vunpack.c.l.b16 %v161
    %v413 = vunpack.c.h.b16 %v161
    %v414 = vunpack.c.l.b16 %v162
    %v415 = vunpack.c.h.b16 %v162
    %v416 = vunpack.c.l.b16 %v163
    %v417 = vunpack.c.h.b16 %v163
    %v418 = vunpack.c.l.b16 %v164
    %v419 = vunpack.c.h.b16 %v164
    %v420 = vunpack.c.l.b16 %v165
    %v421 = vunpack.c.h.b16 %v165
    %v422 = vunpack.c.l.b16 %v166
    %v423 = vunpack.c.h.b16 %v166
    %v424 = vunpack.c.l.b16 %v167
    %v425 = vunpack.c.h.b16 %v167
    %v426 = vunpack.c.l.b16 %v168
    %v427 = vunpack.c.h.b16 %v168
    %v428 = vunpack.c.l.b16 %v169
    %v429 = vunpack.c.h.b16 %v169
    %v430 = vunpack.c.l.b16 %v170
    %v431 = vunpack.c.h.b16 %v170
    %v432 = vunpack.c.l.b16 %v171
    %v433 = vunpack.c.h.b16 %v171
    %v434 = vunpack.c.l.b16 %v172
    %v435 = vunpack.c.h.b16 %v172
    %v436 = vunpack.c.l.b16 %v173
    %v437 = vunpack.c.h.b16 %v173
    %v438 = vunpack.c.l.b16 %v174
    %v439 = vunpack.c.h.b16 %v174
    %v440 = vunpack.c.l.b16 %v175
    %v441 = vunpack.c.h.b16 %v175
    %v442 = vunpack.c.l.b16 %v176
    %v443 = vunpack.c.h.b16 %v176
    %v444 = vunpack.c.l.b16 %v177
    %v445 = vunpack.c.h.b16 %v177
    %v446 = vunpack.c.l.b16 %v178
    %v447 = vunpack.c.h.b16 %v178
    %v448 = vunpack.c.l.b16 %v179
    %v449 = vunpack.c.h.b16 %v179
    %v450 = vunpack.c.l.b16 %v180
    %v451 = vunpack.c.h.b16 %v180
    %v452 = vunpack.c.l.b16 %v181
    %v453 = vunpack.c.h.b16 %v181
    %v454 = vunpack.c.l.b16 %v182
    %v455 = vunpack.c.h.b16 %v182
    %v456 = vunpack.c.l.b16 %v183
    %v457 = vunpack.c.h.b16 %v183
    %v458 = vunpack.c.l.b16 %v184
    %v459 = vunpack.c.h.b16 %v184
    %v460 = vunpack.c.l.b16 %v185
    %v461 = vunpack.c.h.b16 %v185
    %v462 = vunpack.c.l.b16 %v186
    %v463 = vunpack.c.h.b16 %v186
    %v464 = vunpack.c.l.b16 %v187
    %v465 = vunpack.c.h.b16 %v187
    %v466 = vunpack.c.l.b16 %v188
    %v467 = vunpack.c.h.b16 %v188
    %v468 = vunpack.c.l.b16 %v189
    %v469 = vunpack.c.h.b16 %v189
    %v470 = vunpack.c.l.b16 %v190
    %v471 = vunpack.c.h.b16 %v190
    %v472 = vunpack.c.l.b16 %v191
    %v473 = vunpack.c.h.b16 %v191
    %v474 = vunpack.c.l.b16 %v192
    %v475 = vunpack.c.h.b16 %v192
    %v476 = vunpack.c.l.b16 %v193
    %v477 = vunpack.c.h.b16 %v193
    %v478 = vunpack.c.l.b16 %v194
    %v479 = vunpack.c.h.b16 %v194
    %v480 = vunpack.c.l.b16 %v195
    %v481 = vunpack.c.h.b16 %v195
    %v482 = vunpack.c.l.b16 %v196
    %v483 = vunpack.c.h.b16 %v196
    %v484 = vunpack.c.l.b16 %v197
    %v485 = vunpack.c.h.b16 %v197
    %v486 = vunpack.c.l.b16 %v198
    %v487 = vunpack.c.h.b16 %v198
    %v488 = vunpack.c.l.b16 %v199
    %v489 = vunpack.c.h.b16 %v199
    %v490 = vunpack.c.l.b16 %v200
    %v491 = vunpack.c.h.b16 %v200
    %v492 = vunpack.c.l.b16 %v201
    %v493 = vunpack.c.h.b16 %v201
    %v494 = vunpack.c.l.b16 %v202
    %v495 = vunpack.c.h.b16 %v202
    %v496 = vunpack.c.l.b16 %v203
    %v497 = vunpack.c.h.b16 %v203
    %v498 = vunpack.c.l.b16 %v204
    %v499 = vunpack.c.h.b16 %v204
    %v500 = vpack.c.b16 %v314, %v308
    %v501 = vpack.c.b16 %v315, %v309
    %v502 = vpack.c.b16 %v316, %v310
    %v503 = vpack.c.b16 %v317, %v311
    %v504 = vpack.c.b16 %v318, %v312
    %v505 = vpack.c.b16 %v319, %v313
    %v506 = vpack.c.b16 %v326, %v320
    %v507 = vpack.c.b16 %v327, %v321
    %v508 = vpack.c.b16 %v328, %v322
    %v509 = vpack.c.b16 %v329, %v323
    %v510 = vpack.c.b16 %v330, %v324
    %v511 = vpack.c.b16 %v331, %v325
    %v512 = vpack.c.b16 %v338, %v332
    %v513 = vpack.c.b16 %v339, %v333
    %v514 = vpack.c.b16 %v340, %v334
    %v515 = vpack.c.b16 %v341, %v335
    %v516 = vpack.c.b16 %v342, %v336
    %v517 = vpack.c.b16 %v343, %v337
    %v518 = vpack.c.b16 %v350, %v344
    %v519 = vpack.c.b16 %v351, %v345
    %v520 = vpack.c.b16 %v352, %v346
    %v521 = vpack.c.b16 %v353, %v347
    %v522 = vpack.c.b16 %v354, %v348
    %v523 = vpack.c.b16 %v355, %v349
    %v524 = vpack.c.b16 %v362, %v356
    %v525 = vpack.c.b16 %v363, %v357
    %v526 = vpack.c.b16 %v364, %v358
    %v527 = vpack.c.b16 %v365, %v359
    %v528 = vpack.c.b16 %v366, %v360
    %v529 = vpack.c.b16 %v367, %v361
    %v530 = vpack.c.b16 %v374, %v368
    %v531 = vpack.c.b16 %v375, %v369
    %v532 = vpack.c.b16 %v376, %v370
    %v533 = vpack.c.b16 %v377, %v371
    %v534 = vpack.c.b16 %v378, %v372
    %v535 = vpack.c.b16 %v379, %v373
    %v536 = vpack.c.b16 %v386, %v380
    %v537 = vpack.c.b16 %v387, %v381
    %v538 = vpack.c.b16 %v388, %v382
    %v539 = vpack.c.b16 %v389, %v383
    %v540 = vpack.c.b16 %v390, %v384
    %v541 = vpack.c.b16 %v391, %v385
    %v542 = vpack.c.b16 %v398, %v392
    %v543 = vpack.c.b16 %v399, %v393
    %v544 = vpack.c.b16 %v400, %v394
    %v545 = vpack.c.b16 %v401, %v395
    %v546 = vpack.c.b16 %v402, %v396
    %v547 = vpack.c.b16 %v403, %v397
    %v548 = vpack.c.b16 %v410, %v404
    %v549 = vpack.c.b16 %v411, %v405
    %v550 = vpack.c.b16 %v412, %v406
    %v551 = vpack.c.b16 %v413, %v407
    %v552 = vpack.c.b16 %v414, %v408
    %v553 = vpack.c.b16 %v415, %v409
    %v554 = vpack.c.b16 %v422, %v416
    %v555 = vpack.c.b16 %v423, %v417
    %v556 = vpack.c.b16 %v424, %v418
    %v557 = vpack.c.b16 %v425, %v419
    %v558 = vpack.c.b16 %v426, %v420
    %v559 = vpack.c.b16 %v427, %v421
    %v560 = vpack.c.b16 %v434, %v428
    %v561 = vpack.c.b16 %v435, %v429
    %v562 = vpack.c.b16 %v436, %v430
    %v563 = vpack.c.b16 %v437, %v431
    %v564 = vpack.c.b16 %v438, %v432
    %v565 = vpack.c.b16 %v439, %v433
    %v566 = vpack.c.b16 %v446, %v440
    %v567 = vpack.c.b16 %v447, %v441
    %v568 = vpack.c.b16 %v448, %v442
    %v569 = vpack.c.b16 %v449, %v443
    %v570 = vpack.c.b16 %v450, %v444
    %v571 = vpack.c.b16 %v451, %v445
    %v572 = vpack.c.b16 %v458, %v452
    %v573 = vpack.c.b16 %v459, %v453
    %v574 = vpack.c.b16 %v460, %v454
    %v575 = vpack.c.b16 %v461, %v455
    %v576 = vpack.c.b16 %v462, %v456
    %v577 = vpack.c.b16 %v463, %v457
    %v578 = vpack.c.b16 %v470, %v464
    %v579 = vpack.c.b16 %v471, %v465
    %v580 = vpack.c.b16 %v472, %v466
    %v581 = vpack.c.b16 %v473, %v467
    %v582 = vpack.c.b16 %v474, %v468
    %v583 = vpack.c.b16 %v475, %v469
    %v584 = vpack.c.b16 %v482, %v476
    %v585 = vpack.c.b16 %v483, %v477
    %v586 = vpack.c.b16 %v484, %v478
    %v587 = vpack.c.b16 %v485, %v479
    %v588 = vpack.c.b16 %v486, %v480
    %v589 = vpack.c.b16 %v487, %v481
    %v590 = vpack.c.b16 %v494, %v488
    %v591 = vpack.c.b16 %v495, %v489
    %v592 = vpack.c.b16 %v496, %v490
    %v593 = vpack.c.b16 %v497, %v491
    %v594 = vpack.c.b16 %v498, %v492
    %v595 = vpack.c.b16 %v499, %v493
    %692 = vmatprep.subr.bf16.mxu0 %v501
    %693 = vmatpush1.bf16.msra.mxu0 %v500
    %694 = vmatprep.subr.bf16.mxu0 %v507
    %695 = vmatpush1.bf16.msra.mxu0 %v506
    %696 = vmatprep.subr.bf16.mxu0 %v513
    %697 = vmatpush1.bf16.msra.mxu0 %v512
    %698 = vmatprep.subr.bf16.mxu0 %v519
    %699 = vmatpush1.bf16.msra.mxu0 %v518
    %700 = vmatprep.subr.bf16.mxu0 %v525
    %701 = vmatpush1.bf16.msra.mxu0 %v524
    %702 = vmatprep.subr.bf16.mxu0 %v531
    %703 = vmatpush1.bf16.msra.mxu0 %v530
    %704 = vmatprep.subr.bf16.mxu0 %v537
    %705 = vmatpush1.bf16.msra.mxu0 %v536
    %706 = vmatprep.subr.bf16.mxu0 %v543
    %707 = vmatpush1.bf16.msra.mxu0 %v542
    %708 = vmatprep.subr.bf16.mxu0 %v549
    %709 = vmatpush1.bf16.msra.mxu0 %v548
    %710 = vmatprep.subr.bf16.mxu0 %v555
    %711 = vmatpush1.bf16.msra.mxu0 %v554
    %712 = vmatprep.subr.bf16.mxu0 %v561
    %713 = vmatpush1.bf16.msra.mxu0 %v560
    %714 = vmatprep.subr.bf16.mxu0 %v567
    %715 = vmatpush1.bf16.msra.mxu0 %v566
    %716 = vmatprep.subr.bf16.mxu0 %v573
    %717 = vmatpush1.bf16.msra.mxu0 %v572
    %718 = vmatprep.subr.bf16.mxu0 %v579
    %719 = vmatpush1.bf16.msra.mxu0 %v578
    %720 = vmatprep.subr.bf16.mxu0 %v585
    %721 = vmatpush1.bf16.msra.mxu0 %v584
    %722 = vmatprep.subr.bf16.mxu0 %v591
    %723 = vmatpush1.bf16.msra.mxu0 %v590
    %724 = vmatprep.mubr.bf16.mxu0 %v209
    %725 = vmatmul.mubr.bf16.gmra.mrb[0].mxu0 %v208
    %v726 = vpop.f32.mrb[0].mxu0
    %v727 = vadd.f32 0.0, %v726
    %v728 = vpop.f32.mrb[0].mxu0
    %v729 = vadd.f32 0.0, %v728
    %v730 = vpop.f32.mrb[0].mxu0
    %v731 = vpop.f32.mrb[0].mxu0
    %732 = vdwg.mxu0
    %733 = vmatprep.subr.bf16.mxu0 %v503
    %734 = vmatpush1.bf16.msra.mxu0 %v502
    %735 = vmatprep.subr.bf16.mxu0 %v509
    %736 = vmatpush1.bf16.msra.mxu0 %v508
    %737 = vmatprep.subr.bf16.mxu0 %v515
    %738 = vmatpush1.bf16.msra.mxu0 %v514
    %739 = vmatprep.subr.bf16.mxu0 %v521
    %740 = vmatpush1.bf16.msra.mxu0 %v520
    %741 = vmatprep.subr.bf16.mxu0 %v527
    %742 = vmatpush1.bf16.msra.mxu0 %v526
    %743 = vmatprep.subr.bf16.mxu0 %v533
    %744 = vmatpush1.bf16.msra.mxu0 %v532
    %745 = vmatprep.subr.bf16.mxu0 %v539
    %746 = vmatpush1.bf16.msra.mxu0 %v538
    %747 = vmatprep.subr.bf16.mxu0 %v545
    %748 = vmatpush1.bf16.msra.mxu0 %v544
    %749 = vmatprep.subr.bf16.mxu0 %v551
    %750 = vmatpush1.bf16.msra.mxu0 %v550
    %751 = vmatprep.subr.bf16.mxu0 %v557
    %752 = vmatpush1.bf16.msra.mxu0 %v556
    %753 = vmatprep.subr.bf16.mxu0 %v563
    %754 = vmatpush1.bf16.msra.mxu0 %v562
    %755 = vmatprep.subr.bf16.mxu0 %v569
    %756 = vmatpush1.bf16.msra.mxu0 %v568
    %757 = vmatprep.subr.bf16.mxu0 %v575
    %758 = vmatpush1.bf16.msra.mxu0 %v574
    %759 = vmatprep.subr.bf16.mxu0 %v581
    %760 = vmatpush1.bf16.msra.mxu0 %v580
    %761 = vmatprep.subr.bf16.mxu0 %v587
    %762 = vmatpush1.bf16.msra.mxu0 %v586
    %763 = vmatprep.subr.bf16.mxu0 %v593
    %764 = vmatpush1.bf16.msra.mxu0 %v592
    %765 = vmatprep.mubr.bf16.mxu0 %v209
    %766 = vmatmul.mubr.bf16.gmra.mrb[0].mxu0 %v208
    %v767 = vpop.f32.mrb[0].mxu0
    %v768 = vadd.f32 0.0, %v767
    %v769 = vpop.f32.mrb[0].mxu0
    %v770 = vadd.f32 0.0, %v769
    %v771 = vpop.f32.mrb[0].mxu0
    %v772 = vpop.f32.mrb[0].mxu0
    %773 = vdwg.mxu0
    %774 = vmatprep.subr.bf16.mxu0 %v505
    %775 = vmatpush1.bf16.msra.mxu0 %v504
    %776 = vmatprep.subr.bf16.mxu0 %v511
    %777 = vmatpush1.bf16.msra.mxu0 %v510
    %778 = vmatprep.subr.bf16.mxu0 %v517
    %779 = vmatpush1.bf16.msra.mxu0 %v516
    %780 = vmatprep.subr.bf16.mxu0 %v523
    %781 = vmatpush1.bf16.msra.mxu0 %v522
    %782 = vmatprep.subr.bf16.mxu0 %v529
    %783 = vmatpush1.bf16.msra.mxu0 %v528
    %784 = vmatprep.subr.bf16.mxu0 %v535
    %785 = vmatpush1.bf16.msra.mxu0 %v534
    %786 = vmatprep.subr.bf16.mxu0 %v541
    %787 = vmatpush1.bf16.msra.mxu0 %v540
    %788 = vmatprep.subr.bf16.mxu0 %v547
    %789 = vmatpush1.bf16.msra.mxu0 %v546
    %790 = vmatprep.subr.bf16.mxu0 %v553
    %791 = vmatpush1.bf16.msra.mxu0 %v552
    %792 = vmatprep.subr.bf16.mxu0 %v559
    %793 = vmatpush1.bf16.msra.mxu0 %v558
    %794 = vmatprep.subr.bf16.mxu0 %v565
    %795 = vmatpush1.bf16.msra.mxu0 %v564
    %796 = vmatprep.subr.bf16.mxu0 %v571
    %797 = vmatpush1.bf16.msra.mxu0 %v570
    %798 = vmatprep.subr.bf16.mxu0 %v577
    %799 = vmatpush1.bf16.msra.mxu0 %v576
    %800 = vmatprep.subr.bf16.mxu0 %v583
    %801 = vmatpush1.bf16.msra.mxu0 %v582
    %802 = vmatprep.subr.bf16.mxu0 %v589
    %803 = vmatpush1.bf16.msra.mxu0 %v588
    %804 = vmatprep.subr.bf16.mxu0 %v595
    %805 = vmatpush1.bf16.msra.mxu0 %v594
    %806 = vmatprep.mubr.bf16.mxu0 %v209
    %807 = vmatmul.mubr.bf16.gmra.mrb[0].mxu0 %v208
    %v808 = vpop.f32.mrb[0].mxu0
    %v809 = vadd.f32 0.0, %v808
    %v810 = vpop.f32.mrb[0].mxu0
    %v811 = vadd.f32 0.0, %v810
    %v812 = vpop.f32.mrb[0].mxu0
    %v813 = vpop.f32.mrb[0].mxu0
    %814 = vdwg.mxu0
    %v815 = vadd.f32 %v727, %v729
    %816 = vadd.xlane.f32.xlu0 %v815
    %v817 = vpop.xlane.xlu0 %816
    %v818 = vrcp.pop 256.0
    %v819 = vmul.f32 %v817, %v818
    %v820 = vmul.f32 %v727, %v727
    %v821 = vmul.f32 %v729, %v729
    %v822 = vadd.f32 %v820, %v821
    %823 = vadd.xlane.f32.xlu0 %v822
    %v824 = vpop.xlane.xlu0 %823
    %v825 = vmul.f32 %v824, %v818
    %v826 = vmul.f32 %v819, %v819
    %v827 = vsub.f32 %v825, %v826
    %v828 = vadd.f32 %v827, 1e-05
    %v829 = vrsqrt.pop %v828
    %v831 = vlaneseq
    %v832 = vshrl.u32 %v831, 7
    %v833 = vsub.s32 0, %v832
    %v834 = vrot.slane %v106, %v833
    %v835 = vlaneseq
    %v836 = vshrl.u32 %v835, 7
    %v837 = vsub.s32 4, %v836
    %v838 = vrot.slane %v106, %v837
    %v841 = vlaneseq
    %v842 = vshrl.u32 %v841, 7
    %v843 = vsub.s32 0, %v842
    %v844 = vrot.slane %v834, %v843
    %v845 = vlaneseq
    %v846 = vshrl.u32 %v845, 7
    %v847 = vsub.s32 0, %v846
    %v848 = vrot.slane %v838, %v847
    %v849 = vmul.f32 %v844, %v829
    %v850 = vmul.f32 %v848, %v829
    %v851 = vmul.f32 %v727, %v849
    %v852 = vmul.f32 %v729, %v850
    %v853 = vmul.f32 %v819, %v849
    %v854 = vmul.f32 %v819, %v850
    %v855 = vlaneseq
    %v856 = vshrl.u32 %v855, 7
    %v857 = vsub.s32 1, %v856
    %v858 = vrot.slane %v106, %v857
    %v859 = vlaneseq
    %v860 = vshrl.u32 %v859, 7
    %v861 = vsub.s32 5, %v860
    %v862 = vrot.slane %v106, %v861
    %v865 = vlaneseq
    %v866 = vshrl.u32 %v865, 7
    %v867 = vsub.s32 1, %v866
    %v868 = vrot.slane %v858, %v867
    %v869 = vlaneseq
    %v870 = vshrl.u32 %v869, 7
    %v871 = vsub.s32 1, %v870
    %v872 = vrot.slane %v862, %v871
    %v873 = vsub.f32 %v868, %v853
    %v874 = vsub.f32 %v872, %v854
    %v875 = vadd.f32 %v851, %v873
    %v876 = vadd.f32 %v852, %v874
    %v877 = vmax.f32 %v875, 0.0
    %v878 = vmax.f32 %v876, 0.0
    %v879 = vpack.c.bf16 %v877, %v877
    %v880 = vpack.c.bf16 %v878, %v878
    %v881 = vld [vmem:[#allocation7] sm:$0xff]
    %v882 = vld [vmem:[#allocation7 + $0x8] sm:$0xff]
    %v883 = vld [vmem:[#allocation7 + $0x10] sm:$0xff]
    %v884 = vld [vmem:[#allocation7 + $0x18] sm:$0xff]
    %v885 = vld [vmem:[#allocation7 + $0x20] sm:$0xff]
    %v886 = vld [vmem:[#allocation7 + $0x28] sm:$0xff]
    %v887 = vld [vmem:[#allocation7 + $0x30] sm:$0xff]
    %v888 = vld [vmem:[#allocation7 + $0x38] sm:$0xff]
    %v889 = vld [vmem:[#allocation7 + $0x40] sm:$0xff]
    %v890 = vld [vmem:[#allocation7 + $0x48] sm:$0xff]
    %v891 = vld [vmem:[#allocation7 + $0x50] sm:$0xff]
    %v892 = vld [vmem:[#allocation7 + $0x58] sm:$0xff]
    %v893 = vld [vmem:[#allocation7 + $0x60] sm:$0xff]
    %v894 = vld [vmem:[#allocation7 + $0x68] sm:$0xff]
    %v895 = vld [vmem:[#allocation7 + $0x70] sm:$0xff]
    %v896 = vld [vmem:[#allocation7 + $0x78] sm:$0xff]
    %v897 = vld [vmem:[#allocation7 + $0x80] sm:$0xff]
    %v898 = vld [vmem:[#allocation7 + $0x88] sm:$0xff]
    %v899 = vld [vmem:[#allocation7 + $0x90] sm:$0xff]
    %v900 = vld [vmem:[#allocation7 + $0x98] sm:$0xff]
    %v901 = vld [vmem:[#allocation7 + $0xa0] sm:$0xff]
    %v902 = vld [vmem:[#allocation7 + $0xa8] sm:$0xff]
    %v903 = vld [vmem:[#allocation7 + $0xb0] sm:$0xff]
    %v904 = vld [vmem:[#allocation7 + $0xb8] sm:$0xff]
    %v905 = vld [vmem:[#allocation7 + $0xc0] sm:$0xff]
    %v906 = vld [vmem:[#allocation7 + $0xc8] sm:$0xff]
    %v907 = vld [vmem:[#allocation7 + $0xd0] sm:$0xff]
    %v908 = vld [vmem:[#allocation7 + $0xd8] sm:$0xff]
    %v909 = vld [vmem:[#allocation7 + $0xe0] sm:$0xff]
    %v910 = vld [vmem:[#allocation7 + $0xe8] sm:$0xff]
    %v911 = vld [vmem:[#allocation7 + $0xf0] sm:$0xff]
    %v912 = vld [vmem:[#allocation7 + $0xf8] sm:$0xff]
    %v945 = vunpack.c.l.b16 %v881
    %v946 = vunpack.c.h.b16 %v881
    %v947 = vunpack.c.l.b16 %v882
    %v948 = vunpack.c.h.b16 %v882
    %v949 = vunpack.c.l.b16 %v883
    %v950 = vunpack.c.h.b16 %v883
    %v951 = vunpack.c.l.b16 %v884
    %v952 = vunpack.c.h.b16 %v884
    %v953 = vunpack.c.l.b16 %v885
    %v954 = vunpack.c.h.b16 %v885
    %v955 = vunpack.c.l.b16 %v886
    %v956 = vunpack.c.h.b16 %v886
    %v957 = vunpack.c.l.b16 %v887
    %v958 = vunpack.c.h.b16 %v887
    %v959 = vunpack.c.l.b16 %v888
    %v960 = vunpack.c.h.b16 %v888
    %v961 = vunpack.c.l.b16 %v889
    %v962 = vunpack.c.h.b16 %v889
    %v963 = vunpack.c.l.b16 %v890
    %v964 = vunpack.c.h.b16 %v890
    %v965 = vunpack.c.l.b16 %v891
    %v966 = vunpack.c.h.b16 %v891
    %v967 = vunpack.c.l.b16 %v892
    %v968 = vunpack.c.h.b16 %v892
    %v969 = vunpack.c.l.b16 %v893
    %v970 = vunpack.c.h.b16 %v893
    %v971 = vunpack.c.l.b16 %v894
    %v972 = vunpack.c.h.b16 %v894
    %v973 = vunpack.c.l.b16 %v895
    %v974 = vunpack.c.h.b16 %v895
    %v975 = vunpack.c.l.b16 %v896
    %v976 = vunpack.c.h.b16 %v896
    %v977 = vunpack.c.l.b16 %v897
    %v978 = vunpack.c.h.b16 %v897
    %v979 = vunpack.c.l.b16 %v898
    %v980 = vunpack.c.h.b16 %v898
    %v981 = vunpack.c.l.b16 %v899
    %v982 = vunpack.c.h.b16 %v899
    %v983 = vunpack.c.l.b16 %v900
    %v984 = vunpack.c.h.b16 %v900
    %v985 = vunpack.c.l.b16 %v901
    %v986 = vunpack.c.h.b16 %v901
    %v987 = vunpack.c.l.b16 %v902
    %v988 = vunpack.c.h.b16 %v902
    %v989 = vunpack.c.l.b16 %v903
    %v990 = vunpack.c.h.b16 %v903
    %v991 = vunpack.c.l.b16 %v904
    %v992 = vunpack.c.h.b16 %v904
    %v993 = vunpack.c.l.b16 %v905
    %v994 = vunpack.c.h.b16 %v905
    %v995 = vunpack.c.l.b16 %v906
    %v996 = vunpack.c.h.b16 %v906
    %v997 = vunpack.c.l.b16 %v907
    %v998 = vunpack.c.h.b16 %v907
    %v999 = vunpack.c.l.b16 %v908
    %v1000 = vunpack.c.h.b16 %v908
    %v1001 = vunpack.c.l.b16 %v909
    %v1002 = vunpack.c.h.b16 %v909
    %v1003 = vunpack.c.l.b16 %v910
    %v1004 = vunpack.c.h.b16 %v910
    %v1005 = vunpack.c.l.b16 %v911
    %v1006 = vunpack.c.h.b16 %v911
    %v1007 = vunpack.c.l.b16 %v912
    %v1008 = vunpack.c.h.b16 %v912
    %v1009 = vpack.c.b16 %v947, %v945
    %v1010 = vpack.c.b16 %v948, %v946
    %v1011 = vpack.c.b16 %v951, %v949
    %v1012 = vpack.c.b16 %v952, %v950
    %v1013 = vpack.c.b16 %v955, %v953
    %v1014 = vpack.c.b16 %v956, %v954
    %v1015 = vpack.c.b16 %v959, %v957
    %v1016 = vpack.c.b16 %v960, %v958
    %v1017 = vpack.c.b16 %v963, %v961
    %v1018 = vpack.c.b16 %v964, %v962
    %v1019 = vpack.c.b16 %v967, %v965
    %v1020 = vpack.c.b16 %v968, %v966
    %v1021 = vpack.c.b16 %v971, %v969
    %v1022 = vpack.c.b16 %v972, %v970
    %v1023 = vpack.c.b16 %v975, %v973
    %v1024 = vpack.c.b16 %v976, %v974
    %v1025 = vpack.c.b16 %v979, %v977
    %v1026 = vpack.c.b16 %v980, %v978
    %v1027 = vpack.c.b16 %v983, %v981
    %v1028 = vpack.c.b16 %v984, %v982
    %v1029 = vpack.c.b16 %v987, %v985
    %v1030 = vpack.c.b16 %v988, %v986
    %v1031 = vpack.c.b16 %v991, %v989
    %v1032 = vpack.c.b16 %v992, %v990
    %v1033 = vpack.c.b16 %v995, %v993
    %v1034 = vpack.c.b16 %v996, %v994
    %v1035 = vpack.c.b16 %v999, %v997
    %v1036 = vpack.c.b16 %v1000, %v998
    %v1037 = vpack.c.b16 %v1003, %v1001
    %v1038 = vpack.c.b16 %v1004, %v1002
    %v1039 = vpack.c.b16 %v1007, %v1005
    %v1040 = vpack.c.b16 %v1008, %v1006
    %1073 = vmatprep.subr.bf16.mxu0 %v1010
    %1074 = vmatpush1.bf16.msra.mxu0 %v1009
    %1075 = vmatprep.subr.bf16.mxu0 %v1012
    %1076 = vmatpush1.bf16.msra.mxu0 %v1011
    %1077 = vmatprep.subr.bf16.mxu0 %v1014
    %1078 = vmatpush1.bf16.msra.mxu0 %v1013
    %1079 = vmatprep.subr.bf16.mxu0 %v1016
    %1080 = vmatpush1.bf16.msra.mxu0 %v1015
    %1081 = vmatprep.subr.bf16.mxu0 %v1018
    %1082 = vmatpush1.bf16.msra.mxu0 %v1017
    %1083 = vmatprep.subr.bf16.mxu0 %v1020
    %1084 = vmatpush1.bf16.msra.mxu0 %v1019
    %1085 = vmatprep.subr.bf16.mxu0 %v1022
    %1086 = vmatpush1.bf16.msra.mxu0 %v1021
    %1087 = vmatprep.subr.bf16.mxu0 %v1024
    %1088 = vmatpush1.bf16.msra.mxu0 %v1023
    %1089 = vmatprep.subr.bf16.mxu0 %v1026
    %1090 = vmatpush1.bf16.msra.mxu0 %v1025
    %1091 = vmatprep.subr.bf16.mxu0 %v1028
    %1092 = vmatpush1.bf16.msra.mxu0 %v1027
    %1093 = vmatprep.subr.bf16.mxu0 %v1030
    %1094 = vmatpush1.bf16.msra.mxu0 %v1029
    %1095 = vmatprep.subr.bf16.mxu0 %v1032
    %1096 = vmatpush1.bf16.msra.mxu0 %v1031
    %1097 = vmatprep.subr.bf16.mxu0 %v1034
    %1098 = vmatpush1.bf16.msra.mxu0 %v1033
    %1099 = vmatprep.subr.bf16.mxu0 %v1036
    %1100 = vmatpush1.bf16.msra.mxu0 %v1035
    %1101 = vmatprep.subr.bf16.mxu0 %v1038
    %1102 = vmatpush1.bf16.msra.mxu0 %v1037
    %1103 = vmatprep.subr.bf16.mxu0 %v1040
    %1104 = vmatpush1.bf16.msra.mxu0 %v1039
    %1105 = vmatprep.mubr.bf16.mxu0 %v880
    %1106 = vmatmul.mubr.bf16.gmra.mrb[0].mxu0 %v879
    %v1107 = vpop.f32.mrb[0].mxu0
    %v1108 = vadd.f32 0.0, %v1107
    %v1109 = vpop.f32.mrb[0].mxu0
    %v1110 = vadd.f32 0.0, %v1109
    %v1111 = vpop.f32.mrb[0].mxu0
    %v1112 = vpop.f32.mrb[0].mxu0
    %1113 = vdwg.mxu0
    %v1114 = vadd.f32 %v1108, %v1110
    %1115 = vadd.xlane.f32.xlu0 %v1114
    %v1116 = vpop.xlane.xlu0 %1115
    %v1117 = vmul.f32 %v1116, %v818
    %v1118 = vmul.f32 %v1108, %v1108
    %v1119 = vmul.f32 %v1110, %v1110
    %v1120 = vadd.f32 %v1118, %v1119
    %1121 = vadd.xlane.f32.xlu0 %v1120
    %v1122 = vpop.xlane.xlu0 %1121
    %v1123 = vmul.f32 %v1122, %v818
    %v1124 = vmul.f32 %v1117, %v1117
    %v1125 = vsub.f32 %v1123, %v1124
    %v1126 = vadd.f32 %v1125, 1e-05
    %v1127 = vrsqrt.pop %v1126
    %v1128 = vlaneseq
    %v1129 = vshrl.u32 %v1128, 7
    %v1130 = vsub.s32 2, %v1129
    %v1131 = vrot.slane %v106, %v1130
    %v1132 = vlaneseq
    %v1133 = vshrl.u32 %v1132, 7
    %v1134 = vsub.s32 6, %v1133
    %v1135 = vrot.slane %v106, %v1134
    %v1138 = vlaneseq
    %v1139 = vshrl.u32 %v1138, 7
    %v1140 = vsub.s32 2, %v1139
    %v1141 = vrot.slane %v1131, %v1140
    %v1142 = vlaneseq
    %v1143 = vshrl.u32 %v1142, 7
    %v1144 = vsub.s32 2, %v1143
    %v1145 = vrot.slane %v1135, %v1144
    %v1146 = vmul.f32 %v1141, %v1127
    %v1147 = vmul.f32 %v1145, %v1127
    %v1148 = vmul.f32 %v1108, %v1146
    %v1149 = vmul.f32 %v1110, %v1147
    %v1150 = vmul.f32 %v1117, %v1146
    %v1151 = vmul.f32 %v1117, %v1147
    %v1152 = vlaneseq
    %v1153 = vshrl.u32 %v1152, 7
    %v1154 = vsub.s32 3, %v1153
    %v1155 = vrot.slane %v106, %v1154
    %v1156 = vlaneseq
    %v1157 = vshrl.u32 %v1156, 7
    %v1158 = vsub.s32 7, %v1157
    %v1159 = vrot.slane %v106, %v1158
    %v1162 = vlaneseq
    %v1163 = vshrl.u32 %v1162, 7
    %v1164 = vsub.s32 3, %v1163
    %v1165 = vrot.slane %v1155, %v1164
    %v1166 = vlaneseq
    %v1167 = vshrl.u32 %v1166, 7
    %v1168 = vsub.s32 3, %v1167
    %v1169 = vrot.slane %v1159, %v1168
    %v1170 = vsub.f32 %v1165, %v1150
    %v1171 = vsub.f32 %v1169, %v1151
    %v1172 = vadd.f32 %v1148, %v1170
    %v1173 = vadd.f32 %v1149, %v1171
    %v1174 = vadd.f32 %v1172, %v104
    %v1175 = vadd.f32 %v1173, %v105
    %v1176 = vmax.f32 %v1174, 0.0
    %v1177 = vmax.f32 %v1175, 0.0
    %v1178 = vpack.c.bf16 %v1176, %v1176
    %v1179 = vpack.c.bf16 %v1177, %v1177
    %v1180 = vld [vmem:[#allocation10] sm:$0xf]
    %v1181 = vld [vmem:[#allocation10 + $0x4] sm:$0xf]
    %v1182 = vld [vmem:[#allocation10 + $0x8] sm:$0xf]
    %v1183 = vld [vmem:[#allocation10 + $0xc] sm:$0xf]
    %v1184 = vld [vmem:[#allocation10 + $0x10] sm:$0xf]
    %v1185 = vld [vmem:[#allocation10 + $0x14] sm:$0xf]
    %v1186 = vld [vmem:[#allocation10 + $0x18] sm:$0xf]
    %v1187 = vld [vmem:[#allocation10 + $0x1c] sm:$0xf]
    %v1188 = vld [vmem:[#allocation10 + $0x20] sm:$0xf]
    %v1189 = vld [vmem:[#allocation10 + $0x24] sm:$0xf]
    %v1190 = vld [vmem:[#allocation10 + $0x28] sm:$0xf]
    %v1191 = vld [vmem:[#allocation10 + $0x2c] sm:$0xf]
    %v1192 = vld [vmem:[#allocation10 + $0x30] sm:$0xf]
    %v1193 = vld [vmem:[#allocation10 + $0x34] sm:$0xf]
    %v1194 = vld [vmem:[#allocation10 + $0x38] sm:$0xf]
    %v1195 = vld [vmem:[#allocation10 + $0x3c] sm:$0xf]
    %v1196 = vld [vmem:[#allocation10 + $0x40] sm:$0xf]
    %v1197 = vld [vmem:[#allocation10 + $0x44] sm:$0xf]
    %v1198 = vld [vmem:[#allocation10 + $0x48] sm:$0xf]
    %v1199 = vld [vmem:[#allocation10 + $0x4c] sm:$0xf]
    %v1200 = vld [vmem:[#allocation10 + $0x50] sm:$0xf]
    %v1201 = vld [vmem:[#allocation10 + $0x54] sm:$0xf]
    %v1202 = vld [vmem:[#allocation10 + $0x58] sm:$0xf]
    %v1203 = vld [vmem:[#allocation10 + $0x5c] sm:$0xf]
    %v1204 = vld [vmem:[#allocation10 + $0x60] sm:$0xf]
    %v1205 = vld [vmem:[#allocation10 + $0x64] sm:$0xf]
    %v1206 = vld [vmem:[#allocation10 + $0x68] sm:$0xf]
    %v1207 = vld [vmem:[#allocation10 + $0x6c] sm:$0xf]
    %v1208 = vld [vmem:[#allocation10 + $0x70] sm:$0xf]
    %v1209 = vld [vmem:[#allocation10 + $0x74] sm:$0xf]
    %v1210 = vld [vmem:[#allocation10 + $0x78] sm:$0xf]
    %v1211 = vld [vmem:[#allocation10 + $0x7c] sm:$0xf]
    %v1212 = vadd.f32 %v768, %v770
    %1213 = vadd.xlane.f32.xlu0 %v1212
    %v1214 = vpop.xlane.xlu0 %1213
    %v1215 = vmul.f32 %v1214, %v818
    %v1216 = vmul.f32 %v768, %v768
    %v1217 = vmul.f32 %v770, %v770
    %v1218 = vadd.f32 %v1216, %v1217
    %1219 = vadd.xlane.f32.xlu0 %v1218
    %v1220 = vpop.xlane.xlu0 %1219
    %v1221 = vmul.f32 %v1220, %v818
    %v1222 = vmul.f32 %v1215, %v1215
    %v1223 = vsub.f32 %v1221, %v1222
    %v1224 = vadd.f32 %v1223, 1e-05
    %v1225 = vrsqrt.pop %v1224
    %v1227 = vlaneseq
    %v1228 = vshrl.u32 %v1227, 7
    %v1229 = vsub.s32 0, %v1228
    %v1230 = vrot.slane %v107, %v1229
    %v1231 = vlaneseq
    %v1232 = vshrl.u32 %v1231, 7
    %v1233 = vsub.s32 4, %v1232
    %v1234 = vrot.slane %v107, %v1233
    %v1237 = vlaneseq
    %v1238 = vshrl.u32 %v1237, 7
    %v1239 = vsub.s32 0, %v1238
    %v1240 = vrot.slane %v1230, %v1239
    %v1241 = vlaneseq
    %v1242 = vshrl.u32 %v1241, 7
    %v1243 = vsub.s32 0, %v1242
    %v1244 = vrot.slane %v1234, %v1243
    %v1245 = vmul.f32 %v1240, %v1225
    %v1246 = vmul.f32 %v1244, %v1225
    %v1247 = vmul.f32 %v768, %v1245
    %v1248 = vmul.f32 %v770, %v1246
    %v1249 = vmul.f32 %v1215, %v1245
    %v1250 = vmul.f32 %v1215, %v1246
    %v1251 = vlaneseq
    %v1252 = vshrl.u32 %v1251, 7
    %v1253 = vsub.s32 1, %v1252
    %v1254 = vrot.slane %v107, %v1253
    %v1255 = vlaneseq
    %v1256 = vshrl.u32 %v1255, 7
    %v1257 = vsub.s32 5, %v1256
    %v1258 = vrot.slane %v107, %v1257
    %v1261 = vlaneseq
    %v1262 = vshrl.u32 %v1261, 7
    %v1263 = vsub.s32 1, %v1262
    %v1264 = vrot.slane %v1254, %v1263
    %v1265 = vlaneseq
    %v1266 = vshrl.u32 %v1265, 7
    %v1267 = vsub.s32 1, %v1266
    %v1268 = vrot.slane %v1258, %v1267
    %v1269 = vsub.f32 %v1264, %v1249
    %v1270 = vsub.f32 %v1268, %v1250
    %v1271 = vadd.f32 %v1247, %v1269
    %v1272 = vadd.f32 %v1248, %v1270
    %v1273 = vmax.f32 %v1271, 0.0
    %v1274 = vmax.f32 %v1272, 0.0
    %v1275 = vpack.c.bf16 %v1273, %v1273
    %v1276 = vpack.c.bf16 %v1274, %v1274
    %s1277 = scalar_lea.vmem [#allocation7], 256
    %v1278 = vld [vmem:[%s1277] sm:$0xff]
    %v1279 = vld [vmem:[%s1277 + $0x8] sm:$0xff]
    %v1280 = vld [vmem:[%s1277 + $0x10] sm:$0xff]
    %v1281 = vld [vmem:[%s1277 + $0x18] sm:$0xff]
    %v1282 = vld [vmem:[%s1277 + $0x20] sm:$0xff]
    %v1283 = vld [vmem:[%s1277 + $0x28] sm:$0xff]
    %v1284 = vld [vmem:[%s1277 + $0x30] sm:$0xff]
    %v1285 = vld [vmem:[%s1277 + $0x38] sm:$0xff]
    %v1286 = vld [vmem:[%s1277 + $0x40] sm:$0xff]
    %v1287 = vld [vmem:[%s1277 + $0x48] sm:$0xff]
    %v1288 = vld [vmem:[%s1277 + $0x50] sm:$0xff]
    %v1289 = vld [vmem:[%s1277 + $0x58] sm:$0xff]
    %v1290 = vld [vmem:[%s1277 + $0x60] sm:$0xff]
    %v1291 = vld [vmem:[%s1277 + $0x68] sm:$0xff]
    %v1292 = vld [vmem:[%s1277 + $0x70] sm:$0xff]
    %v1293 = vld [vmem:[%s1277 + $0x78] sm:$0xff]
    %v1294 = vld [vmem:[%s1277 + $0x80] sm:$0xff]
    %v1295 = vld [vmem:[%s1277 + $0x88] sm:$0xff]
    %v1296 = vld [vmem:[%s1277 + $0x90] sm:$0xff]
    %v1297 = vld [vmem:[%s1277 + $0x98] sm:$0xff]
    %v1298 = vld [vmem:[%s1277 + $0xa0] sm:$0xff]
    %v1299 = vld [vmem:[%s1277 + $0xa8] sm:$0xff]
    %v1300 = vld [vmem:[%s1277 + $0xb0] sm:$0xff]
    %v1301 = vld [vmem:[%s1277 + $0xb8] sm:$0xff]
    %v1302 = vld [vmem:[%s1277 + $0xc0] sm:$0xff]
    %v1303 = vld [vmem:[%s1277 + $0xc8] sm:$0xff]
    %v1304 = vld [vmem:[%s1277 + $0xd0] sm:$0xff]
    %v1305 = vld [vmem:[%s1277 + $0xd8] sm:$0xff]
    %v1306 = vld [vmem:[%s1277 + $0xe0] sm:$0xff]
    %v1307 = vld [vmem:[%s1277 + $0xe8] sm:$0xff]
    %v1308 = vld [vmem:[%s1277 + $0xf0] sm:$0xff]
    %v1309 = vld [vmem:[%s1277 + $0xf8] sm:$0xff]
    %v1342 = vunpack.c.l.b16 %v1278
    %v1343 = vunpack.c.h.b16 %v1278
    %v1344 = vunpack.c.l.b16 %v1279
    %v1345 = vunpack.c.h.b16 %v1279
    %v1346 = vunpack.c.l.b16 %v1280
    %v1347 = vunpack.c.h.b16 %v1280
    %v1348 = vunpack.c.l.b16 %v1281
    %v1349 = vunpack.c.h.b16 %v1281
    %v1350 = vunpack.c.l.b16 %v1282
    %v1351 = vunpack.c.h.b16 %v1282
    %v1352 = vunpack.c.l.b16 %v1283
    %v1353 = vunpack.c.h.b16 %v1283
    %v1354 = vunpack.c.l.b16 %v1284
    %v1355 = vunpack.c.h.b16 %v1284
    %v1356 = vunpack.c.l.b16 %v1285
    %v1357 = vunpack.c.h.b16 %v1285
    %v1358 = vunpack.c.l.b16 %v1286
    %v1359 = vunpack.c.h.b16 %v1286
    %v1360 = vunpack.c.l.b16 %v1287
    %v1361 = vunpack.c.h.b16 %v1287
    %v1362 = vunpack.c.l.b16 %v1288
    %v1363 = vunpack.c.h.b16 %v1288
    %v1364 = vunpack.c.l.b16 %v1289
    %v1365 = vunpack.c.h.b16 %v1289
    %v1366 = vunpack.c.l.b16 %v1290
    %v1367 = vunpack.c.h.b16 %v1290
    %v1368 = vunpack.c.l.b16 %v1291
    %v1369 = vunpack.c.h.b16 %v1291
    %v1370 = vunpack.c.l.b16 %v1292
    %v1371 = vunpack.c.h.b16 %v1292
    %v1372 = vunpack.c.l.b16 %v1293
    %v1373 = vunpack.c.h.b16 %v1293
    %v1374 = vunpack.c.l.b16 %v1294
    %v1375 = vunpack.c.h.b16 %v1294
    %v1376 = vunpack.c.l.b16 %v1295
    %v1377 = vunpack.c.h.b16 %v1295
    %v1378 = vunpack.c.l.b16 %v1296
    %v1379 = vunpack.c.h.b16 %v1296
    %v1380 = vunpack.c.l.b16 %v1297
    %v1381 = vunpack.c.h.b16 %v1297
    %v1382 = vunpack.c.l.b16 %v1298
    %v1383 = vunpack.c.h.b16 %v1298
    %v1384 = vunpack.c.l.b16 %v1299
    %v1385 = vunpack.c.h.b16 %v1299
    %v1386 = vunpack.c.l.b16 %v1300
    %v1387 = vunpack.c.h.b16 %v1300
    %v1388 = vunpack.c.l.b16 %v1301
    %v1389 = vunpack.c.h.b16 %v1301
    %v1390 = vunpack.c.l.b16 %v1302
    %v1391 = vunpack.c.h.b16 %v1302
    %v1392 = vunpack.c.l.b16 %v1303
    %v1393 = vunpack.c.h.b16 %v1303
    %v1394 = vunpack.c.l.b16 %v1304
    %v1395 = vunpack.c.h.b16 %v1304
    %v1396 = vunpack.c.l.b16 %v1305
    %v1397 = vunpack.c.h.b16 %v1305
    %v1398 = vunpack.c.l.b16 %v1306
    %v1399 = vunpack.c.h.b16 %v1306
    %v1400 = vunpack.c.l.b16 %v1307
    %v1401 = vunpack.c.h.b16 %v1307
    %v1402 = vunpack.c.l.b16 %v1308
    %v1403 = vunpack.c.h.b16 %v1308
    %v1404 = vunpack.c.l.b16 %v1309
    %v1405 = vunpack.c.h.b16 %v1309
    %v1406 = vpack.c.b16 %v1344, %v1342
    %v1407 = vpack.c.b16 %v1345, %v1343
    %v1408 = vpack.c.b16 %v1348, %v1346
    %v1409 = vpack.c.b16 %v1349, %v1347
    %v1410 = vpack.c.b16 %v1352, %v1350
    %v1411 = vpack.c.b16 %v1353, %v1351
    %v1412 = vpack.c.b16 %v1356, %v1354
    %v1413 = vpack.c.b16 %v1357, %v1355
    %v1414 = vpack.c.b16 %v1360, %v1358
    %v1415 = vpack.c.b16 %v1361, %v1359
    %v1416 = vpack.c.b16 %v1364, %v1362
    %v1417 = vpack.c.b16 %v1365, %v1363
    %v1418 = vpack.c.b16 %v1368, %v1366
    %v1419 = vpack.c.b16 %v1369, %v1367
    %v1420 = vpack.c.b16 %v1372, %v1370
    %v1421 = vpack.c.b16 %v1373, %v1371
    %v1422 = vpack.c.b16 %v1376, %v1374
    %v1423 = vpack.c.b16 %v1377, %v1375
    %v1424 = vpack.c.b16 %v1380, %v1378
    %v1425 = vpack.c.b16 %v1381, %v1379
    %v1426 = vpack.c.b16 %v1384, %v1382
    %v1427 = vpack.c.b16 %v1385, %v1383
    %v1428 = vpack.c.b16 %v1388, %v1386
    %v1429 = vpack.c.b16 %v1389, %v1387
    %v1430 = vpack.c.b16 %v1392, %v1390
    %v1431 = vpack.c.b16 %v1393, %v1391
    %v1432 = vpack.c.b16 %v1396, %v1394
    %v1433 = vpack.c.b16 %v1397, %v1395
    %v1434 = vpack.c.b16 %v1400, %v1398
    %v1435 = vpack.c.b16 %v1401, %v1399
    %v1436 = vpack.c.b16 %v1404, %v1402
    %v1437 = vpack.c.b16 %v1405, %v1403
    %1470 = vmatprep.subr.bf16.mxu0 %v1407
    %1471 = vmatpush1.bf16.msra.mxu0 %v1406
    %1472 = vmatprep.subr.bf16.mxu0 %v1409
    %1473 = vmatpush1.bf16.msra.mxu0 %v1408
    %1474 = vmatprep.subr.bf16.mxu0 %v1411
    %1475 = vmatpush1.bf16.msra.mxu0 %v1410
    %1476 = vmatprep.subr.bf16.mxu0 %v1413
    %1477 = vmatpush1.bf16.msra.mxu0 %v1412
    %1478 = vmatprep.subr.bf16.mxu0 %v1415
    %1479 = vmatpush1.bf16.msra.mxu0 %v1414
    %1480 = vmatprep.subr.bf16.mxu0 %v1417
    %1481 = vmatpush1.bf16.msra.mxu0 %v1416
    %1482 = vmatprep.subr.bf16.mxu0 %v1419
    %1483 = vmatpush1.bf16.msra.mxu0 %v1418
    %1484 = vmatprep.subr.bf16.mxu0 %v1421
    %1485 = vmatpush1.bf16.msra.mxu0 %v1420
    %1486 = vmatprep.subr.bf16.mxu0 %v1423
    %1487 = vmatpush1.bf16.msra.mxu0 %v1422
    %1488 = vmatprep.subr.bf16.mxu0 %v1425
    %1489 = vmatpush1.bf16.msra.mxu0 %v1424
    %1490 = vmatprep.subr.bf16.mxu0 %v1427
    %1491 = vmatpush1.bf16.msra.mxu0 %v1426
    %1492 = vmatprep.subr.bf16.mxu0 %v1429
    %1493 = vmatpush1.bf16.msra.mxu0 %v1428
    %1494 = vmatprep.subr.bf16.mxu0 %v1431
    %1495 = vmatpush1.bf16.msra.mxu0 %v1430
    %1496 = vmatprep.subr.bf16.mxu0 %v1433
    %1497 = vmatpush1.bf16.msra.mxu0 %v1432
    %1498 = vmatprep.subr.bf16.mxu0 %v1435
    %1499 = vmatpush1.bf16.msra.mxu0 %v1434
    %1500 = vmatprep.subr.bf16.mxu0 %v1437
    %1501 = vmatpush1.bf16.msra.mxu0 %v1436
    %1502 = vmatprep.mubr.bf16.mxu0 %v1276
    %1503 = vmatmul.mubr.bf16.gmra.mrb[0].mxu0 %v1275
    %v1504 = vpop.f32.mrb[0].mxu0
    %v1505 = vadd.f32 0.0, %v1504
    %v1506 = vpop.f32.mrb[0].mxu0
    %v1507 = vadd.f32 0.0, %v1506
    %v1508 = vpop.f32.mrb[0].mxu0
    %v1509 = vpop.f32.mrb[0].mxu0
    %1510 = vdwg.mxu0
    %v1511 = vadd.f32 %v1505, %v1507
    %1512 = vadd.xlane.f32.xlu0 %v1511
    %v1513 = vpop.xlane.xlu0 %1512
    %v1514 = vmul.f32 %v1513, %v818
    %v1515 = vmul.f32 %v1505, %v1505
    %v1516 = vmul.f32 %v1507, %v1507
    %v1517 = vadd.f32 %v1515, %v1516
    %1518 = vadd.xlane.f32.xlu0 %v1517
    %v1519 = vpop.xlane.xlu0 %1518
    %v1520 = vmul.f32 %v1519, %v818
    %v1521 = vmul.f32 %v1514, %v1514
    %v1522 = vsub.f32 %v1520, %v1521
    %v1523 = vadd.f32 %v1522, 1e-05
    %v1524 = vrsqrt.pop %v1523
    %v1525 = vlaneseq
    %v1526 = vshrl.u32 %v1525, 7
    %v1527 = vsub.s32 2, %v1526
    %v1528 = vrot.slane %v107, %v1527
    %v1529 = vlaneseq
    %v1530 = vshrl.u32 %v1529, 7
    %v1531 = vsub.s32 6, %v1530
    %v1532 = vrot.slane %v107, %v1531
    %v1535 = vlaneseq
    %v1536 = vshrl.u32 %v1535, 7
    %v1537 = vsub.s32 2, %v1536
    %v1538 = vrot.slane %v1528, %v1537
    %v1539 = vlaneseq
    %v1540 = vshrl.u32 %v1539, 7
    %v1541 = vsub.s32 2, %v1540
    %v1542 = vrot.slane %v1532, %v1541
    %v1543 = vmul.f32 %v1538, %v1524
    %v1544 = vmul.f32 %v1542, %v1524
    %v1545 = vmul.f32 %v1505, %v1543
    %v1546 = vmul.f32 %v1507, %v1544
    %v1547 = vmul.f32 %v1514, %v1543
    %v1548 = vmul.f32 %v1514, %v1544
    %v1549 = vlaneseq
    %v1550 = vshrl.u32 %v1549, 7
    %v1551 = vsub.s32 3, %v1550
    %v1552 = vrot.slane %v107, %v1551
    %v1553 = vlaneseq
    %v1554 = vshrl.u32 %v1553, 7
    %v1555 = vsub.s32 7, %v1554
    %v1556 = vrot.slane %v107, %v1555
    %v1559 = vlaneseq
    %v1560 = vshrl.u32 %v1559, 7
    %v1561 = vsub.s32 3, %v1560
    %v1562 = vrot.slane %v1552, %v1561
    %v1563 = vlaneseq
    %v1564 = vshrl.u32 %v1563, 7
    %v1565 = vsub.s32 3, %v1564
    %v1566 = vrot.slane %v1556, %v1565
    %v1567 = vsub.f32 %v1562, %v1547
    %v1568 = vsub.f32 %v1566, %v1548
    %v1569 = vadd.f32 %v1545, %v1567
    %v1570 = vadd.f32 %v1546, %v1568
    %v1571 = vadd.f32 %v1569, %v104
    %v1572 = vadd.f32 %v1570, %v105
    %v1573 = vmax.f32 %v1571, 0.0
    %v1574 = vmax.f32 %v1572, 0.0
    %v1575 = vpack.c.bf16 %v1573, %v1573
    %v1576 = vpack.c.bf16 %v1574, %v1574
    %s1577 = scalar_lea.vmem [#allocation10], 128
    %v1578 = vld [vmem:[%s1577] sm:$0xf]
    %v1579 = vld [vmem:[%s1577 + $0x4] sm:$0xf]
    %v1580 = vld [vmem:[%s1577 + $0x8] sm:$0xf]
    %v1581 = vld [vmem:[%s1577 + $0xc] sm:$0xf]
    %v1582 = vld [vmem:[%s1577 + $0x10] sm:$0xf]
    %v1583 = vld [vmem:[%s1577 + $0x14] sm:$0xf]
    %v1584 = vld [vmem:[%s1577 + $0x18] sm:$0xf]
    %v1585 = vld [vmem:[%s1577 + $0x1c] sm:$0xf]
    %v1586 = vld [vmem:[%s1577 + $0x20] sm:$0xf]
    %v1587 = vld [vmem:[%s1577 + $0x24] sm:$0xf]
    %v1588 = vld [vmem:[%s1577 + $0x28] sm:$0xf]
    %v1589 = vld [vmem:[%s1577 + $0x2c] sm:$0xf]
    %v1590 = vld [vmem:[%s1577 + $0x30] sm:$0xf]
    %v1591 = vld [vmem:[%s1577 + $0x34] sm:$0xf]
    %v1592 = vld [vmem:[%s1577 + $0x38] sm:$0xf]
    %v1593 = vld [vmem:[%s1577 + $0x3c] sm:$0xf]
    %v1594 = vld [vmem:[%s1577 + $0x40] sm:$0xf]
    %v1595 = vld [vmem:[%s1577 + $0x44] sm:$0xf]
    %v1596 = vld [vmem:[%s1577 + $0x48] sm:$0xf]
    %v1597 = vld [vmem:[%s1577 + $0x4c] sm:$0xf]
    %v1598 = vld [vmem:[%s1577 + $0x50] sm:$0xf]
    %v1599 = vld [vmem:[%s1577 + $0x54] sm:$0xf]
    %v1600 = vld [vmem:[%s1577 + $0x58] sm:$0xf]
    %v1601 = vld [vmem:[%s1577 + $0x5c] sm:$0xf]
    %v1602 = vld [vmem:[%s1577 + $0x60] sm:$0xf]
    %v1603 = vld [vmem:[%s1577 + $0x64] sm:$0xf]
    %v1604 = vld [vmem:[%s1577 + $0x68] sm:$0xf]
    %v1605 = vld [vmem:[%s1577 + $0x6c] sm:$0xf]
    %v1606 = vld [vmem:[%s1577 + $0x70] sm:$0xf]
    %v1607 = vld [vmem:[%s1577 + $0x74] sm:$0xf]
    %v1608 = vld [vmem:[%s1577 + $0x78] sm:$0xf]
    %v1609 = vld [vmem:[%s1577 + $0x7c] sm:$0xf]
    %v1642 = vunpack.c.l.b16 %v1578
    %v1643 = vunpack.c.l.b16 %v1579
    %v1644 = vunpack.c.l.b16 %v1580
    %v1645 = vunpack.c.l.b16 %v1581
    %v1646 = vunpack.c.l.b16 %v1582
    %v1647 = vunpack.c.l.b16 %v1583
    %v1648 = vunpack.c.l.b16 %v1584
    %v1649 = vunpack.c.l.b16 %v1585
    %v1650 = vunpack.c.l.b16 %v1586
    %v1651 = vunpack.c.l.b16 %v1587
    %v1652 = vunpack.c.l.b16 %v1588
    %v1653 = vunpack.c.l.b16 %v1589
    %v1654 = vunpack.c.l.b16 %v1590
    %v1655 = vunpack.c.l.b16 %v1591
    %v1656 = vunpack.c.l.b16 %v1592
    %v1657 = vunpack.c.l.b16 %v1593
    %v1658 = vunpack.c.l.b16 %v1594
    %v1659 = vunpack.c.l.b16 %v1595
    %v1660 = vunpack.c.l.b16 %v1596
    %v1661 = vunpack.c.l.b16 %v1597
    %v1662 = vunpack.c.l.b16 %v1598
    %v1663 = vunpack.c.l.b16 %v1599
    %v1664 = vunpack.c.l.b16 %v1600
    %v1665 = vunpack.c.l.b16 %v1601
    %v1666 = vunpack.c.l.b16 %v1602
    %v1667 = vunpack.c.l.b16 %v1603
    %v1668 = vunpack.c.l.b16 %v1604
    %v1669 = vunpack.c.l.b16 %v1605
    %v1670 = vunpack.c.l.b16 %v1606
    %v1671 = vunpack.c.l.b16 %v1607
    %v1672 = vunpack.c.l.b16 %v1608
    %v1673 = vunpack.c.l.b16 %v1609
    %v1674 = vpack.c.b16 %v1643, %v1642
    %v1675 = vpack.c.b16 %v1645, %v1644
    %v1676 = vpack.c.b16 %v1647, %v1646
    %v1677 = vpack.c.b16 %v1649, %v1648
    %v1678 = vpack.c.b16 %v1651, %v1650
    %v1679 = vpack.c.b16 %v1653, %v1652
    %v1680 = vpack.c.b16 %v1655, %v1654
    %v1681 = vpack.c.b16 %v1657, %v1656
    %v1682 = vpack.c.b16 %v1659, %v1658
    %v1683 = vpack.c.b16 %v1661, %v1660
    %v1684 = vpack.c.b16 %v1663, %v1662
    %v1685 = vpack.c.b16 %v1665, %v1664
    %v1686 = vpack.c.b16 %v1667, %v1666
    %v1687 = vpack.c.b16 %v1669, %v1668
    %v1688 = vpack.c.b16 %v1671, %v1670
    %v1689 = vpack.c.b16 %v1673, %v1672
    %1706 = vmatprep.subr.bf16.mxu0 0
    %1707 = vmatpush1.bf16.msra.mxu0 %v1674
    %1708 = vmatprep.subr.bf16.mxu0 0
    %1709 = vmatpush1.bf16.msra.mxu0 %v1675
    %1710 = vmatprep.subr.bf16.mxu0 0
    %1711 = vmatpush1.bf16.msra.mxu0 %v1676
    %1712 = vmatprep.subr.bf16.mxu0 0
    %1713 = vmatpush1.bf16.msra.mxu0 %v1677
    %1714 = vmatprep.subr.bf16.mxu0 0
    %1715 = vmatpush1.bf16.msra.mxu0 %v1678
    %1716 = vmatprep.subr.bf16.mxu0 0
    %1717 = vmatpush1.bf16.msra.mxu0 %v1679
    %1718 = vmatprep.subr.bf16.mxu0 0
    %1719 = vmatpush1.bf16.msra.mxu0 %v1680
    %1720 = vmatprep.subr.bf16.mxu0 0
    %1721 = vmatpush1.bf16.msra.mxu0 %v1681
    %1722 = vmatprep.subr.bf16.mxu0 0
    %1723 = vmatpush1.bf16.msra.mxu0 %v1682
    %1724 = vmatprep.subr.bf16.mxu0 0
    %1725 = vmatpush1.bf16.msra.mxu0 %v1683
    %1726 = vmatprep.subr.bf16.mxu0 0
    %1727 = vmatpush1.bf16.msra.mxu0 %v1684
    %1728 = vmatprep.subr.bf16.mxu0 0
    %1729 = vmatpush1.bf16.msra.mxu0 %v1685
    %1730 = vmatprep.subr.bf16.mxu0 0
    %1731 = vmatpush1.bf16.msra.mxu0 %v1686
    %1732 = vmatprep.subr.bf16.mxu0 0
    %1733 = vmatpush1.bf16.msra.mxu0 %v1687
    %1734 = vmatprep.subr.bf16.mxu0 0
    %1735 = vmatpush1.bf16.msra.mxu0 %v1688
    %1736 = vmatprep.subr.bf16.mxu0 0
    %1737 = vmatpush1.bf16.msra.mxu0 %v1689
    %1738 = vmatprep.mubr.bf16.mxu0 %v1576
    %1739 = vmatmul.mubr.bf16.gmra.mrb[0].mxu0 %v1575
    %v1740 = vpop.f32.mrb[0].mxu0
    %v1741 = vadd.f32 0.0, %v1740
    %v1742 = vpop.f32.mrb[0].mxu0
    %v1743 = vpop.f32.mrb[0].mxu0
    %v1744 = vpop.f32.mrb[0].mxu0
    %1745 = vdwg.mxu0
    %v1778 = vunpack.c.l.b16 %v1180
    %v1779 = vunpack.c.l.b16 %v1181
    %v1780 = vunpack.c.l.b16 %v1182
    %v1781 = vunpack.c.l.b16 %v1183
    %v1782 = vunpack.c.l.b16 %v1184
    %v1783 = vunpack.c.l.b16 %v1185
    %v1784 = vunpack.c.l.b16 %v1186
    %v1785 = vunpack.c.l.b16 %v1187
    %v1786 = vunpack.c.l.b16 %v1188
    %v1787 = vunpack.c.l.b16 %v1189
    %v1788 = vunpack.c.l.b16 %v1190
    %v1789 = vunpack.c.l.b16 %v1191
    %v1790 = vunpack.c.l.b16 %v1192
    %v1791 = vunpack.c.l.b16 %v1193
    %v1792 = vunpack.c.l.b16 %v1194
    %v1793 = vunpack.c.l.b16 %v1195
    %v1794 = vunpack.c.l.b16 %v1196
    %v1795 = vunpack.c.l.b16 %v1197
    %v1796 = vunpack.c.l.b16 %v1198
    %v1797 = vunpack.c.l.b16 %v1199
    %v1798 = vunpack.c.l.b16 %v1200
    %v1799 = vunpack.c.l.b16 %v1201
    %v1800 = vunpack.c.l.b16 %v1202
    %v1801 = vunpack.c.l.b16 %v1203
    %v1802 = vunpack.c.l.b16 %v1204
    %v1803 = vunpack.c.l.b16 %v1205
    %v1804 = vunpack.c.l.b16 %v1206
    %v1805 = vunpack.c.l.b16 %v1207
    %v1806 = vunpack.c.l.b16 %v1208
    %v1807 = vunpack.c.l.b16 %v1209
    %v1808 = vunpack.c.l.b16 %v1210
    %v1809 = vunpack.c.l.b16 %v1211
    %v1810 = vpack.c.b16 %v1779, %v1778
    %v1811 = vpack.c.b16 %v1781, %v1780
    %v1812 = vpack.c.b16 %v1783, %v1782
    %v1813 = vpack.c.b16 %v1785, %v1784
    %v1814 = vpack.c.b16 %v1787, %v1786
    %v1815 = vpack.c.b16 %v1789, %v1788
    %v1816 = vpack.c.b16 %v1791, %v1790
    %v1817 = vpack.c.b16 %v1793, %v1792
    %v1818 = vpack.c.b16 %v1795, %v1794
    %v1819 = vpack.c.b16 %v1797, %v1796
    %v1820 = vpack.c.b16 %v1799, %v1798
    %v1821 = vpack.c.b16 %v1801, %v1800
    %v1822 = vpack.c.b16 %v1803, %v1802
    %v1823 = vpack.c.b16 %v1805, %v1804
    %v1824 = vpack.c.b16 %v1807, %v1806
    %v1825 = vpack.c.b16 %v1809, %v1808
    %1842 = vmatprep.subr.bf16.mxu0 0
    %1843 = vmatpush1.bf16.msra.mxu0 %v1810
    %1844 = vmatprep.subr.bf16.mxu0 0
    %1845 = vmatpush1.bf16.msra.mxu0 %v1811
    %1846 = vmatprep.subr.bf16.mxu0 0
    %1847 = vmatpush1.bf16.msra.mxu0 %v1812
    %1848 = vmatprep.subr.bf16.mxu0 0
    %1849 = vmatpush1.bf16.msra.mxu0 %v1813
    %1850 = vmatprep.subr.bf16.mxu0 0
    %1851 = vmatpush1.bf16.msra.mxu0 %v1814
    %1852 = vmatprep.subr.bf16.mxu0 0
    %1853 = vmatpush1.bf16.msra.mxu0 %v1815
    %1854 = vmatprep.subr.bf16.mxu0 0
    %1855 = vmatpush1.bf16.msra.mxu0 %v1816
    %1856 = vmatprep.subr.bf16.mxu0 0
    %1857 = vmatpush1.bf16.msra.mxu0 %v1817
    %1858 = vmatprep.subr.bf16.mxu0 0
    %1859 = vmatpush1.bf16.msra.mxu0 %v1818
    %1860 = vmatprep.subr.bf16.mxu0 0
    %1861 = vmatpush1.bf16.msra.mxu0 %v1819
    %1862 = vmatprep.subr.bf16.mxu0 0
    %1863 = vmatpush1.bf16.msra.mxu0 %v1820
    %1864 = vmatprep.subr.bf16.mxu0 0
    %1865 = vmatpush1.bf16.msra.mxu0 %v1821
    %1866 = vmatprep.subr.bf16.mxu0 0
    %1867 = vmatpush1.bf16.msra.mxu0 %v1822
    %1868 = vmatprep.subr.bf16.mxu0 0
    %1869 = vmatpush1.bf16.msra.mxu0 %v1823
    %1870 = vmatprep.subr.bf16.mxu0 0
    %1871 = vmatpush1.bf16.msra.mxu0 %v1824
    %1872 = vmatprep.subr.bf16.mxu0 0
    %1873 = vmatpush1.bf16.msra.mxu0 %v1825
    %1874 = vmatprep.mubr.bf16.mxu0 %v1179
    %1875 = vmatmul.mubr.bf16.gmra.mrb[0].mxu0 %v1178
    %v1876 = vpop.f32.mrb[0].mxu0
    %v1877 = vadd.f32 %v1741, %v1876
    %v1878 = vpop.f32.mrb[0].mxu0
    %v1879 = vpop.f32.mrb[0].mxu0
    %v1880 = vpop.f32.mrb[0].mxu0
    %1881 = vdwg.mxu0
    %v1882 = vadd.f32 %v809, %v811
    %1883 = vadd.xlane.f32.xlu0 %v1882
    %v1884 = vpop.xlane.xlu0 %1883
    %v1885 = vmul.f32 %v1884, %v818
    %v1886 = vmul.f32 %v809, %v809
    %v1887 = vmul.f32 %v811, %v811
    %v1888 = vadd.f32 %v1886, %v1887
    %1889 = vadd.xlane.f32.xlu0 %v1888
    %v1890 = vpop.xlane.xlu0 %1889
    %v1891 = vmul.f32 %v1890, %v818
    %v1892 = vmul.f32 %v1885, %v1885
    %v1893 = vsub.f32 %v1891, %v1892
    %v1894 = vadd.f32 %v1893, 1e-05
    %v1895 = vrsqrt.pop %v1894
    %v1897 = vlaneseq
    %v1898 = vshrl.u32 %v1897, 7
    %v1899 = vsub.s32 0, %v1898
    %v1900 = vrot.slane %v108, %v1899
    %v1901 = vlaneseq
    %v1902 = vshrl.u32 %v1901, 7
    %v1903 = vsub.s32 4, %v1902
    %v1904 = vrot.slane %v108, %v1903
    %v1907 = vlaneseq
    %v1908 = vshrl.u32 %v1907, 7
    %v1909 = vsub.s32 0, %v1908
    %v1910 = vrot.slane %v1900, %v1909
    %v1911 = vlaneseq
    %v1912 = vshrl.u32 %v1911, 7
    %v1913 = vsub.s32 0, %v1912
    %v1914 = vrot.slane %v1904, %v1913
    %v1915 = vmul.f32 %v1910, %v1895
    %v1916 = vmul.f32 %v1914, %v1895
    %v1917 = vmul.f32 %v809, %v1915
    %v1918 = vmul.f32 %v811, %v1916
    %v1919 = vmul.f32 %v1885, %v1915
    %v1920 = vmul.f32 %v1885, %v1916
    %v1921 = vlaneseq
    %v1922 = vshrl.u32 %v1921, 7
    %v1923 = vsub.s32 1, %v1922
    %v1924 = vrot.slane %v108, %v1923
    %v1925 = vlaneseq
    %v1926 = vshrl.u32 %v1925, 7
    %v1927 = vsub.s32 5, %v1926
    %v1928 = vrot.slane %v108, %v1927
    %v1931 = vlaneseq
    %v1932 = vshrl.u32 %v1931, 7
    %v1933 = vsub.s32 1, %v1932
    %v1934 = vrot.slane %v1924, %v1933
    %v1935 = vlaneseq
    %v1936 = vshrl.u32 %v1935, 7
    %v1937 = vsub.s32 1, %v1936
    %v1938 = vrot.slane %v1928, %v1937
    %v1939 = vsub.f32 %v1934, %v1919
    %v1940 = vsub.f32 %v1938, %v1920
    %v1941 = vadd.f32 %v1917, %v1939
    %v1942 = vadd.f32 %v1918, %v1940
    %v1943 = vmax.f32 %v1941, 0.0
    %v1944 = vmax.f32 %v1942, 0.0
    %v1945 = vpack.c.bf16 %v1943, %v1943
    %v1946 = vpack.c.bf16 %v1944, %v1944
    %s1947 = scalar_lea.vmem [#allocation7], 512
    %v1948 = vld [vmem:[%s1947] sm:$0xff]
    %v1949 = vld [vmem:[%s1947 + $0x8] sm:$0xff]
    %v1950 = vld [vmem:[%s1947 + $0x10] sm:$0xff]
    %v1951 = vld [vmem:[%s1947 + $0x18] sm:$0xff]
    %v1952 = vld [vmem:[%s1947 + $0x20] sm:$0xff]
    %v1953 = vld [vmem:[%s1947 + $0x28] sm:$0xff]
    %v1954 = vld [vmem:[%s1947 + $0x30] sm:$0xff]
    %v1955 = vld [vmem:[%s1947 + $0x38] sm:$0xff]
    %v1956 = vld [vmem:[%s1947 + $0x40] sm:$0xff]
    %v1957 = vld [vmem:[%s1947 + $0x48] sm:$0xff]
    %v1958 = vld [vmem:[%s1947 + $0x50] sm:$0xff]
    %v1959 = vld [vmem:[%s1947 + $0x58] sm:$0xff]
    %v1960 = vld [vmem:[%s1947 + $0x60] sm:$0xff]
    %v1961 = vld [vmem:[%s1947 + $0x68] sm:$0xff]
    %v1962 = vld [vmem:[%s1947 + $0x70] sm:$0xff]
    %v1963 = vld [vmem:[%s1947 + $0x78] sm:$0xff]
    %v1964 = vld [vmem:[%s1947 + $0x80] sm:$0xff]
    %v1965 = vld [vmem:[%s1947 + $0x88] sm:$0xff]
    %v1966 = vld [vmem:[%s1947 + $0x90] sm:$0xff]
    %v1967 = vld [vmem:[%s1947 + $0x98] sm:$0xff]
    %v1968 = vld [vmem:[%s1947 + $0xa0] sm:$0xff]
    %v1969 = vld [vmem:[%s1947 + $0xa8] sm:$0xff]
    %v1970 = vld [vmem:[%s1947 + $0xb0] sm:$0xff]
    %v1971 = vld [vmem:[%s1947 + $0xb8] sm:$0xff]
    %v1972 = vld [vmem:[%s1947 + $0xc0] sm:$0xff]
    %v1973 = vld [vmem:[%s1947 + $0xc8] sm:$0xff]
    %v1974 = vld [vmem:[%s1947 + $0xd0] sm:$0xff]
    %v1975 = vld [vmem:[%s1947 + $0xd8] sm:$0xff]
    %v1976 = vld [vmem:[%s1947 + $0xe0] sm:$0xff]
    %v1977 = vld [vmem:[%s1947 + $0xe8] sm:$0xff]
    %v1978 = vld [vmem:[%s1947 + $0xf0] sm:$0xff]
    %v1979 = vld [vmem:[%s1947 + $0xf8] sm:$0xff]
    %v2012 = vunpack.c.l.b16 %v1948
    %v2013 = vunpack.c.h.b16 %v1948
    %v2014 = vunpack.c.l.b16 %v1949
    %v2015 = vunpack.c.h.b16 %v1949
    %v2016 = vunpack.c.l.b16 %v1950
    %v2017 = vunpack.c.h.b16 %v1950
    %v2018 = vunpack.c.l.b16 %v1951
    %v2019 = vunpack.c.h.b16 %v1951
    %v2020 = vunpack.c.l.b16 %v1952
    %v2021 = vunpack.c.h.b16 %v1952
    %v2022 = vunpack.c.l.b16 %v1953
    %v2023 = vunpack.c.h.b16 %v1953
    %v2024 = vunpack.c.l.b16 %v1954
    %v2025 = vunpack.c.h.b16 %v1954
    %v2026 = vunpack.c.l.b16 %v1955
    %v2027 = vunpack.c.h.b16 %v1955
    %v2028 = vunpack.c.l.b16 %v1956
    %v2029 = vunpack.c.h.b16 %v1956
    %v2030 = vunpack.c.l.b16 %v1957
    %v2031 = vunpack.c.h.b16 %v1957
    %v2032 = vunpack.c.l.b16 %v1958
    %v2033 = vunpack.c.h.b16 %v1958
    %v2034 = vunpack.c.l.b16 %v1959
    %v2035 = vunpack.c.h.b16 %v1959
    %v2036 = vunpack.c.l.b16 %v1960
    %v2037 = vunpack.c.h.b16 %v1960
    %v2038 = vunpack.c.l.b16 %v1961
    %v2039 = vunpack.c.h.b16 %v1961
    %v2040 = vunpack.c.l.b16 %v1962
    %v2041 = vunpack.c.h.b16 %v1962
    %v2042 = vunpack.c.l.b16 %v1963
    %v2043 = vunpack.c.h.b16 %v1963
    %v2044 = vunpack.c.l.b16 %v1964
    %v2045 = vunpack.c.h.b16 %v1964
    %v2046 = vunpack.c.l.b16 %v1965
    %v2047 = vunpack.c.h.b16 %v1965
    %v2048 = vunpack.c.l.b16 %v1966
    %v2049 = vunpack.c.h.b16 %v1966
    %v2050 = vunpack.c.l.b16 %v1967
    %v2051 = vunpack.c.h.b16 %v1967
    %v2052 = vunpack.c.l.b16 %v1968
    %v2053 = vunpack.c.h.b16 %v1968
    %v2054 = vunpack.c.l.b16 %v1969
    %v2055 = vunpack.c.h.b16 %v1969
    %v2056 = vunpack.c.l.b16 %v1970
    %v2057 = vunpack.c.h.b16 %v1970
    %v2058 = vunpack.c.l.b16 %v1971
    %v2059 = vunpack.c.h.b16 %v1971
    %v2060 = vunpack.c.l.b16 %v1972
    %v2061 = vunpack.c.h.b16 %v1972
    %v2062 = vunpack.c.l.b16 %v1973
    %v2063 = vunpack.c.h.b16 %v1973
    %v2064 = vunpack.c.l.b16 %v1974
    %v2065 = vunpack.c.h.b16 %v1974
    %v2066 = vunpack.c.l.b16 %v1975
    %v2067 = vunpack.c.h.b16 %v1975
    %v2068 = vunpack.c.l.b16 %v1976
    %v2069 = vunpack.c.h.b16 %v1976
    %v2070 = vunpack.c.l.b16 %v1977
    %v2071 = vunpack.c.h.b16 %v1977
    %v2072 = vunpack.c.l.b16 %v1978
    %v2073 = vunpack.c.h.b16 %v1978
    %v2074 = vunpack.c.l.b16 %v1979
    %v2075 = vunpack.c.h.b16 %v1979
    %v2076 = vpack.c.b16 %v2014, %v2012
    %v2077 = vpack.c.b16 %v2015, %v2013
    %v2078 = vpack.c.b16 %v2018, %v2016
    %v2079 = vpack.c.b16 %v2019, %v2017
    %v2080 = vpack.c.b16 %v2022, %v2020
    %v2081 = vpack.c.b16 %v2023, %v2021
    %v2082 = vpack.c.b16 %v2026, %v2024
    %v2083 = vpack.c.b16 %v2027, %v2025
    %v2084 = vpack.c.b16 %v2030, %v2028
    %v2085 = vpack.c.b16 %v2031, %v2029
    %v2086 = vpack.c.b16 %v2034, %v2032
    %v2087 = vpack.c.b16 %v2035, %v2033
    %v2088 = vpack.c.b16 %v2038, %v2036
    %v2089 = vpack.c.b16 %v2039, %v2037
    %v2090 = vpack.c.b16 %v2042, %v2040
    %v2091 = vpack.c.b16 %v2043, %v2041
    %v2092 = vpack.c.b16 %v2046, %v2044
    %v2093 = vpack.c.b16 %v2047, %v2045
    %v2094 = vpack.c.b16 %v2050, %v2048
    %v2095 = vpack.c.b16 %v2051, %v2049
    %v2096 = vpack.c.b16 %v2054, %v2052
    %v2097 = vpack.c.b16 %v2055, %v2053
    %v2098 = vpack.c.b16 %v2058, %v2056
    %v2099 = vpack.c.b16 %v2059, %v2057
    %v2100 = vpack.c.b16 %v2062, %v2060
    %v2101 = vpack.c.b16 %v2063, %v2061
    %v2102 = vpack.c.b16 %v2066, %v2064
    %v2103 = vpack.c.b16 %v2067, %v2065
    %v2104 = vpack.c.b16 %v2070, %v2068
    %v2105 = vpack.c.b16 %v2071, %v2069
    %v2106 = vpack.c.b16 %v2074, %v2072
    %v2107 = vpack.c.b16 %v2075, %v2073
    %2140 = vmatprep.subr.bf16.mxu0 %v2077
    %2141 = vmatpush1.bf16.msra.mxu0 %v2076
    %2142 = vmatprep.subr.bf16.mxu0 %v2079
    %2143 = vmatpush1.bf16.msra.mxu0 %v2078
    %2144 = vmatprep.subr.bf16.mxu0 %v2081
    %2145 = vmatpush1.bf16.msra.mxu0 %v2080
    %2146 = vmatprep.subr.bf16.mxu0 %v2083
    %2147 = vmatpush1.bf16.msra.mxu0 %v2082
    %2148 = vmatprep.subr.bf16.mxu0 %v2085
    %2149 = vmatpush1.bf16.msra.mxu0 %v2084
    %2150 = vmatprep.subr.bf16.mxu0 %v2087
    %2151 = vmatpush1.bf16.msra.mxu0 %v2086
    %2152 = vmatprep.subr.bf16.mxu0 %v2089
    %2153 = vmatpush1.bf16.msra.mxu0 %v2088
    %2154 = vmatprep.subr.bf16.mxu0 %v2091
    %2155 = vmatpush1.bf16.msra.mxu0 %v2090
    %2156 = vmatprep.subr.bf16.mxu0 %v2093
    %2157 = vmatpush1.bf16.msra.mxu0 %v2092
    %2158 = vmatprep.subr.bf16.mxu0 %v2095
    %2159 = vmatpush1.bf16.msra.mxu0 %v2094
    %2160 = vmatprep.subr.bf16.mxu0 %v2097
    %2161 = vmatpush1.bf16.msra.mxu0 %v2096
    %2162 = vmatprep.subr.bf16.mxu0 %v2099
    %2163 = vmatpush1.bf16.msra.mxu0 %v2098
    %2164 = vmatprep.subr.bf16.mxu0 %v2101
    %2165 = vmatpush1.bf16.msra.mxu0 %v2100
    %2166 = vmatprep.subr.bf16.mxu0 %v2103
    %2167 = vmatpush1.bf16.msra.mxu0 %v2102
    %2168 = vmatprep.subr.bf16.mxu0 %v2105
    %2169 = vmatpush1.bf16.msra.mxu0 %v2104
    %2170 = vmatprep.subr.bf16.mxu0 %v2107
    %2171 = vmatpush1.bf16.msra.mxu0 %v2106
    %2172 = vmatprep.mubr.bf16.mxu0 %v1946
    %2173 = vmatmul.mubr.bf16.gmra.mrb[0].mxu0 %v1945
    %v2174 = vpop.f32.mrb[0].mxu0
    %v2175 = vadd.f32 0.0, %v2174
    %v2176 = vpop.f32.mrb[0].mxu0
    %v2177 = vadd.f32 0.0, %v2176
    %v2178 = vpop.f32.mrb[0].mxu0
    %v2179 = vpop.f32.mrb[0].mxu0
    %2180 = vdwg.mxu0
    %v2181 = vadd.f32 %v2175, %v2177
    %2182 = vadd.xlane.f32.xlu0 %v2181
    %v2183 = vpop.xlane.xlu0 %2182
    %v2184 = vmul.f32 %v2183, %v818
    %v2185 = vmul.f32 %v2175, %v2175
    %v2186 = vmul.f32 %v2177, %v2177
    %v2187 = vadd.f32 %v2185, %v2186
    %2188 = vadd.xlane.f32.xlu0 %v2187
    %v2189 = vpop.xlane.xlu0 %2188
    %v2190 = vmul.f32 %v2189, %v818
    %v2191 = vmul.f32 %v2184, %v2184
    %v2192 = vsub.f32 %v2190, %v2191
    %v2193 = vadd.f32 %v2192, 1e-05
    %v2194 = vrsqrt.pop %v2193
    %v2195 = vlaneseq
    %v2196 = vshrl.u32 %v2195, 7
    %v2197 = vsub.s32 2, %v2196
    %v2198 = vrot.slane %v108, %v2197
    %v2199 = vlaneseq
    %v2200 = vshrl.u32 %v2199, 7
    %v2201 = vsub.s32 6, %v2200
    %v2202 = vrot.slane %v108, %v2201
    %v2205 = vlaneseq
    %v2206 = vshrl.u32 %v2205, 7
    %v2207 = vsub.s32 2, %v2206
    %v2208 = vrot.slane %v2198, %v2207
    %v2209 = vlaneseq
    %v2210 = vshrl.u32 %v2209, 7
    %v2211 = vsub.s32 2, %v2210
    %v2212 = vrot.slane %v2202, %v2211
    %v2213 = vmul.f32 %v2208, %v2194
    %v2214 = vmul.f32 %v2212, %v2194
    %v2215 = vmul.f32 %v2175, %v2213
    %v2216 = vmul.f32 %v2177, %v2214
    %v2217 = vmul.f32 %v2184, %v2213
    %v2218 = vmul.f32 %v2184, %v2214
    %v2219 = vlaneseq
    %v2220 = vshrl.u32 %v2219, 7
    %v2221 = vsub.s32 3, %v2220
    %v2222 = vrot.slane %v108, %v2221
    %v2223 = vlaneseq
    %v2224 = vshrl.u32 %v2223, 7
    %v2225 = vsub.s32 7, %v2224
    %v2226 = vrot.slane %v108, %v2225
    %v2229 = vlaneseq
    %v2230 = vshrl.u32 %v2229, 7
    %v2231 = vsub.s32 3, %v2230
    %v2232 = vrot.slane %v2222, %v2231
    %v2233 = vlaneseq
    %v2234 = vshrl.u32 %v2233, 7
    %v2235 = vsub.s32 3, %v2234
    %v2236 = vrot.slane %v2226, %v2235
    %v2237 = vsub.f32 %v2232, %v2217
    %v2238 = vsub.f32 %v2236, %v2218
    %v2239 = vadd.f32 %v2215, %v2237
    %v2240 = vadd.f32 %v2216, %v2238
    %v2241 = vadd.f32 %v2239, %v104
    %v2242 = vadd.f32 %v2240, %v105
    %v2243 = vmax.f32 %v2241, 0.0
    %v2244 = vmax.f32 %v2242, 0.0
    %v2245 = vpack.c.bf16 %v2243, %v2243
    %v2246 = vpack.c.bf16 %v2244, %v2244
    %s2247 = scalar_lea.vmem [#allocation10], 256
    %v2248 = vld [vmem:[%s2247] sm:$0xf]
    %v2249 = vld [vmem:[%s2247 + $0x4] sm:$0xf]
    %v2250 = vld [vmem:[%s2247 + $0x8] sm:$0xf]
    %v2251 = vld [vmem:[%s2247 + $0xc] sm:$0xf]
    %v2252 = vld [vmem:[%s2247 + $0x10] sm:$0xf]
    %v2253 = vld [vmem:[%s2247 + $0x14] sm:$0xf]
    %v2254 = vld [vmem:[%s2247 + $0x18] sm:$0xf]
    %v2255 = vld [vmem:[%s2247 + $0x1c] sm:$0xf]
    %v2256 = vld [vmem:[%s2247 + $0x20] sm:$0xf]
    %v2257 = vld [vmem:[%s2247 + $0x24] sm:$0xf]
    %v2258 = vld [vmem:[%s2247 + $0x28] sm:$0xf]
    %v2259 = vld [vmem:[%s2247 + $0x2c] sm:$0xf]
    %v2260 = vld [vmem:[%s2247 + $0x30] sm:$0xf]
    %v2261 = vld [vmem:[%s2247 + $0x34] sm:$0xf]
    %v2262 = vld [vmem:[%s2247 + $0x38] sm:$0xf]
    %v2263 = vld [vmem:[%s2247 + $0x3c] sm:$0xf]
    %v2264 = vld [vmem:[%s2247 + $0x40] sm:$0xf]
    %v2265 = vld [vmem:[%s2247 + $0x44] sm:$0xf]
    %v2266 = vld [vmem:[%s2247 + $0x48] sm:$0xf]
    %v2267 = vld [vmem:[%s2247 + $0x4c] sm:$0xf]
    %v2268 = vld [vmem:[%s2247 + $0x50] sm:$0xf]
    %v2269 = vld [vmem:[%s2247 + $0x54] sm:$0xf]
    %v2270 = vld [vmem:[%s2247 + $0x58] sm:$0xf]
    %v2271 = vld [vmem:[%s2247 + $0x5c] sm:$0xf]
    %v2272 = vld [vmem:[%s2247 + $0x60] sm:$0xf]
    %v2273 = vld [vmem:[%s2247 + $0x64] sm:$0xf]
    %v2274 = vld [vmem:[%s2247 + $0x68] sm:$0xf]
    %v2275 = vld [vmem:[%s2247 + $0x6c] sm:$0xf]
    %v2276 = vld [vmem:[%s2247 + $0x70] sm:$0xf]
    %v2277 = vld [vmem:[%s2247 + $0x74] sm:$0xf]
    %v2278 = vld [vmem:[%s2247 + $0x78] sm:$0xf]
    %v2279 = vld [vmem:[%s2247 + $0x7c] sm:$0xf]
    %v2312 = vunpack.c.l.b16 %v2248
    %v2313 = vunpack.c.l.b16 %v2249
    %v2314 = vunpack.c.l.b16 %v2250
    %v2315 = vunpack.c.l.b16 %v2251
    %v2316 = vunpack.c.l.b16 %v2252
    %v2317 = vunpack.c.l.b16 %v2253
    %v2318 = vunpack.c.l.b16 %v2254
    %v2319 = vunpack.c.l.b16 %v2255
    %v2320 = vunpack.c.l.b16 %v2256
    %v2321 = vunpack.c.l.b16 %v2257
    %v2322 = vunpack.c.l.b16 %v2258
    %v2323 = vunpack.c.l.b16 %v2259
    %v2324 = vunpack.c.l.b16 %v2260
    %v2325 = vunpack.c.l.b16 %v2261
    %v2326 = vunpack.c.l.b16 %v2262
    %v2327 = vunpack.c.l.b16 %v2263
    %v2328 = vunpack.c.l.b16 %v2264
    %v2329 = vunpack.c.l.b16 %v2265
    %v2330 = vunpack.c.l.b16 %v2266
    %v2331 = vunpack.c.l.b16 %v2267
    %v2332 = vunpack.c.l.b16 %v2268
    %v2333 = vunpack.c.l.b16 %v2269
    %v2334 = vunpack.c.l.b16 %v2270
    %v2335 = vunpack.c.l.b16 %v2271
    %v2336 = vunpack.c.l.b16 %v2272
    %v2337 = vunpack.c.l.b16 %v2273
    %v2338 = vunpack.c.l.b16 %v2274
    %v2339 = vunpack.c.l.b16 %v2275
    %v2340 = vunpack.c.l.b16 %v2276
    %v2341 = vunpack.c.l.b16 %v2277
    %v2342 = vunpack.c.l.b16 %v2278
    %v2343 = vunpack.c.l.b16 %v2279
    %v2344 = vpack.c.b16 %v2313, %v2312
    %v2345 = vpack.c.b16 %v2315, %v2314
    %v2346 = vpack.c.b16 %v2317, %v2316
    %v2347 = vpack.c.b16 %v2319, %v2318
    %v2348 = vpack.c.b16 %v2321, %v2320
    %v2349 = vpack.c.b16 %v2323, %v2322
    %v2350 = vpack.c.b16 %v2325, %v2324
    %v2351 = vpack.c.b16 %v2327, %v2326
    %v2352 = vpack.c.b16 %v2329, %v2328
    %v2353 = vpack.c.b16 %v2331, %v2330
    %v2354 = vpack.c.b16 %v2333, %v2332
    %v2355 = vpack.c.b16 %v2335, %v2334
    %v2356 = vpack.c.b16 %v2337, %v2336
    %v2357 = vpack.c.b16 %v2339, %v2338
    %v2358 = vpack.c.b16 %v2341, %v2340
    %v2359 = vpack.c.b16 %v2343, %v2342
    %2376 = vmatprep.subr.bf16.mxu0 0
    %2377 = vmatpush1.bf16.msra.mxu0 %v2344
    %2378 = vmatprep.subr.bf16.mxu0 0
    %2379 = vmatpush1.bf16.msra.mxu0 %v2345
    %2380 = vmatprep.subr.bf16.mxu0 0
    %2381 = vmatpush1.bf16.msra.mxu0 %v2346
    %2382 = vmatprep.subr.bf16.mxu0 0
    %2383 = vmatpush1.bf16.msra.mxu0 %v2347
    %2384 = vmatprep.subr.bf16.mxu0 0
    %2385 = vmatpush1.bf16.msra.mxu0 %v2348
    %2386 = vmatprep.subr.bf16.mxu0 0
    %2387 = vmatpush1.bf16.msra.mxu0 %v2349
    %2388 = vmatprep.subr.bf16.mxu0 0
    %2389 = vmatpush1.bf16.msra.mxu0 %v2350
    %2390 = vmatprep.subr.bf16.mxu0 0
    %2391 = vmatpush1.bf16.msra.mxu0 %v2351
    %2392 = vmatprep.subr.bf16.mxu0 0
    %2393 = vmatpush1.bf16.msra.mxu0 %v2352
    %2394 = vmatprep.subr.bf16.mxu0 0
    %2395 = vmatpush1.bf16.msra.mxu0 %v2353
    %2396 = vmatprep.subr.bf16.mxu0 0
    %2397 = vmatpush1.bf16.msra.mxu0 %v2354
    %2398 = vmatprep.subr.bf16.mxu0 0
    %2399 = vmatpush1.bf16.msra.mxu0 %v2355
    %2400 = vmatprep.subr.bf16.mxu0 0
    %2401 = vmatpush1.bf16.msra.mxu0 %v2356
    %2402 = vmatprep.subr.bf16.mxu0 0
    %2403 = vmatpush1.bf16.msra.mxu0 %v2357
    %2404 = vmatprep.subr.bf16.mxu0 0
    %2405 = vmatpush1.bf16.msra.mxu0 %v2358
    %2406 = vmatprep.subr.bf16.mxu0 0
    %2407 = vmatpush1.bf16.msra.mxu0 %v2359
    %2408 = vmatprep.mubr.bf16.mxu0 %v2246
    %2409 = vmatmul.mubr.bf16.gmra.mrb[0].mxu0 %v2245
    %v2410 = vpop.f32.mrb[0].mxu0
    %v2411 = vadd.f32 0.0, %v2410
    %v2412 = vpop.f32.mrb[0].mxu0
    %v2413 = vpop.f32.mrb[0].mxu0
    %v2414 = vpop.f32.mrb[0].mxu0
    %2415 = vdwg.mxu0
    %v2416 = vadd.f32 %v1877, %v2411
    %v2417 = vld [vmem:[#allocation11] sm:$0x1]
    %v2419 = vlaneseq
    %v2420 = vshrl.u32 %v2419, 7
    %v2421 = vsub.s32 0, %v2420
    %v2422 = vrot.slane %v2417, %v2421
    %v2424 = vadd.f32 %v2416, %v2422
    %2425 = vst [vmem:[#allocation13] sm:$0xff] %v2424
    // Predicated region
    $region50: #{tpu_custom_call.1} parent=1 // pred_check
      _
    $region51: #{tpu_custom_call.1} parent=1 // pred_check_branch
      %2427 = sbr.rel (0) target = $region53
    $region52: #{tpu_custom_call.1} parent=1 // pred_region
      %s2429 = ssub.s32 128, 128
      %2430 = vsyncadd [#allocation4], %s2429
      %s2432 = sshll.u32 [#allocation13], 4
      %s2433 = int_to_ptr.vmem [resolvable:$true] %s2432
      %2435 = dma.vmem_to_hbm [thread:$0]  %s2433, 128, %s6, [#allocation4]
    $region53: #{tpu_custom_call.1} parent=1 // pred_fallthru
      _
    // Predicated region
    $region54: #{tpu_custom_call.1} parent=1 // pred_check
      _
    $region55: #{tpu_custom_call.1} parent=1 // pred_check_branch
      %2437 = sbr.rel (0) target = $region57
    $region56: #{tpu_custom_call.1} parent=1 // pred_region
      %2438 = dma.done [#allocation4], 128
    $region57: #{tpu_custom_call.1} parent=1 // pred_fallthru
      _
    %2439 = vsyncpa [#allocation3], 1
    %2440 = vsyncpa [#allocation6], 1
    %2441 = vsyncpa [#allocation9], 1
    %2442 = vsyncpa [#allocation12], 1
    %2443 = vsyncpa [#allocation4], 1

</llo_original>
